<compile_context>
chip_gen: v7x
topology: tpu7x:2x2x1
jax: 0.10.0
libtpu: 0.0.40
codegen_flags: <defaults>
</compile_context>

<pallas_src>
import functools

import numpy as np
import jax
import jax.numpy as jnp
from jax.experimental import pallas as pl
from jax.experimental.pallas import tpu as pltpu

C_OUT = 64    # conv output channels
HID = 32      # LSTM hidden size
KSZ = 5       # conv kernel size
PAD = 2       # conv padding
LANES = 128   # lane width


def _round_up(a, m):
    return (a + m - 1) // m * m


# --------------------------------------------------------------------------
# Fused kernel: Conv1d(im2col) + folded BN + ReLU + MaxPool1d(2) + BiLSTM
#               (last-timestep outputs) + Linear, one batch block per step.
# --------------------------------------------------------------------------
def fused_forward_kernel(slab_e_ref, slab_o_ref, wconv_ref, ss_ref,
                         wih_f_ref, whh_f_ref, wih_b_ref, bias_ref,
                         wfc_ref, bfc_ref, o_ref, *, mxu_dtype):
    # slab_e/slab_o: (BB, P, KCP) lane-dense im2col slabs for the even / odd
    #                conv output positions (KCP = K*C padded to 128).
    # wconv_ref:     (KCP, 64)  im2col conv weight (row = k*C + c, zero-padded)
    # ss_ref:        (2, 64)    row 0 = BN scale, row 1 = BN shift (+conv bias)
    # wih_*:         (64, 128)  LSTM input->gate weights (pre-transposed)
    # whh_f_ref:     (32, 128)  LSTM hidden->gate weight (forward dir only)
    # bias_ref:      (2, 128)   row 0 = b_ih_f+b_hh_f, row 1 = b_ih_b+b_hh_b
    # wfc_ref:       (64, 1)    bfc_ref: (1, 1)
    # o_ref:         (BB, 128)  lane-dense output (column 0 is the result)
    BB, P, KCP = slab_e_ref.shape

    def mx(a):
        return a.astype(mxu_dtype)

    wconv = mx(wconv_ref[...])                               # (KCP, 64)
    scale = ss_ref[0]
    shift = ss_ref[1]

    # ---- Conv1d + folded BN + ReLU for even / odd positions (1 matmul each)
    def conv_branch(slab_ref):
        s2d = mx(slab_ref[...].reshape(BB * P, KCP))
        y = jnp.dot(s2d, wconv, preferred_element_type=jnp.float32)
        return jnp.maximum(y * scale + shift, 0.0)           # (BB*P, 64)

    # ---- MaxPool1d(2): elementwise VPU max of the two branches (no relayout)
    feat2d = jnp.maximum(conv_branch(slab_e_ref), conv_branch(slab_o_ref))
    feat3 = feat2d.reshape(BB, P, C_OUT)                     # (BB, P, 64)

    # ---- BiLSTM: input projection hoisted out of the serial recurrence.
    gates_x = (jnp.dot(mx(feat2d), mx(wih_f_ref[...]),
                       preferred_element_type=jnp.float32)
               + bias_ref[0]).reshape(BB, P, 4 * HID)        # (BB, P, 128)
    whh_f = mx(whh_f_ref[...])                               # (32, 128)

    def gate_act(gates, c_prev):
        # One sigmoid + one tanh over the full 128-lane gate vreg, then
        # lane-select.  PyTorch gate order: i, f, g, o.  All f32 (v5e-safe).
        sg = jax.nn.sigmoid(gates)
        tg = jnp.tanh(gates)
        i = sg[:, 0:HID]
        f = sg[:, HID:2 * HID]
        g = tg[:, 2 * HID:3 * HID]
        o = sg[:, 3 * HID:4 * HID]
        c = f * c_prev + i * g
        h = o * jnp.tanh(c)
        return h, c

    # fully unrolled forward recurrence (P static & small); step 0 has zero
    # hidden state, so its h @ W_hh term is skipped.
    h, c = gate_act(gates_x[:, 0, :], jnp.zeros((BB, HID), jnp.float32))
    for t in range(1, P):
        gates = gates_x[:, t, :] + jnp.dot(
            mx(h), whh_f, preferred_element_type=jnp.float32)
        h, c = gate_act(gates, c)

    # Backward direction: only its first step (time P-1, zero initial state)
    # contributes to lstm_out[:, -1, 32:]; the h0 @ W_hh_b term is zero.
    gates_b = (jnp.dot(mx(feat3[:, P - 1, :]), mx(wih_b_ref[...]),
                       preferred_element_type=jnp.float32) + bias_ref[1])
    sg_b = jax.nn.sigmoid(gates_b)
    tg_b = jnp.tanh(gates_b)
    c_b = sg_b[:, 0:HID] * tg_b[:, 2 * HID:3 * HID]          # i * g  (c0 == 0)
    h_b = sg_b[:, 3 * HID:4 * HID] * jnp.tanh(c_b)

    # ---- Linear(64 -> 1), split to avoid a concat.
    wfc = mx(wfc_ref[...])
    out = (jnp.dot(mx(h), wfc[:HID, :], preferred_element_type=jnp.float32)
           + jnp.dot(mx(h_b), wfc[HID:, :], preferred_element_type=jnp.float32)
           + bfc_ref[0])                                     # (BB, 1)
    # Lane-dense store: broadcast across 128 lanes; wrapper keeps column 0.
    o_ref[...] = jnp.broadcast_to(out, (BB, o_ref.shape[1])).astype(o_ref.dtype)


def cnn_bilstm_fused(slab_e, slab_o, wconv, ss, wih_f, whh_f, wih_b, bias,
                     wfc, bfc, *, block_b=None, mxu_dtype=jnp.float32):
    B, P, KCP = slab_e.shape
    if block_b is None:
        # Up to 128 examples per grid step: amortizes the ~0.35us per-step
        # overhead, fills the MXU M dim, and keeps the unrolled recurrence's
        # live h/c state within the vreg file.  On v7x pass block_b explicitly
        # (<= ceil(B/2)) so the "parallel" axis shards over both TensorCores.
        block_b = min(128, _round_up(B, 8))
    block_b = _round_up(block_b, 8)          # sublane multiple
    Bp = _round_up(B, block_b)
    if Bp != B:
        bpad = ((0, Bp - B), (0, 0), (0, 0))
        slab_e = jnp.pad(slab_e, bpad)
        slab_o = jnp.pad(slab_o, bpad)
    grid = (Bp // block_b,)

    def rep(a):  # whole-array weight block, replicated across the grid
        return pl.BlockSpec(a.shape, lambda b: (0,) * a.ndim)

    kernel = functools.partial(fused_forward_kernel, mxu_dtype=mxu_dtype)
    out = pl.pallas_call(
        kernel,
        out_shape=jax.ShapeDtypeStruct((Bp, LANES), jnp.float32),
        grid=grid,
        in_specs=[
            pl.BlockSpec((block_b, P, KCP), lambda b: (b, 0, 0)),
            pl.BlockSpec((block_b, P, KCP), lambda b: (b, 0, 0)),
            rep(wconv), rep(ss), rep(wih_f), rep(whh_f), rep(wih_b),
            rep(bias), rep(wfc), rep(bfc),
        ],
        out_specs=pl.BlockSpec((block_b, LANES), lambda b: (b, 0)),
        compiler_params=pltpu.CompilerParams(
            dimension_semantics=("parallel",)),
    )(slab_e, slab_o, wconv, ss, wih_f, whh_f, wih_b, bias, wfc, bfc)
    return out[:B, :1]


# --------------------------------------------------------------------------
# Parameter construction + full forward (glue / layout plumbing in plain JAX)
# --------------------------------------------------------------------------
def init_params(key, in_channels):
    ks = jax.random.split(key, 12)
    n = lambda k, s, sc=0.1: (jax.random.normal(k, s, jnp.float32) * sc)
    return {
        "conv_w": n(ks[0], (C_OUT, in_channels, KSZ)),
        "conv_b": n(ks[1], (C_OUT,)),
        "bn_gamma": 1.0 + n(ks[2], (C_OUT,)),
        "bn_beta": n(ks[3], (C_OUT,)),
        "bn_mean": n(ks[4], (C_OUT,)),
        "bn_var": 0.5 + jnp.abs(n(ks[5], (C_OUT,))),
        "w_ih_f": n(ks[6], (4 * HID, C_OUT)),
        "w_hh_f": n(ks[7], (4 * HID, HID)),
        "b_ih_f": n(ks[8], (4 * HID,)),
        "b_hh_f": n(ks[8], (4 * HID,), 0.05),
        "w_ih_b": n(ks[9], (4 * HID, C_OUT)),
        "w_hh_b": n(ks[10], (4 * HID, HID)),
        "b_ih_b": n(ks[10], (4 * HID,), 0.05),
        "b_hh_b": n(ks[10], (4 * HID,), 0.02),
        "fc_w": n(ks[11], (1, 2 * HID)),
        "fc_b": n(ks[11], (1,), 0.05),
    }


def cnn_bilstm_forward(params, x, *, block_b=None, mxu_dtype=jnp.float32):
    in_channels = params["conv_w"].shape[1]
    if x.ndim == 4:                                # x.squeeze(1)
        x = x[:, 0]
    if x.shape[1] != in_channels:                  # x.permute(0, 2, 1)
        x = jnp.transpose(x, (0, 2, 1))
    x = x.astype(jnp.float32)                      # (B, C, T)
    B, C, T = x.shape
    P = T // 2
    KC = KSZ * C
    KCP = _round_up(max(KC, LANES), LANES)

    # im2col hoisted to XLA: channel-last + zero-padded time, 5-tap slab,
    # split into even/odd conv-output positions, pad contraction dim to 128
    # lanes.  HBM traffic is only KBs; kernel input becomes lane-dense.
    x_btc = jnp.transpose(x, (0, 2, 1))                       # (B, T, C)
    x_pad = jnp.pad(x_btc, ((0, 0), (PAD, PAD), (0, 0)))      # (B, T+4, C)
    slab = jnp.concatenate([x_pad[:, k:k + T, :] for k in range(KSZ)],
                           axis=-1)                           # (B, T, K*C)
    slab_e = slab[:, 0:2 * P:2, :]                            # (B, P, K*C)
    slab_o = slab[:, 1:2 * P:2, :]
    lane_pad = ((0, 0), (0, 0), (0, KCP - KC))
    slab_e = jnp.pad(slab_e, lane_pad)
    slab_o = jnp.pad(slab_o, lane_pad)

    # fold conv bias + BatchNorm1d (eval-mode, running stats)
    eps = 1e-5
    scale = params["bn_gamma"] / jnp.sqrt(params["bn_var"] + eps)
    shift = params["bn_beta"] + (params["conv_b"] - params["bn_mean"]) * scale
    ss = jnp.stack([scale, shift], axis=0)                    # (2, 64)

    # im2col conv weight: row index k*C + c (matches slab lane order), padded
    w_im2col = jnp.transpose(params["conv_w"], (2, 1, 0)).reshape(KC, C_OUT)
    w_im2col = jnp.pad(w_im2col, ((0, KCP - KC), (0, 0)))

    bias = jnp.stack([params["b_ih_f"] + params["b_hh_f"],
                      params["b_ih_b"] + params["b_hh_b"]], axis=0)  # (2,128)

    wd = mxu_dtype   # ship MXU weights in the MXU dtype (halves DMA for bf16)
    return cnn_bilstm_fused(
        slab_e, slab_o, w_im2col.astype(wd), ss,
        params["w_ih_f"].T.astype(wd), params["w_hh_f"].T.astype(wd),
        params["w_ih_b"].T.astype(wd), bias,
        params["fc_w"].T.astype(wd), params["fc_b"].reshape(1, 1),
        block_b=block_b, mxu_dtype=mxu_dtype)


# --------------------------------------------------------------------------
# Pure-JAX reference (independent implementation) for correctness check
# --------------------------------------------------------------------------
def reference_forward(params, x):
    in_channels = params["conv_w"].shape[1]
    if x.ndim == 4:
        x = x[:, 0]
    if x.shape[1] != in_channels:
        x = jnp.transpose(x, (0, 2, 1))
    x = x.astype(jnp.float32)

    y = jax.lax.conv_general_dilated(
        x, params["conv_w"], window_strides=(1,), padding=[(PAD, PAD)],
        dimension_numbers=("NCH", "OIH", "NCH"))
    y = y + params["conv_b"][None, :, None]
    eps = 1e-5
    y = ((y - params["bn_mean"][None, :, None])
         / jnp.sqrt(params["bn_var"][None, :, None] + eps)
         * params["bn_gamma"][None, :, None] + params["bn_beta"][None, :, None])
    y = jnp.maximum(y, 0.0)
    B, Co, T = y.shape
    y = y[:, :, :2 * (T // 2)].reshape(B, Co, T // 2, 2).max(axis=-1)
    feat = jnp.transpose(y, (0, 2, 1))                       # (B, P, 64)
    P = feat.shape[1]

    def lstm_dir(xs, w_ih, w_hh, b):
        h = jnp.zeros((B, HID), jnp.float32)
        c = jnp.zeros((B, HID), jnp.float32)
        outs = []
        for x_t in xs:
            gates = x_t @ w_ih.T + h @ w_hh.T + b
            i = jax.nn.sigmoid(gates[:, :HID])
            f = jax.nn.sigmoid(gates[:, HID:2 * HID])
            g = jnp.tanh(gates[:, 2 * HID:3 * HID])
            o = jax.nn.sigmoid(gates[:, 3 * HID:])
            c = f * c + i * g
            h = o * jnp.tanh(c)
            outs.append(h)
        return outs

    b_f = params["b_ih_f"] + params["b_hh_f"]
    b_b = params["b_ih_b"] + params["b_hh_b"]
    fwd = lstm_dir([feat[:, t] for t in range(P)],
                   params["w_ih_f"], params["w_hh_f"], b_f)
    bwd = lstm_dir([feat[:, t] for t in range(P - 1, -1, -1)],
                   params["w_ih_b"], params["w_hh_b"], b_b)
    last = jnp.concatenate([fwd[-1], bwd[0]], axis=1)        # lstm_out[:, -1, :]
    return last @ params["fc_w"].T + params["fc_b"]


if __name__ == "__main__":
    B, C, T = 2, 4, 16
    key = jax.random.PRNGKey(0)
    k_x, k_p = jax.random.split(key)
    x = jax.random.normal(k_x, (B, C, T), jnp.float32)
    params = init_params(k_p, C)

    ref = jax.block_until_ready(reference_forward(params, x))

    # f32 MXU path (v5e-safe, matches the f32 reference tightly)
    out = jax.block_until_ready(cnn_bilstm_forward(params, x))
    assert out.shape == (B, 1), out.shape
    np.testing.assert_allclose(np.asarray(out), np.asarray(ref),
                               rtol=1e-3, atol=1e-4)

    # bf16 MXU-operand path (recommended on v6e/v7x); accumulation stays f32,
    # all gate / VPU / EUP math stays f32.
    out_bf16 = jax.block_until_ready(
        cnn_bilstm_forward(params, x, mxu_dtype=jnp.bfloat16))
    np.testing.assert_allclose(np.asarray(out_bf16), np.asarray(ref),
                               rtol=5e-2, atol=5e-2)

    print("KERNEL_OK")
</pallas_src>

<mosaic_0001>
module attributes {stable_mosaic.version = 11 : i64} {
  func.func @fused_forward_kernel(%arg0: i32, %arg1: memref<8x8x128xf32, #tpu.memory_space<vmem>>, %arg2: memref<8x8x128xf32, #tpu.memory_space<vmem>>, %arg3: memref<128x64xf32, #tpu.memory_space<vmem>>, %arg4: memref<2x64xf32, #tpu.memory_space<vmem>>, %arg5: memref<64x128xf32, #tpu.memory_space<vmem>>, %arg6: memref<32x128xf32, #tpu.memory_space<vmem>>, %arg7: memref<64x128xf32, #tpu.memory_space<vmem>>, %arg8: memref<2x128xf32, #tpu.memory_space<vmem>>, %arg9: memref<64x1xf32, #tpu.memory_space<vmem>>, %arg10: memref<1x1xf32, #tpu.memory_space<vmem>>, %arg11: memref<8x128xf32, #tpu.memory_space<vmem>>) attributes {dimension_semantics = [#tpu.dimension_semantics<parallel>], iteration_bounds = array<i64: 1>, scalar_prefetch = 0 : i64, scratch_operands = 0 : i64, tpu.core_type = #tpu.core_type<tc>, window_params = [{transform_indices = @transform_0, window_bounds = array<i64: 8, 8, 128>}, {transform_indices = @transform_1, window_bounds = array<i64: 8, 8, 128>}, {pipeline_mode = #tpu.pipeline_mode<synchronous>, transform_indices = @transform_2, window_bounds = array<i64: 128, 64>}, {pipeline_mode = #tpu.pipeline_mode<synchronous>, transform_indices = @transform_3, window_bounds = array<i64: 2, 64>}, {pipeline_mode = #tpu.pipeline_mode<synchronous>, transform_indices = @transform_4, window_bounds = array<i64: 64, 128>}, {pipeline_mode = #tpu.pipeline_mode<synchronous>, transform_indices = @transform_5, window_bounds = array<i64: 32, 128>}, {pipeline_mode = #tpu.pipeline_mode<synchronous>, transform_indices = @transform_6, window_bounds = array<i64: 64, 128>}, {pipeline_mode = #tpu.pipeline_mode<synchronous>, transform_indices = @transform_7, window_bounds = array<i64: 2, 128>}, {pipeline_mode = #tpu.pipeline_mode<synchronous>, transform_indices = @transform_8, window_bounds = array<i64: 64, 1>}, {pipeline_mode = #tpu.pipeline_mode<synchronous>, transform_indices = @transform_9, window_bounds = array<i64: 1, 1>}, {transform_indices = @transform_10, window_bounds = array<i64: 8, 128>}]} {
    %c0 = arith.constant 0 : index
    %c0_0 = arith.constant 0 : index
    %0 = vector.load %arg3[%c0, %c0_0] : memref<128x64xf32, #tpu.memory_space<vmem>>, vector<128x64xf32>
    %c0_1 = arith.constant 0 : index
    %c0_2 = arith.constant 0 : index
    %1 = vector.load %arg4[%c0_1, %c0_2] : memref<2x64xf32, #tpu.memory_space<vmem>>, vector<1x64xf32>
    %2 = vector.shape_cast %1 : vector<1x64xf32> to vector<64xf32>
    %c1 = arith.constant 1 : index
    %c0_3 = arith.constant 0 : index
    %3 = vector.load %arg4[%c1, %c0_3] : memref<2x64xf32, #tpu.memory_space<vmem>>, vector<1x64xf32>
    %4 = vector.shape_cast %3 : vector<1x64xf32> to vector<64xf32>
    %c0_4 = arith.constant 0 : index
    %c0_5 = arith.constant 0 : index
    %c0_6 = arith.constant 0 : index
    %5 = vector.load %arg1[%c0_4, %c0_5, %c0_6] : memref<8x8x128xf32, #tpu.memory_space<vmem>>, vector<8x8x128xf32>
    %6 = vector.shape_cast %5 : vector<8x8x128xf32> to vector<64x128xf32>
    %cst = arith.constant dense<0.000000e+00> : vector<64x64xf32>
    %7 = tpu.matmul %6, %0, %cst {dimension_numbers = #tpu.dot_dimension_numbers<[1], [0], [0], [1], [0, 0, 1, 1], [], []>} : vector<64x128xf32>, vector<128x64xf32>, vector<64x64xf32> -> vector<64x64xf32>
    %8 = vector.shape_cast %2 : vector<64xf32> to vector<1x64xf32>
    %9 = vector.broadcast %8 : vector<1x64xf32> to vector<64x64xf32>
    %10 = arith.mulf %7, %9 : vector<64x64xf32>
    %11 = vector.shape_cast %4 : vector<64xf32> to vector<1x64xf32>
    %12 = vector.broadcast %11 : vector<1x64xf32> to vector<64x64xf32>
    %13 = arith.addf %10, %12 : vector<64x64xf32>
    %cst_7 = arith.constant 0.000000e+00 : f32
    %14 = vector.broadcast %cst_7 : f32 to vector<64x64xf32>
    %15 = arith.maximumf %13, %14 : vector<64x64xf32>
    %c0_8 = arith.constant 0 : index
    %c0_9 = arith.constant 0 : index
    %c0_10 = arith.constant 0 : index
    %16 = vector.load %arg2[%c0_8, %c0_9, %c0_10] : memref<8x8x128xf32, #tpu.memory_space<vmem>>, vector<8x8x128xf32>
    %17 = vector.shape_cast %16 : vector<8x8x128xf32> to vector<64x128xf32>
    %cst_11 = arith.constant dense<0.000000e+00> : vector<64x64xf32>
    %18 = tpu.matmul %17, %0, %cst_11 {dimension_numbers = #tpu.dot_dimension_numbers<[1], [0], [0], [1], [0, 0, 1, 1], [], []>} : vector<64x128xf32>, vector<128x64xf32>, vector<64x64xf32> -> vector<64x64xf32>
    %19 = vector.shape_cast %2 : vector<64xf32> to vector<1x64xf32>
    %20 = vector.broadcast %19 : vector<1x64xf32> to vector<64x64xf32>
    %21 = arith.mulf %18, %20 : vector<64x64xf32>
    %22 = vector.shape_cast %4 : vector<64xf32> to vector<1x64xf32>
    %23 = vector.broadcast %22 : vector<1x64xf32> to vector<64x64xf32>
    %24 = arith.addf %21, %23 : vector<64x64xf32>
    %cst_12 = arith.constant 0.000000e+00 : f32
    %25 = vector.broadcast %cst_12 : f32 to vector<64x64xf32>
    %26 = arith.maximumf %24, %25 : vector<64x64xf32>
    %27 = arith.maximumf %15, %26 : vector<64x64xf32>
    %28 = vector.shape_cast %27 : vector<64x64xf32> to vector<8x8x64xf32>
    %c0_13 = arith.constant 0 : index
    %c0_14 = arith.constant 0 : index
    %29 = vector.load %arg5[%c0_13, %c0_14] : memref<64x128xf32, #tpu.memory_space<vmem>>, vector<64x128xf32>
    %cst_15 = arith.constant dense<0.000000e+00> : vector<64x128xf32>
    %30 = tpu.matmul %27, %29, %cst_15 {dimension_numbers = #tpu.dot_dimension_numbers<[1], [0], [0], [1], [0, 0, 1, 1], [], []>} : vector<64x64xf32>, vector<64x128xf32>, vector<64x128xf32> -> vector<64x128xf32>
    %c0_16 = arith.constant 0 : index
    %c0_17 = arith.constant 0 : index
    %31 = vector.load %arg8[%c0_16, %c0_17] : memref<2x128xf32, #tpu.memory_space<vmem>>, vector<1x128xf32>
    %32 = vector.shape_cast %31 : vector<1x128xf32> to vector<128xf32>
    %33 = vector.shape_cast %32 : vector<128xf32> to vector<1x128xf32>
    %34 = vector.broadcast %33 : vector<1x128xf32> to vector<64x128xf32>
    %35 = arith.addf %30, %34 : vector<64x128xf32>
    %36 = vector.shape_cast %35 : vector<64x128xf32> to vector<8x8x128xf32>
    %c0_18 = arith.constant 0 : index
    %c0_19 = arith.constant 0 : index
    %37 = vector.load %arg6[%c0_18, %c0_19] : memref<32x128xf32, #tpu.memory_space<vmem>>, vector<32x128xf32>
    %38 = vector.extract_strided_slice %36 {offsets = [0, 0, 0], sizes = [8, 1, 128], strides = [1, 1, 1]} : vector<8x8x128xf32> to vector<8x1x128xf32>
    %39 = vector.shape_cast %38 : vector<8x1x128xf32> to vector<8x128xf32>
    %cst_20 = arith.constant 0.000000e+00 : f32
    %40 = vector.broadcast %cst_20 : f32 to vector<8x32xf32>
    %41 = arith.negf %39 : vector<8x128xf32>
    %42 = math.exp %41 : vector<8x128xf32>
    %cst_21 = arith.constant 1.000000e+00 : f32
    %43 = vector.broadcast %cst_21 : f32 to vector<8x128xf32>
    %44 = arith.addf %43, %42 : vector<8x128xf32>
    %45 = arith.divf %43, %44 : vector<8x128xf32>
    %46 = math.tanh %39 : vector<8x128xf32>
    %47 = vector.extract_strided_slice %45 {offsets = [0, 0], sizes = [8, 32], strides = [1, 1]} : vector<8x128xf32> to vector<8x32xf32>
    %48 = vector.extract_strided_slice %45 {offsets = [0, 32], sizes = [8, 32], strides = [1, 1]} : vector<8x128xf32> to vector<8x32xf32>
    %49 = vector.extract_strided_slice %46 {offsets = [0, 64], sizes = [8, 32], strides = [1, 1]} : vector<8x128xf32> to vector<8x32xf32>
    %50 = vector.extract_strided_slice %45 {offsets = [0, 96], sizes = [8, 32], strides = [1, 1]} : vector<8x128xf32> to vector<8x32xf32>
    %51 = arith.mulf %48, %40 : vector<8x32xf32>
    %52 = arith.mulf %47, %49 : vector<8x32xf32>
    %53 = arith.addf %51, %52 : vector<8x32xf32>
    %54 = math.tanh %53 : vector<8x32xf32>
    %55 = arith.mulf %50, %54 : vector<8x32xf32>
    %56 = vector.extract_strided_slice %36 {offsets = [0, 1, 0], sizes = [8, 1, 128], strides = [1, 1, 1]} : vector<8x8x128xf32> to vector<8x1x128xf32>
    %57 = vector.shape_cast %56 : vector<8x1x128xf32> to vector<8x128xf32>
    %cst_22 = arith.constant dense<0.000000e+00> : vector<8x128xf32>
    %58 = tpu.matmul %55, %37, %cst_22 {dimension_numbers = #tpu.dot_dimension_numbers<[1], [0], [0], [1], [0, 0, 1, 1], [], []>} : vector<8x32xf32>, vector<32x128xf32>, vector<8x128xf32> -> vector<8x128xf32>
    %59 = arith.addf %57, %58 : vector<8x128xf32>
    %60 = arith.negf %59 : vector<8x128xf32>
    %61 = math.exp %60 : vector<8x128xf32>
    %cst_23 = arith.constant 1.000000e+00 : f32
    %62 = vector.broadcast %cst_23 : f32 to vector<8x128xf32>
    %63 = arith.addf %62, %61 : vector<8x128xf32>
    %64 = arith.divf %62, %63 : vector<8x128xf32>
    %65 = math.tanh %59 : vector<8x128xf32>
    %66 = vector.extract_strided_slice %64 {offsets = [0, 0], sizes = [8, 32], strides = [1, 1]} : vector<8x128xf32> to vector<8x32xf32>
    %67 = vector.extract_strided_slice %64 {offsets = [0, 32], sizes = [8, 32], strides = [1, 1]} : vector<8x128xf32> to vector<8x32xf32>
    %68 = vector.extract_strided_slice %65 {offsets = [0, 64], sizes = [8, 32], strides = [1, 1]} : vector<8x128xf32> to vector<8x32xf32>
    %69 = vector.extract_strided_slice %64 {offsets = [0, 96], sizes = [8, 32], strides = [1, 1]} : vector<8x128xf32> to vector<8x32xf32>
    %70 = arith.mulf %67, %53 : vector<8x32xf32>
    %71 = arith.mulf %66, %68 : vector<8x32xf32>
    %72 = arith.addf %70, %71 : vector<8x32xf32>
    %73 = math.tanh %72 : vector<8x32xf32>
    %74 = arith.mulf %69, %73 : vector<8x32xf32>
    %75 = vector.extract_strided_slice %36 {offsets = [0, 2, 0], sizes = [8, 1, 128], strides = [1, 1, 1]} : vector<8x8x128xf32> to vector<8x1x128xf32>
    %76 = vector.shape_cast %75 : vector<8x1x128xf32> to vector<8x128xf32>
    %cst_24 = arith.constant dense<0.000000e+00> : vector<8x128xf32>
    %77 = tpu.matmul %74, %37, %cst_24 {dimension_numbers = #tpu.dot_dimension_numbers<[1], [0], [0], [1], [0, 0, 1, 1], [], []>} : vector<8x32xf32>, vector<32x128xf32>, vector<8x128xf32> -> vector<8x128xf32>
    %78 = arith.addf %76, %77 : vector<8x128xf32>
    %79 = arith.negf %78 : vector<8x128xf32>
    %80 = math.exp %79 : vector<8x128xf32>
    %cst_25 = arith.constant 1.000000e+00 : f32
    %81 = vector.broadcast %cst_25 : f32 to vector<8x128xf32>
    %82 = arith.addf %81, %80 : vector<8x128xf32>
    %83 = arith.divf %81, %82 : vector<8x128xf32>
    %84 = math.tanh %78 : vector<8x128xf32>
    %85 = vector.extract_strided_slice %83 {offsets = [0, 0], sizes = [8, 32], strides = [1, 1]} : vector<8x128xf32> to vector<8x32xf32>
    %86 = vector.extract_strided_slice %83 {offsets = [0, 32], sizes = [8, 32], strides = [1, 1]} : vector<8x128xf32> to vector<8x32xf32>
    %87 = vector.extract_strided_slice %84 {offsets = [0, 64], sizes = [8, 32], strides = [1, 1]} : vector<8x128xf32> to vector<8x32xf32>
    %88 = vector.extract_strided_slice %83 {offsets = [0, 96], sizes = [8, 32], strides = [1, 1]} : vector<8x128xf32> to vector<8x32xf32>
    %89 = arith.mulf %86, %72 : vector<8x32xf32>
    %90 = arith.mulf %85, %87 : vector<8x32xf32>
    %91 = arith.addf %89, %90 : vector<8x32xf32>
    %92 = math.tanh %91 : vector<8x32xf32>
    %93 = arith.mulf %88, %92 : vector<8x32xf32>
    %94 = vector.extract_strided_slice %36 {offsets = [0, 3, 0], sizes = [8, 1, 128], strides = [1, 1, 1]} : vector<8x8x128xf32> to vector<8x1x128xf32>
    %95 = vector.shape_cast %94 : vector<8x1x128xf32> to vector<8x128xf32>
    %cst_26 = arith.constant dense<0.000000e+00> : vector<8x128xf32>
    %96 = tpu.matmul %93, %37, %cst_26 {dimension_numbers = #tpu.dot_dimension_numbers<[1], [0], [0], [1], [0, 0, 1, 1], [], []>} : vector<8x32xf32>, vector<32x128xf32>, vector<8x128xf32> -> vector<8x128xf32>
    %97 = arith.addf %95, %96 : vector<8x128xf32>
    %98 = arith.negf %97 : vector<8x128xf32>
    %99 = math.exp %98 : vector<8x128xf32>
    %cst_27 = arith.constant 1.000000e+00 : f32
    %100 = vector.broadcast %cst_27 : f32 to vector<8x128xf32>
    %101 = arith.addf %100, %99 : vector<8x128xf32>
    %102 = arith.divf %100, %101 : vector<8x128xf32>
    %103 = math.tanh %97 : vector<8x128xf32>
    %104 = vector.extract_strided_slice %102 {offsets = [0, 0], sizes = [8, 32], strides = [1, 1]} : vector<8x128xf32> to vector<8x32xf32>
    %105 = vector.extract_strided_slice %102 {offsets = [0, 32], sizes = [8, 32], strides = [1, 1]} : vector<8x128xf32> to vector<8x32xf32>
    %106 = vector.extract_strided_slice %103 {offsets = [0, 64], sizes = [8, 32], strides = [1, 1]} : vector<8x128xf32> to vector<8x32xf32>
    %107 = vector.extract_strided_slice %102 {offsets = [0, 96], sizes = [8, 32], strides = [1, 1]} : vector<8x128xf32> to vector<8x32xf32>
    %108 = arith.mulf %105, %91 : vector<8x32xf32>
    %109 = arith.mulf %104, %106 : vector<8x32xf32>
    %110 = arith.addf %108, %109 : vector<8x32xf32>
    %111 = math.tanh %110 : vector<8x32xf32>
    %112 = arith.mulf %107, %111 : vector<8x32xf32>
    %113 = vector.extract_strided_slice %36 {offsets = [0, 4, 0], sizes = [8, 1, 128], strides = [1, 1, 1]} : vector<8x8x128xf32> to vector<8x1x128xf32>
    %114 = vector.shape_cast %113 : vector<8x1x128xf32> to vector<8x128xf32>
    %cst_28 = arith.constant dense<0.000000e+00> : vector<8x128xf32>
    %115 = tpu.matmul %112, %37, %cst_28 {dimension_numbers = #tpu.dot_dimension_numbers<[1], [0], [0], [1], [0, 0, 1, 1], [], []>} : vector<8x32xf32>, vector<32x128xf32>, vector<8x128xf32> -> vector<8x128xf32>
    %116 = arith.addf %114, %115 : vector<8x128xf32>
    %117 = arith.negf %116 : vector<8x128xf32>
    %118 = math.exp %117 : vector<8x128xf32>
    %cst_29 = arith.constant 1.000000e+00 : f32
    %119 = vector.broadcast %cst_29 : f32 to vector<8x128xf32>
    %120 = arith.addf %119, %118 : vector<8x128xf32>
    %121 = arith.divf %119, %120 : vector<8x128xf32>
    %122 = math.tanh %116 : vector<8x128xf32>
    %123 = vector.extract_strided_slice %121 {offsets = [0, 0], sizes = [8, 32], strides = [1, 1]} : vector<8x128xf32> to vector<8x32xf32>
    %124 = vector.extract_strided_slice %121 {offsets = [0, 32], sizes = [8, 32], strides = [1, 1]} : vector<8x128xf32> to vector<8x32xf32>
    %125 = vector.extract_strided_slice %122 {offsets = [0, 64], sizes = [8, 32], strides = [1, 1]} : vector<8x128xf32> to vector<8x32xf32>
    %126 = vector.extract_strided_slice %121 {offsets = [0, 96], sizes = [8, 32], strides = [1, 1]} : vector<8x128xf32> to vector<8x32xf32>
    %127 = arith.mulf %124, %110 : vector<8x32xf32>
    %128 = arith.mulf %123, %125 : vector<8x32xf32>
    %129 = arith.addf %127, %128 : vector<8x32xf32>
    %130 = math.tanh %129 : vector<8x32xf32>
    %131 = arith.mulf %126, %130 : vector<8x32xf32>
    %132 = vector.extract_strided_slice %36 {offsets = [0, 5, 0], sizes = [8, 1, 128], strides = [1, 1, 1]} : vector<8x8x128xf32> to vector<8x1x128xf32>
    %133 = vector.shape_cast %132 : vector<8x1x128xf32> to vector<8x128xf32>
    %cst_30 = arith.constant dense<0.000000e+00> : vector<8x128xf32>
    %134 = tpu.matmul %131, %37, %cst_30 {dimension_numbers = #tpu.dot_dimension_numbers<[1], [0], [0], [1], [0, 0, 1, 1], [], []>} : vector<8x32xf32>, vector<32x128xf32>, vector<8x128xf32> -> vector<8x128xf32>
    %135 = arith.addf %133, %134 : vector<8x128xf32>
    %136 = arith.negf %135 : vector<8x128xf32>
    %137 = math.exp %136 : vector<8x128xf32>
    %cst_31 = arith.constant 1.000000e+00 : f32
    %138 = vector.broadcast %cst_31 : f32 to vector<8x128xf32>
    %139 = arith.addf %138, %137 : vector<8x128xf32>
    %140 = arith.divf %138, %139 : vector<8x128xf32>
    %141 = math.tanh %135 : vector<8x128xf32>
    %142 = vector.extract_strided_slice %140 {offsets = [0, 0], sizes = [8, 32], strides = [1, 1]} : vector<8x128xf32> to vector<8x32xf32>
    %143 = vector.extract_strided_slice %140 {offsets = [0, 32], sizes = [8, 32], strides = [1, 1]} : vector<8x128xf32> to vector<8x32xf32>
    %144 = vector.extract_strided_slice %141 {offsets = [0, 64], sizes = [8, 32], strides = [1, 1]} : vector<8x128xf32> to vector<8x32xf32>
    %145 = vector.extract_strided_slice %140 {offsets = [0, 96], sizes = [8, 32], strides = [1, 1]} : vector<8x128xf32> to vector<8x32xf32>
    %146 = arith.mulf %143, %129 : vector<8x32xf32>
    %147 = arith.mulf %142, %144 : vector<8x32xf32>
    %148 = arith.addf %146, %147 : vector<8x32xf32>
    %149 = math.tanh %148 : vector<8x32xf32>
    %150 = arith.mulf %145, %149 : vector<8x32xf32>
    %151 = vector.extract_strided_slice %36 {offsets = [0, 6, 0], sizes = [8, 1, 128], strides = [1, 1, 1]} : vector<8x8x128xf32> to vector<8x1x128xf32>
    %152 = vector.shape_cast %151 : vector<8x1x128xf32> to vector<8x128xf32>
    %cst_32 = arith.constant dense<0.000000e+00> : vector<8x128xf32>
    %153 = tpu.matmul %150, %37, %cst_32 {dimension_numbers = #tpu.dot_dimension_numbers<[1], [0], [0], [1], [0, 0, 1, 1], [], []>} : vector<8x32xf32>, vector<32x128xf32>, vector<8x128xf32> -> vector<8x128xf32>
    %154 = arith.addf %152, %153 : vector<8x128xf32>
    %155 = arith.negf %154 : vector<8x128xf32>
    %156 = math.exp %155 : vector<8x128xf32>
    %cst_33 = arith.constant 1.000000e+00 : f32
    %157 = vector.broadcast %cst_33 : f32 to vector<8x128xf32>
    %158 = arith.addf %157, %156 : vector<8x128xf32>
    %159 = arith.divf %157, %158 : vector<8x128xf32>
    %160 = math.tanh %154 : vector<8x128xf32>
    %161 = vector.extract_strided_slice %159 {offsets = [0, 0], sizes = [8, 32], strides = [1, 1]} : vector<8x128xf32> to vector<8x32xf32>
    %162 = vector.extract_strided_slice %159 {offsets = [0, 32], sizes = [8, 32], strides = [1, 1]} : vector<8x128xf32> to vector<8x32xf32>
    %163 = vector.extract_strided_slice %160 {offsets = [0, 64], sizes = [8, 32], strides = [1, 1]} : vector<8x128xf32> to vector<8x32xf32>
    %164 = vector.extract_strided_slice %159 {offsets = [0, 96], sizes = [8, 32], strides = [1, 1]} : vector<8x128xf32> to vector<8x32xf32>
    %165 = arith.mulf %162, %148 : vector<8x32xf32>
    %166 = arith.mulf %161, %163 : vector<8x32xf32>
    %167 = arith.addf %165, %166 : vector<8x32xf32>
    %168 = math.tanh %167 : vector<8x32xf32>
    %169 = arith.mulf %164, %168 : vector<8x32xf32>
    %170 = vector.extract_strided_slice %36 {offsets = [0, 7, 0], sizes = [8, 1, 128], strides = [1, 1, 1]} : vector<8x8x128xf32> to vector<8x1x128xf32>
    %171 = vector.shape_cast %170 : vector<8x1x128xf32> to vector<8x128xf32>
    %cst_34 = arith.constant dense<0.000000e+00> : vector<8x128xf32>
    %172 = tpu.matmul %169, %37, %cst_34 {dimension_numbers = #tpu.dot_dimension_numbers<[1], [0], [0], [1], [0, 0, 1, 1], [], []>} : vector<8x32xf32>, vector<32x128xf32>, vector<8x128xf32> -> vector<8x128xf32>
    %173 = arith.addf %171, %172 : vector<8x128xf32>
    %174 = arith.negf %173 : vector<8x128xf32>
    %175 = math.exp %174 : vector<8x128xf32>
    %cst_35 = arith.constant 1.000000e+00 : f32
    %176 = vector.broadcast %cst_35 : f32 to vector<8x128xf32>
    %177 = arith.addf %176, %175 : vector<8x128xf32>
    %178 = arith.divf %176, %177 : vector<8x128xf32>
    %179 = math.tanh %173 : vector<8x128xf32>
    %180 = vector.extract_strided_slice %178 {offsets = [0, 0], sizes = [8, 32], strides = [1, 1]} : vector<8x128xf32> to vector<8x32xf32>
    %181 = vector.extract_strided_slice %178 {offsets = [0, 32], sizes = [8, 32], strides = [1, 1]} : vector<8x128xf32> to vector<8x32xf32>
    %182 = vector.extract_strided_slice %179 {offsets = [0, 64], sizes = [8, 32], strides = [1, 1]} : vector<8x128xf32> to vector<8x32xf32>
    %183 = vector.extract_strided_slice %178 {offsets = [0, 96], sizes = [8, 32], strides = [1, 1]} : vector<8x128xf32> to vector<8x32xf32>
    %184 = arith.mulf %181, %167 : vector<8x32xf32>
    %185 = arith.mulf %180, %182 : vector<8x32xf32>
    %186 = arith.addf %184, %185 : vector<8x32xf32>
    %187 = math.tanh %186 : vector<8x32xf32>
    %188 = arith.mulf %183, %187 : vector<8x32xf32>
    %189 = vector.extract_strided_slice %28 {offsets = [0, 7, 0], sizes = [8, 1, 64], strides = [1, 1, 1]} : vector<8x8x64xf32> to vector<8x1x64xf32>
    %190 = vector.shape_cast %189 : vector<8x1x64xf32> to vector<8x64xf32>
    %c0_36 = arith.constant 0 : index
    %c0_37 = arith.constant 0 : index
    %191 = vector.load %arg7[%c0_36, %c0_37] : memref<64x128xf32, #tpu.memory_space<vmem>>, vector<64x128xf32>
    %cst_38 = arith.constant dense<0.000000e+00> : vector<8x128xf32>
    %192 = tpu.matmul %190, %191, %cst_38 {dimension_numbers = #tpu.dot_dimension_numbers<[1], [0], [0], [1], [0, 0, 1, 1], [], []>} : vector<8x64xf32>, vector<64x128xf32>, vector<8x128xf32> -> vector<8x128xf32>
    %c1_39 = arith.constant 1 : index
    %c0_40 = arith.constant 0 : index
    %193 = vector.load %arg8[%c1_39, %c0_40] : memref<2x128xf32, #tpu.memory_space<vmem>>, vector<1x128xf32>
    %194 = vector.shape_cast %193 : vector<1x128xf32> to vector<128xf32>
    %195 = vector.shape_cast %194 : vector<128xf32> to vector<1x128xf32>
    %196 = vector.broadcast %195 : vector<1x128xf32> to vector<8x128xf32>
    %197 = arith.addf %192, %196 : vector<8x128xf32>
    %198 = arith.negf %197 : vector<8x128xf32>
    %199 = math.exp %198 : vector<8x128xf32>
    %cst_41 = arith.constant 1.000000e+00 : f32
    %200 = vector.broadcast %cst_41 : f32 to vector<8x128xf32>
    %201 = arith.addf %200, %199 : vector<8x128xf32>
    %202 = arith.divf %200, %201 : vector<8x128xf32>
    %203 = math.tanh %197 : vector<8x128xf32>
    %204 = vector.extract_strided_slice %202 {offsets = [0, 0], sizes = [8, 32], strides = [1, 1]} : vector<8x128xf32> to vector<8x32xf32>
    %205 = vector.extract_strided_slice %203 {offsets = [0, 64], sizes = [8, 32], strides = [1, 1]} : vector<8x128xf32> to vector<8x32xf32>
    %206 = arith.mulf %204, %205 : vector<8x32xf32>
    %207 = vector.extract_strided_slice %202 {offsets = [0, 96], sizes = [8, 32], strides = [1, 1]} : vector<8x128xf32> to vector<8x32xf32>
    %208 = math.tanh %206 : vector<8x32xf32>
    %209 = arith.mulf %207, %208 : vector<8x32xf32>
    %c0_42 = arith.constant 0 : index
    %c0_43 = arith.constant 0 : index
    %210 = vector.load %arg9[%c0_42, %c0_43] : memref<64x1xf32, #tpu.memory_space<vmem>>, vector<64x1xf32>
    %211 = vector.extract_strided_slice %210 {offsets = [0, 0], sizes = [32, 1], strides = [1, 1]} : vector<64x1xf32> to vector<32x1xf32>
    %cst_44 = arith.constant dense<0.000000e+00> : vector<8x1xf32>
    %212 = tpu.matmul %188, %211, %cst_44 {dimension_numbers = #tpu.dot_dimension_numbers<[1], [0], [0], [1], [0, 0, 1, 1], [], []>} : vector<8x32xf32>, vector<32x1xf32>, vector<8x1xf32> -> vector<8x1xf32>
    %213 = vector.extract_strided_slice %210 {offsets = [32, 0], sizes = [32, 1], strides = [1, 1]} : vector<64x1xf32> to vector<32x1xf32>
    %cst_45 = arith.constant dense<0.000000e+00> : vector<8x1xf32>
    %214 = tpu.matmul %209, %213, %cst_45 {dimension_numbers = #tpu.dot_dimension_numbers<[1], [0], [0], [1], [0, 0, 1, 1], [], []>} : vector<8x32xf32>, vector<32x1xf32>, vector<8x1xf32> -> vector<8x1xf32>
    %215 = arith.addf %212, %214 : vector<8x1xf32>
    %c0_46 = arith.constant 0 : index
    %c0_47 = arith.constant 0 : index
    %216 = vector.load %arg10[%c0_46, %c0_47] : memref<1x1xf32, #tpu.memory_space<vmem>>, vector<1x1xf32>
    %217 = vector.shape_cast %216 : vector<1x1xf32> to vector<1xf32>
    %218 = vector.shape_cast %217 : vector<1xf32> to vector<1x1xf32>
    %219 = vector.broadcast %218 : vector<1x1xf32> to vector<8x1xf32>
    %220 = arith.addf %215, %219 : vector<8x1xf32>
    %221 = vector.shape_cast %220 : vector<8x1xf32> to vector<8x1xf32>
    %222 = vector.broadcast %221 : vector<8x1xf32> to vector<8x128xf32>
    %c0_48 = arith.constant 0 : index
    %c0_49 = arith.constant 0 : index
    %223 = vector.load %arg11[%c0_48, %c0_49] : memref<8x128xf32, #tpu.memory_space<vmem>>, vector<8x128xf32>
    tpu.vector_store %arg11[%c0_48, %c0_49], %222 {strides = array<i32>} : memref<8x128xf32, #tpu.memory_space<vmem>>, vector<8x128xf32>,
    return
  }
  func.func @transform_0(%arg0: i32) -> (i32, i32, i32) {
    %c0_i32 = arith.constant 0 : i32
    %c0_i32_0 = arith.constant 0 : i32
    %c0_i32_1 = arith.constant 0 : i32
    return %arg0, %c0_i32, %c0_i32_0 : i32, i32, i32
  }
  func.func @transform_1(%arg0: i32) -> (i32, i32, i32) {
    %c0_i32 = arith.constant 0 : i32
    %c0_i32_0 = arith.constant 0 : i32
    %c0_i32_1 = arith.constant 0 : i32
    return %arg0, %c0_i32, %c0_i32_0 : i32, i32, i32
  }
  func.func @transform_2(%arg0: i32) -> (i32, i32) {
    %c0_i32 = arith.constant 0 : i32
    %c0_i32_0 = arith.constant 0 : i32
    %c0_i32_1 = arith.constant 0 : i32
    return %c0_i32, %c0_i32_0 : i32, i32
  }
  func.func @transform_3(%arg0: i32) -> (i32, i32) {
    %c0_i32 = arith.constant 0 : i32
    %c0_i32_0 = arith.constant 0 : i32
    %c0_i32_1 = arith.constant 0 : i32
    return %c0_i32, %c0_i32_0 : i32, i32
  }
  func.func @transform_4(%arg0: i32) -> (i32, i32) {
    %c0_i32 = arith.constant 0 : i32
    %c0_i32_0 = arith.constant 0 : i32
    %c0_i32_1 = arith.constant 0 : i32
    return %c0_i32, %c0_i32_0 : i32, i32
  }
  func.func @transform_5(%arg0: i32) -> (i32, i32) {
    %c0_i32 = arith.constant 0 : i32
    %c0_i32_0 = arith.constant 0 : i32
    %c0_i32_1 = arith.constant 0 : i32
    return %c0_i32, %c0_i32_0 : i32, i32
  }
  func.func @transform_6(%arg0: i32) -> (i32, i32) {
    %c0_i32 = arith.constant 0 : i32
    %c0_i32_0 = arith.constant 0 : i32
    %c0_i32_1 = arith.constant 0 : i32
    return %c0_i32, %c0_i32_0 : i32, i32
  }
  func.func @transform_7(%arg0: i32) -> (i32, i32) {
    %c0_i32 = arith.constant 0 : i32
    %c0_i32_0 = arith.constant 0 : i32
    %c0_i32_1 = arith.constant 0 : i32
    return %c0_i32, %c0_i32_0 : i32, i32
  }
  func.func @transform_8(%arg0: i32) -> (i32, i32) {
    %c0_i32 = arith.constant 0 : i32
    %c0_i32_0 = arith.constant 0 : i32
    %c0_i32_1 = arith.constant 0 : i32
    return %c0_i32, %c0_i32_0 : i32, i32
  }
  func.func @transform_9(%arg0: i32) -> (i32, i32) {
    %c0_i32 = arith.constant 0 : i32
    %c0_i32_0 = arith.constant 0 : i32
    %c0_i32_1 = arith.constant 0 : i32
    return %c0_i32, %c0_i32_0 : i32, i32
  }
  func.func @transform_10(%arg0: i32) -> (i32, i32) {
    %c0_i32 = arith.constant 0 : i32
    %c0_i32_0 = arith.constant 0 : i32
    return %arg0, %c0_i32 : i32, i32
  }
}

</mosaic_0001>

<llo_original>
// kernel: tpu_custom_call.1
$region0: #{tpu_custom_call.1}
  #allocation0 [shape = 'u32[]', space=smem, size = 0x4, offset = 0x4, fixed_abs, tag = 'smem constant byte address 0x4 - core index']
  #allocation1 [shape = 'u32[144,128]{1,0:T(1,128)}', space=vmem, size = 0x12000, scoped, tag = 'internal scratch']
  #allocation2 [shape = 'f32[1,1]{1,0:T(1,128)S(1)}', space=vmem, size = 0x200, scoped, tag = 'scoped memory for tpu_custom_call.1']
  %s0 = inlined_call_operand.vmem [shape: f32[8,8,128], index: 0, kind: input, shape index: {}]
  %s1 = inlined_call_operand.vmem [shape: f32[8,8,128], index: 1, kind: input, shape index: {}]
  %s2 = inlined_call_operand.vmem [shape: f32[128,64], index: 2, kind: input, shape index: {}]
  %s3 = inlined_call_operand.vmem [shape: f32[2,64], index: 3, kind: input, shape index: {}]
  %s4 = inlined_call_operand.vmem [shape: f32[64,128], index: 4, kind: input, shape index: {}]
  %s5 = inlined_call_operand.hbm [shape: f32[32,128], index: 5, kind: input, shape index: {}]
  %s6 = inlined_call_operand.hbm [shape: f32[64,128], index: 6, kind: input, shape index: {}]
  %s7 = inlined_call_operand.vmem [shape: f32[2,128], index: 7, kind: input, shape index: {}]
  %s8 = inlined_call_operand.vmem [shape: f32[64,1], index: 8, kind: input, shape index: {}]
  %s9 = inlined_call_operand.<no memory space> [shape: f32[1,1], index: 9, kind: input, shape index: {}]
  %s10 = inlined_call_operand.hbm [shape: f32[8,128], index: 10, kind: output, shape index: {}]
  %s11 = sld [smem:[#allocation0]]
  $region58: #{tpu_custom_call.1} parent=0
    _
  %s13 = ssub.s32 1, %s11
  %s14 = scalar_select 0, %s13, %s11
  %v15 = vstv %s9
  %16 = vst [vmem:[#allocation2] sm:$0x1] %v15
  $region1: #{tpu_custom_call.1} parent=0
    #allocation3 [shape = 'u8[16384]{0}', space=vmem, size = 0x4000, scoped, tag = 'input window, operand 5, single buffered']
    #allocation4 [shape = 's32[1]{0}', space=sflag, size = 0x4, scoped, tag = 'scoped memory for tpu_custom_call.1']
    #allocation5 [shape = 's32[1]{0}', space=sflag, size = 0x4, scoped, tag = 'scoped memory for tpu_custom_call.1']
    #allocation6 [shape = 'u8[32768]{0}', space=vmem, size = 0x8000, scoped, tag = 'input window, operand 6, single buffered']
    #allocation7 [shape = 's32[1]{0}', space=sflag, size = 0x4, scoped, tag = 'scoped memory for tpu_custom_call.1']
    #allocation8 [shape = 'u8[4096]{0}', space=vmem, size = 0x1000, scoped, tag = 'output window, operand 0, single buffered']
    %17 = vsyncpa [#allocation4], 0
    %18 = vsyncpa [#allocation7], 0
    %19 = vsyncpa [#allocation5], 0
    // Predicated region
    $region2: #{tpu_custom_call.1} parent=1 // pred_check
      _
    $region3: #{tpu_custom_call.1} parent=1 // pred_check_branch
      %21 = sbr.rel (0) target = $region5
    $region4: #{tpu_custom_call.1} parent=1 // pred_region
      _
    $region5: #{tpu_custom_call.1} parent=1 // pred_fallthru
      _
    // Predicated region
    $region6: #{tpu_custom_call.1} parent=1 // pred_check
      _
    $region7: #{tpu_custom_call.1} parent=1 // pred_check_branch
      %23 = sbr.rel (0) target = $region9
    $region8: #{tpu_custom_call.1} parent=1 // pred_region
      _
    $region9: #{tpu_custom_call.1} parent=1 // pred_fallthru
      _
    // Predicated region
    $region10: #{tpu_custom_call.1} parent=1 // pred_check
      _
    $region11: #{tpu_custom_call.1} parent=1 // pred_check_branch
      %25 = sbr.rel (0) target = $region13
    $region12: #{tpu_custom_call.1} parent=1 // pred_region
      _
    $region13: #{tpu_custom_call.1} parent=1 // pred_fallthru
      _
    // Predicated region
    $region14: #{tpu_custom_call.1} parent=1 // pred_check
      _
    $region15: #{tpu_custom_call.1} parent=1 // pred_check_branch
      %27 = sbr.rel (0) target = $region17
    $region16: #{tpu_custom_call.1} parent=1 // pred_region
      _
    $region17: #{tpu_custom_call.1} parent=1 // pred_fallthru
      _
    // Predicated region
    $region18: #{tpu_custom_call.1} parent=1 // pred_check
      _
    $region19: #{tpu_custom_call.1} parent=1 // pred_check_branch
      %29 = sbr.rel (0) target = $region21
    $region20: #{tpu_custom_call.1} parent=1 // pred_region
      _
    $region21: #{tpu_custom_call.1} parent=1 // pred_fallthru
      _
    // Predicated region
    $region22: #{tpu_custom_call.1} parent=1 // pred_check
      _
    $region23: #{tpu_custom_call.1} parent=1 // pred_check_branch
      %31 = sbr.rel (0) target = $region25
    $region24: #{tpu_custom_call.1} parent=1 // pred_region
      %s33 = ssub.s32 512, 512
      %34 = vsyncadd [#allocation4], %s33
      %s35 = sshll.u32 [#allocation3], 4
      %s36 = int_to_ptr.vmem [resolvable:$true] %s35
      %41 = dma.hbm_to_vmem [thread:$0]  %s5, 512, %s36, [#allocation4], 128, 128, 8
    $region25: #{tpu_custom_call.1} parent=1 // pred_fallthru
      _
    // Predicated region
    $region26: #{tpu_custom_call.1} parent=1 // pred_check
      _
    $region27: #{tpu_custom_call.1} parent=1 // pred_check_branch
      %43 = sbr.rel (0) target = $region29
    $region28: #{tpu_custom_call.1} parent=1 // pred_region
      %s45 = ssub.s32 1024, 1024
      %46 = vsyncadd [#allocation7], %s45
      %s47 = sshll.u32 [#allocation6], 4
      %s48 = int_to_ptr.vmem [resolvable:$true] %s47
      %53 = dma.hbm_to_vmem [thread:$0]  %s6, 1024, %s48, [#allocation7], 128, 128, 8
    $region29: #{tpu_custom_call.1} parent=1 // pred_fallthru
      _
    // Predicated region
    $region30: #{tpu_custom_call.1} parent=1 // pred_check
      _
    $region31: #{tpu_custom_call.1} parent=1 // pred_check_branch
      %55 = sbr.rel (0) target = $region33
    $region32: #{tpu_custom_call.1} parent=1 // pred_region
      _
    $region33: #{tpu_custom_call.1} parent=1 // pred_fallthru
      _
    // Predicated region
    $region34: #{tpu_custom_call.1} parent=1 // pred_check
      _
    $region35: #{tpu_custom_call.1} parent=1 // pred_check_branch
      %57 = sbr.rel (0) target = $region37
    $region36: #{tpu_custom_call.1} parent=1 // pred_region
      _
    $region37: #{tpu_custom_call.1} parent=1 // pred_fallthru
      _
    // Predicated region
    $region38: #{tpu_custom_call.1} parent=1 // pred_check
      _
    $region39: #{tpu_custom_call.1} parent=1 // pred_check_branch
      %59 = sbr.rel (0) target = $region41
    $region40: #{tpu_custom_call.1} parent=1 // pred_region
      _
    $region41: #{tpu_custom_call.1} parent=1 // pred_fallthru
      _
    // Predicated region
    $region42: #{tpu_custom_call.1} parent=1 // pred_check
      _
    $region43: #{tpu_custom_call.1} parent=1 // pred_check_branch
      %61 = sbr.rel (0) target = $region45
    $region44: #{tpu_custom_call.1} parent=1 // pred_region
      %62 = dma.done [#allocation4], 512
    $region45: #{tpu_custom_call.1} parent=1 // pred_fallthru
      _
    // Predicated region
    $region46: #{tpu_custom_call.1} parent=1 // pred_check
      _
    $region47: #{tpu_custom_call.1} parent=1 // pred_check_branch
      %64 = sbr.rel (0) target = $region49
    $region48: #{tpu_custom_call.1} parent=1 // pred_region
      %65 = dma.done [#allocation7], 1024
    $region49: #{tpu_custom_call.1} parent=1 // pred_fallthru
      _
    %v66 = vld [vmem:[%s2] sm:$0xff]
    %v67 = vld [vmem:[%s2 + $0x8] sm:$0xff]
    %v68 = vld [vmem:[%s2 + $0x10] sm:$0xff]
    %v69 = vld [vmem:[%s2 + $0x18] sm:$0xff]
    %v70 = vld [vmem:[%s2 + $0x20] sm:$0xff]
    %v71 = vld [vmem:[%s2 + $0x28] sm:$0xff]
    %v72 = vld [vmem:[%s2 + $0x30] sm:$0xff]
    %v73 = vld [vmem:[%s2 + $0x38] sm:$0xff]
    %v74 = vld [vmem:[%s2 + $0x40] sm:$0xff]
    %v75 = vld [vmem:[%s2 + $0x48] sm:$0xff]
    %v76 = vld [vmem:[%s2 + $0x50] sm:$0xff]
    %v77 = vld [vmem:[%s2 + $0x58] sm:$0xff]
    %v78 = vld [vmem:[%s2 + $0x60] sm:$0xff]
    %v79 = vld [vmem:[%s2 + $0x68] sm:$0xff]
    %v80 = vld [vmem:[%s2 + $0x70] sm:$0xff]
    %v81 = vld [vmem:[%s2 + $0x78] sm:$0xff]
    %v82 = vld [vmem:[%s3] sm:$0x1]
    %v83 = vld [vmem:[%s3 + $0x1] sm:$0x1]
    %v84 = vld [vmem:[%s0] sm:$0xff]
    %v85 = vld [vmem:[%s0 + $0x8] sm:$0xff]
    %v86 = vld [vmem:[%s0 + $0x10] sm:$0xff]
    %v87 = vld [vmem:[%s0 + $0x18] sm:$0xff]
    %v88 = vld [vmem:[%s0 + $0x20] sm:$0xff]
    %v89 = vld [vmem:[%s0 + $0x28] sm:$0xff]
    %v90 = vld [vmem:[%s0 + $0x30] sm:$0xff]
    %v91 = vld [vmem:[%s0 + $0x38] sm:$0xff]
    %92 = vmatprep.subr.mxu0 0.0
    %93 = vmatpush1.msra.mxu0 %v66
    %94 = vmatprep.subr.mxu0 0.0
    %95 = vmatpush1.msra.mxu0 %v67
    %96 = vmatprep.subr.mxu0 0.0
    %97 = vmatpush1.msra.mxu0 %v68
    %98 = vmatprep.subr.mxu0 0.0
    %99 = vmatpush1.msra.mxu0 %v69
    %100 = vmatprep.subr.mxu0 0.0
    %101 = vmatpush1.msra.mxu0 %v70
    %102 = vmatprep.subr.mxu0 0.0
    %103 = vmatpush1.msra.mxu0 %v71
    %104 = vmatprep.subr.mxu0 0.0
    %105 = vmatpush1.msra.mxu0 %v72
    %106 = vmatprep.subr.mxu0 0.0
    %107 = vmatpush1.msra.mxu0 %v73
    %108 = vmatprep.subr.mxu0 0.0
    %109 = vmatpush1.msra.mxu0 %v74
    %110 = vmatprep.subr.mxu0 0.0
    %111 = vmatpush1.msra.mxu0 %v75
    %112 = vmatprep.subr.mxu0 0.0
    %113 = vmatpush1.msra.mxu0 %v76
    %114 = vmatprep.subr.mxu0 0.0
    %115 = vmatpush1.msra.mxu0 %v77
    %116 = vmatprep.subr.mxu0 0.0
    %117 = vmatpush1.msra.mxu0 %v78
    %118 = vmatprep.subr.mxu0 0.0
    %119 = vmatpush1.msra.mxu0 %v79
    %120 = vmatprep.subr.mxu0 0.0
    %121 = vmatpush1.msra.mxu0 %v80
    %122 = vmatprep.subr.mxu0 0.0
    %123 = vmatpush1.msra.mxu0 %v81
    %124 = vmatprep.subr.mxu0 0.0
    %125 = vmatpush1.msra.mxu0 0.0
    %126 = vmatprep.subr.mxu0 0.0
    %127 = vmatpush1.msra.mxu0 0.0
    %128 = vmatprep.subr.mxu0 0.0
    %129 = vmatpush1.msra.mxu0 0.0
    %130 = vmatprep.subr.mxu0 0.0
    %131 = vmatpush1.msra.mxu0 0.0
    %132 = vmatprep.subr.mxu0 0.0
    %133 = vmatpush1.msra.mxu0 0.0
    %134 = vmatprep.subr.mxu0 0.0
    %135 = vmatpush1.msra.mxu0 0.0
    %136 = vmatprep.subr.mxu0 0.0
    %137 = vmatpush1.msra.mxu0 0.0
    %138 = vmatprep.subr.mxu0 0.0
    %139 = vmatpush1.msra.mxu0 0.0
    %140 = vmatprep.subr.mxu0 0.0
    %141 = vmatpush1.msra.mxu0 0.0
    %142 = vmatprep.subr.mxu0 0.0
    %143 = vmatpush1.msra.mxu0 0.0
    %144 = vmatprep.subr.mxu0 0.0
    %145 = vmatpush1.msra.mxu0 0.0
    %146 = vmatprep.subr.mxu0 0.0
    %147 = vmatpush1.msra.mxu0 0.0
    %148 = vmatprep.subr.mxu0 0.0
    %149 = vmatpush1.msra.mxu0 0.0
    %150 = vmatprep.subr.mxu0 0.0
    %151 = vmatpush1.msra.mxu0 0.0
    %152 = vmatprep.subr.mxu0 0.0
    %153 = vmatpush1.msra.mxu0 0.0
    %154 = vmatprep.subr.mxu0 0.0
    %155 = vmatpush1.msra.mxu0 0.0
    %156 = vmatprep.mubr.f32.mxu0 0.0
    %157 = vmatmul.mubr.f32.gmra.mrb[0].mxu0 %v84
    %v158 = vpop.f32.mrb[0].mxu0
    %v159 = vadd.f32 0.0, %v158
    %v160 = vpop.f32.mrb[0].mxu0
    %161 = vmatprep.mubr.f32.mxu0 0.0
    %162 = vmatmul.mubr.f32.gmra.mrb[0].mxu0 %v85
    %v163 = vpop.f32.mrb[0].mxu0
    %v164 = vadd.f32 0.0, %v163
    %v165 = vpop.f32.mrb[0].mxu0
    %166 = vmatprep.mubr.f32.mxu0 0.0
    %167 = vmatmul.mubr.f32.gmra.mrb[0].mxu0 %v86
    %v168 = vpop.f32.mrb[0].mxu0
    %v169 = vadd.f32 0.0, %v168
    %v170 = vpop.f32.mrb[0].mxu0
    %171 = vmatprep.mubr.f32.mxu0 0.0
    %172 = vmatmul.mubr.f32.gmra.mrb[0].mxu0 %v87
    %v173 = vpop.f32.mrb[0].mxu0
    %v174 = vadd.f32 0.0, %v173
    %v175 = vpop.f32.mrb[0].mxu0
    %176 = vmatprep.mubr.f32.mxu0 0.0
    %177 = vmatmul.mubr.f32.gmra.mrb[0].mxu0 %v88
    %v178 = vpop.f32.mrb[0].mxu0
    %v179 = vadd.f32 0.0, %v178
    %v180 = vpop.f32.mrb[0].mxu0
    %181 = vmatprep.mubr.f32.mxu0 0.0
    %182 = vmatmul.mubr.f32.gmra.mrb[0].mxu0 %v89
    %v183 = vpop.f32.mrb[0].mxu0
    %v184 = vadd.f32 0.0, %v183
    %v185 = vpop.f32.mrb[0].mxu0
    %186 = vmatprep.mubr.f32.mxu0 0.0
    %187 = vmatmul.mubr.f32.gmra.mrb[0].mxu0 %v90
    %v188 = vpop.f32.mrb[0].mxu0
    %v189 = vadd.f32 0.0, %v188
    %v190 = vpop.f32.mrb[0].mxu0
    %191 = vmatprep.mubr.f32.mxu0 0.0
    %192 = vmatmul.mubr.f32.gmra.mrb[0].mxu0 %v91
    %v193 = vpop.f32.mrb[0].mxu0
    %v194 = vadd.f32 0.0, %v193
    %v195 = vpop.f32.mrb[0].mxu0
    %196 = vdwg.mxu0
    %v197 = vlaneseq
    %v198 = vshrl.u32 %v197, 7
    %v199 = vsub.s32 0, %v198
    %v200 = vrot.slane %v82, %v199
    %v201 = vmul.f32 %v159, %v200
    %v202 = vmul.f32 %v164, %v200
    %v203 = vmul.f32 %v169, %v200
    %v204 = vmul.f32 %v174, %v200
    %v205 = vmul.f32 %v179, %v200
    %v206 = vmul.f32 %v184, %v200
    %v207 = vmul.f32 %v189, %v200
    %v208 = vmul.f32 %v194, %v200
    %v209 = vlaneseq
    %v210 = vshrl.u32 %v209, 7
    %v211 = vsub.s32 0, %v210
    %v212 = vrot.slane %v83, %v211
    %v213 = vadd.f32 %v201, %v212
    %v214 = vadd.f32 %v202, %v212
    %v215 = vadd.f32 %v203, %v212
    %v216 = vadd.f32 %v204, %v212
    %v217 = vadd.f32 %v205, %v212
    %v218 = vadd.f32 %v206, %v212
    %v219 = vadd.f32 %v207, %v212
    %v220 = vadd.f32 %v208, %v212
    %v221 = vmax.f32 %v213, 0.0
    %v222 = vmax.f32 %v214, 0.0
    %v223 = vmax.f32 %v215, 0.0
    %v224 = vmax.f32 %v216, 0.0
    %v225 = vmax.f32 %v217, 0.0
    %v226 = vmax.f32 %v218, 0.0
    %v227 = vmax.f32 %v219, 0.0
    %v228 = vmax.f32 %v220, 0.0
    %v229 = vld [vmem:[%s1] sm:$0xff]
    %v230 = vld [vmem:[%s1 + $0x8] sm:$0xff]
    %v231 = vld [vmem:[%s1 + $0x10] sm:$0xff]
    %v232 = vld [vmem:[%s1 + $0x18] sm:$0xff]
    %v233 = vld [vmem:[%s1 + $0x20] sm:$0xff]
    %v234 = vld [vmem:[%s1 + $0x28] sm:$0xff]
    %v235 = vld [vmem:[%s1 + $0x30] sm:$0xff]
    %v236 = vld [vmem:[%s1 + $0x38] sm:$0xff]
    %237 = vmatprep.subr.mxu0 0.0
    %238 = vmatpush1.msra.mxu0 %v66
    %239 = vmatprep.subr.mxu0 0.0
    %240 = vmatpush1.msra.mxu0 %v67
    %241 = vmatprep.subr.mxu0 0.0
    %242 = vmatpush1.msra.mxu0 %v68
    %243 = vmatprep.subr.mxu0 0.0
    %244 = vmatpush1.msra.mxu0 %v69
    %245 = vmatprep.subr.mxu0 0.0
    %246 = vmatpush1.msra.mxu0 %v70
    %247 = vmatprep.subr.mxu0 0.0
    %248 = vmatpush1.msra.mxu0 %v71
    %249 = vmatprep.subr.mxu0 0.0
    %250 = vmatpush1.msra.mxu0 %v72
    %251 = vmatprep.subr.mxu0 0.0
    %252 = vmatpush1.msra.mxu0 %v73
    %253 = vmatprep.subr.mxu0 0.0
    %254 = vmatpush1.msra.mxu0 %v74
    %255 = vmatprep.subr.mxu0 0.0
    %256 = vmatpush1.msra.mxu0 %v75
    %257 = vmatprep.subr.mxu0 0.0
    %258 = vmatpush1.msra.mxu0 %v76
    %259 = vmatprep.subr.mxu0 0.0
    %260 = vmatpush1.msra.mxu0 %v77
    %261 = vmatprep.subr.mxu0 0.0
    %262 = vmatpush1.msra.mxu0 %v78
    %263 = vmatprep.subr.mxu0 0.0
    %264 = vmatpush1.msra.mxu0 %v79
    %265 = vmatprep.subr.mxu0 0.0
    %266 = vmatpush1.msra.mxu0 %v80
    %267 = vmatprep.subr.mxu0 0.0
    %268 = vmatpush1.msra.mxu0 %v81
    %269 = vmatprep.subr.mxu0 0.0
    %270 = vmatpush1.msra.mxu0 0.0
    %271 = vmatprep.subr.mxu0 0.0
    %272 = vmatpush1.msra.mxu0 0.0
    %273 = vmatprep.subr.mxu0 0.0
    %274 = vmatpush1.msra.mxu0 0.0
    %275 = vmatprep.subr.mxu0 0.0
    %276 = vmatpush1.msra.mxu0 0.0
    %277 = vmatprep.subr.mxu0 0.0
    %278 = vmatpush1.msra.mxu0 0.0
    %279 = vmatprep.subr.mxu0 0.0
    %280 = vmatpush1.msra.mxu0 0.0
    %281 = vmatprep.subr.mxu0 0.0
    %282 = vmatpush1.msra.mxu0 0.0
    %283 = vmatprep.subr.mxu0 0.0
    %284 = vmatpush1.msra.mxu0 0.0
    %285 = vmatprep.subr.mxu0 0.0
    %286 = vmatpush1.msra.mxu0 0.0
    %287 = vmatprep.subr.mxu0 0.0
    %288 = vmatpush1.msra.mxu0 0.0
    %289 = vmatprep.subr.mxu0 0.0
    %290 = vmatpush1.msra.mxu0 0.0
    %291 = vmatprep.subr.mxu0 0.0
    %292 = vmatpush1.msra.mxu0 0.0
    %293 = vmatprep.subr.mxu0 0.0
    %294 = vmatpush1.msra.mxu0 0.0
    %295 = vmatprep.subr.mxu0 0.0
    %296 = vmatpush1.msra.mxu0 0.0
    %297 = vmatprep.subr.mxu0 0.0
    %298 = vmatpush1.msra.mxu0 0.0
    %299 = vmatprep.subr.mxu0 0.0
    %300 = vmatpush1.msra.mxu0 0.0
    %301 = vmatprep.mubr.f32.mxu0 0.0
    %302 = vmatmul.mubr.f32.gmra.mrb[0].mxu0 %v229
    %v303 = vpop.f32.mrb[0].mxu0
    %v304 = vadd.f32 0.0, %v303
    %v305 = vpop.f32.mrb[0].mxu0
    %306 = vmatprep.mubr.f32.mxu0 0.0
    %307 = vmatmul.mubr.f32.gmra.mrb[0].mxu0 %v230
    %v308 = vpop.f32.mrb[0].mxu0
    %v309 = vadd.f32 0.0, %v308
    %v310 = vpop.f32.mrb[0].mxu0
    %311 = vmatprep.mubr.f32.mxu0 0.0
    %312 = vmatmul.mubr.f32.gmra.mrb[0].mxu0 %v231
    %v313 = vpop.f32.mrb[0].mxu0
    %v314 = vadd.f32 0.0, %v313
    %v315 = vpop.f32.mrb[0].mxu0
    %316 = vmatprep.mubr.f32.mxu0 0.0
    %317 = vmatmul.mubr.f32.gmra.mrb[0].mxu0 %v232
    %v318 = vpop.f32.mrb[0].mxu0
    %v319 = vadd.f32 0.0, %v318
    %v320 = vpop.f32.mrb[0].mxu0
    %321 = vmatprep.mubr.f32.mxu0 0.0
    %322 = vmatmul.mubr.f32.gmra.mrb[0].mxu0 %v233
    %v323 = vpop.f32.mrb[0].mxu0
    %v324 = vadd.f32 0.0, %v323
    %v325 = vpop.f32.mrb[0].mxu0
    %326 = vmatprep.mubr.f32.mxu0 0.0
    %327 = vmatmul.mubr.f32.gmra.mrb[0].mxu0 %v234
    %v328 = vpop.f32.mrb[0].mxu0
    %v329 = vadd.f32 0.0, %v328
    %v330 = vpop.f32.mrb[0].mxu0
    %331 = vmatprep.mubr.f32.mxu0 0.0
    %332 = vmatmul.mubr.f32.gmra.mrb[0].mxu0 %v235
    %v333 = vpop.f32.mrb[0].mxu0
    %v334 = vadd.f32 0.0, %v333
    %v335 = vpop.f32.mrb[0].mxu0
    %336 = vmatprep.mubr.f32.mxu0 0.0
    %337 = vmatmul.mubr.f32.gmra.mrb[0].mxu0 %v236
    %v338 = vpop.f32.mrb[0].mxu0
    %v339 = vadd.f32 0.0, %v338
    %v340 = vpop.f32.mrb[0].mxu0
    %341 = vdwg.mxu0
    %v342 = vmul.f32 %v304, %v200
    %v343 = vmul.f32 %v309, %v200
    %v344 = vmul.f32 %v314, %v200
    %v345 = vmul.f32 %v319, %v200
    %v346 = vmul.f32 %v324, %v200
    %v347 = vmul.f32 %v329, %v200
    %v348 = vmul.f32 %v334, %v200
    %v349 = vmul.f32 %v339, %v200
    %v350 = vadd.f32 %v342, %v212
    %v351 = vadd.f32 %v343, %v212
    %v352 = vadd.f32 %v344, %v212
    %v353 = vadd.f32 %v345, %v212
    %v354 = vadd.f32 %v346, %v212
    %v355 = vadd.f32 %v347, %v212
    %v356 = vadd.f32 %v348, %v212
    %v357 = vadd.f32 %v349, %v212
    %v358 = vmax.f32 %v350, 0.0
    %v359 = vmax.f32 %v351, 0.0
    %v360 = vmax.f32 %v352, 0.0
    %v361 = vmax.f32 %v353, 0.0
    %v362 = vmax.f32 %v354, 0.0
    %v363 = vmax.f32 %v355, 0.0
    %v364 = vmax.f32 %v356, 0.0
    %v365 = vmax.f32 %v357, 0.0
    %v366 = vmax.f32 %v221, %v358
    %v367 = vmax.f32 %v222, %v359
    %v368 = vmax.f32 %v223, %v360
    %v369 = vmax.f32 %v224, %v361
    %v370 = vmax.f32 %v225, %v362
    %v371 = vmax.f32 %v226, %v363
    %v372 = vmax.f32 %v227, %v364
    %v373 = vmax.f32 %v228, %v365
    %v374 = vld [vmem:[%s4] sm:$0xff]
    %v375 = vld [vmem:[%s4 + $0x8] sm:$0xff]
    %v376 = vld [vmem:[%s4 + $0x10] sm:$0xff]
    %v377 = vld [vmem:[%s4 + $0x18] sm:$0xff]
    %v378 = vld [vmem:[%s4 + $0x20] sm:$0xff]
    %v379 = vld [vmem:[%s4 + $0x28] sm:$0xff]
    %v380 = vld [vmem:[%s4 + $0x30] sm:$0xff]
    %v381 = vld [vmem:[%s4 + $0x38] sm:$0xff]
    %v382 = vld [vmem:[%s7] sm:$0x1]
    %v383 = vlaneseq
    %v384 = vshrl.u32 %v383, 7
    %v385 = vsub.s32 0, %v384
    %v386 = vrot.slane %v382, %v385
    %vm387 = vcmask 523264
    %v389 = vsel %vm387, %v366, 0
    %v392 = vsel %vm387, %v367, 0
    %v395 = vsel %vm387, %v368, 0
    %v398 = vsel %vm387, %v369, 0
    %v401 = vsel %vm387, %v370, 0
    %v404 = vsel %vm387, %v371, 0
    %v407 = vsel %vm387, %v372, 0
    %v410 = vsel %vm387, %v373, 0
    %412 = vmatprep.subr.mxu0 0.0
    %413 = vmatpush1.msra.mxu0 %v374
    %414 = vmatprep.subr.mxu0 0.0
    %415 = vmatpush1.msra.mxu0 %v375
    %416 = vmatprep.subr.mxu0 0.0
    %417 = vmatpush1.msra.mxu0 %v376
    %418 = vmatprep.subr.mxu0 0.0
    %419 = vmatpush1.msra.mxu0 %v377
    %420 = vmatprep.subr.mxu0 0.0
    %421 = vmatpush1.msra.mxu0 %v378
    %422 = vmatprep.subr.mxu0 0.0
    %423 = vmatpush1.msra.mxu0 %v379
    %424 = vmatprep.subr.mxu0 0.0
    %425 = vmatpush1.msra.mxu0 %v380
    %426 = vmatprep.subr.mxu0 0.0
    %427 = vmatpush1.msra.mxu0 %v381
    %428 = vmatprep.subr.mxu0 0.0
    %429 = vmatpush1.msra.mxu0 0.0
    %430 = vmatprep.subr.mxu0 0.0
    %431 = vmatpush1.msra.mxu0 0.0
    %432 = vmatprep.subr.mxu0 0.0
    %433 = vmatpush1.msra.mxu0 0.0
    %434 = vmatprep.subr.mxu0 0.0
    %435 = vmatpush1.msra.mxu0 0.0
    %436 = vmatprep.subr.mxu0 0.0
    %437 = vmatpush1.msra.mxu0 0.0
    %438 = vmatprep.subr.mxu0 0.0
    %439 = vmatpush1.msra.mxu0 0.0
    %440 = vmatprep.subr.mxu0 0.0
    %441 = vmatpush1.msra.mxu0 0.0
    %442 = vmatprep.subr.mxu0 0.0
    %443 = vmatpush1.msra.mxu0 0.0
    %444 = vmatprep.subr.mxu0 0.0
    %445 = vmatpush1.msra.mxu0 0.0
    %446 = vmatprep.subr.mxu0 0.0
    %447 = vmatpush1.msra.mxu0 0.0
    %448 = vmatprep.subr.mxu0 0.0
    %449 = vmatpush1.msra.mxu0 0.0
    %450 = vmatprep.subr.mxu0 0.0
    %451 = vmatpush1.msra.mxu0 0.0
    %452 = vmatprep.subr.mxu0 0.0
    %453 = vmatpush1.msra.mxu0 0.0
    %454 = vmatprep.subr.mxu0 0.0
    %455 = vmatpush1.msra.mxu0 0.0
    %456 = vmatprep.subr.mxu0 0.0
    %457 = vmatpush1.msra.mxu0 0.0
    %458 = vmatprep.subr.mxu0 0.0
    %459 = vmatpush1.msra.mxu0 0.0
    %460 = vmatprep.subr.mxu0 0.0
    %461 = vmatpush1.msra.mxu0 0.0
    %462 = vmatprep.subr.mxu0 0.0
    %463 = vmatpush1.msra.mxu0 0.0
    %464 = vmatprep.subr.mxu0 0.0
    %465 = vmatpush1.msra.mxu0 0.0
    %466 = vmatprep.subr.mxu0 0.0
    %467 = vmatpush1.msra.mxu0 0.0
    %468 = vmatprep.subr.mxu0 0.0
    %469 = vmatpush1.msra.mxu0 0.0
    %470 = vmatprep.subr.mxu0 0.0
    %471 = vmatpush1.msra.mxu0 0.0
    %472 = vmatprep.subr.mxu0 0.0
    %473 = vmatpush1.msra.mxu0 0.0
    %474 = vmatprep.subr.mxu0 0.0
    %475 = vmatpush1.msra.mxu0 0.0
    %476 = vmatprep.mubr.f32.mxu0 0.0
    %477 = vmatmul.mubr.f32.gmra.mrb[0].mxu0 %v389
    %v478 = vpop.f32.mrb[0].mxu0
    %v479 = vadd.f32 %v386, %v478
    %v480 = vpop.f32.mrb[0].mxu0
    %481 = vmatprep.mubr.f32.mxu0 0.0
    %482 = vmatmul.mubr.f32.gmra.mrb[0].mxu0 %v392
    %v483 = vpop.f32.mrb[0].mxu0
    %v484 = vadd.f32 %v386, %v483
    %v485 = vpop.f32.mrb[0].mxu0
    %486 = vmatprep.mubr.f32.mxu0 0.0
    %487 = vmatmul.mubr.f32.gmra.mrb[0].mxu0 %v395
    %v488 = vpop.f32.mrb[0].mxu0
    %v489 = vadd.f32 %v386, %v488
    %v490 = vpop.f32.mrb[0].mxu0
    %491 = vmatprep.mubr.f32.mxu0 0.0
    %492 = vmatmul.mubr.f32.gmra.mrb[0].mxu0 %v398
    %v493 = vpop.f32.mrb[0].mxu0
    %v494 = vadd.f32 %v386, %v493
    %v495 = vpop.f32.mrb[0].mxu0
    %496 = vmatprep.mubr.f32.mxu0 0.0
    %497 = vmatmul.mubr.f32.gmra.mrb[0].mxu0 %v401
    %v498 = vpop.f32.mrb[0].mxu0
    %v499 = vadd.f32 %v386, %v498
    %v500 = vpop.f32.mrb[0].mxu0
    %501 = vmatprep.mubr.f32.mxu0 0.0
    %502 = vmatmul.mubr.f32.gmra.mrb[0].mxu0 %v404
    %v503 = vpop.f32.mrb[0].mxu0
    %v504 = vadd.f32 %v386, %v503
    %v505 = vpop.f32.mrb[0].mxu0
    %506 = vmatprep.mubr.f32.mxu0 0.0
    %507 = vmatmul.mubr.f32.gmra.mrb[0].mxu0 %v407
    %v508 = vpop.f32.mrb[0].mxu0
    %v509 = vadd.f32 %v386, %v508
    %v510 = vpop.f32.mrb[0].mxu0
    %511 = vmatprep.mubr.f32.mxu0 0.0
    %512 = vmatmul.mubr.f32.gmra.mrb[0].mxu0 %v410
    %v513 = vpop.f32.mrb[0].mxu0
    %v514 = vadd.f32 %v386, %v513
    %v515 = vpop.f32.mrb[0].mxu0
    %516 = vdwg.mxu0
    %v517 = vld [vmem:[#allocation3] sm:$0xff]
    %v518 = vld [vmem:[#allocation3 + $0x8] sm:$0xff]
    %v519 = vld [vmem:[#allocation3 + $0x10] sm:$0xff]
    %v520 = vld [vmem:[#allocation3 + $0x18] sm:$0xff]
    %v521 = vxor.u32 %v479, 2147483648
    %v522 = vxor.u32 %v484, 2147483648
    %v523 = vxor.u32 %v489, 2147483648
    %v524 = vxor.u32 %v494, 2147483648
    %v525 = vxor.u32 %v499, 2147483648
    %v526 = vxor.u32 %v504, 2147483648
    %v527 = vxor.u32 %v509, 2147483648
    %v528 = vxor.u32 %v514, 2147483648
    %v529 = vmul.f32 %v521, 1.442695
    %v530 = vpow.pop %v529
    %v531 = vmul.f32 %v522, 1.442695
    %v532 = vpow.pop %v531
    %v533 = vmul.f32 %v523, 1.442695
    %v534 = vpow.pop %v533
    %v535 = vmul.f32 %v524, 1.442695
    %v536 = vpow.pop %v535
    %v537 = vmul.f32 %v525, 1.442695
    %v538 = vpow.pop %v537
    %v539 = vmul.f32 %v526, 1.442695
    %v540 = vpow.pop %v539
    %v541 = vmul.f32 %v527, 1.442695
    %v542 = vpow.pop %v541
    %v543 = vmul.f32 %v528, 1.442695
    %v544 = vpow.pop %v543
    %v545 = vadd.f32 %v530, 1.0
    %v546 = vadd.f32 %v532, 1.0
    %v547 = vadd.f32 %v534, 1.0
    %v548 = vadd.f32 %v536, 1.0
    %v549 = vadd.f32 %v538, 1.0
    %v550 = vadd.f32 %v540, 1.0
    %v551 = vadd.f32 %v542, 1.0
    %v552 = vadd.f32 %v544, 1.0
    %v553 = vrcp.pop %v545
    %v554 = vmul.f32 1.0, %v553
    %v555 = vrcp.pop %v546
    %v556 = vmul.f32 1.0, %v555
    %v557 = vrcp.pop %v547
    %v558 = vmul.f32 1.0, %v557
    %v559 = vrcp.pop %v548
    %v560 = vmul.f32 1.0, %v559
    %v561 = vrcp.pop %v549
    %v562 = vmul.f32 1.0, %v561
    %v563 = vrcp.pop %v550
    %v564 = vmul.f32 1.0, %v563
    %v565 = vrcp.pop %v551
    %v566 = vmul.f32 1.0, %v565
    %v567 = vrcp.pop %v552
    %v568 = vmul.f32 1.0, %v567
    %v569 = vtanh.pop %v479
    %v570 = vtanh.pop %v484
    %v571 = vtanh.pop %v489
    %v572 = vtanh.pop %v494
    %v573 = vtanh.pop %v499
    %v574 = vtanh.pop %v504
    %v575 = vtanh.pop %v509
    %v576 = vtanh.pop %v514
    %v577 = vmul.f32 %v554, 0.0
    %v578 = vmul.f32 %v556, 0.0
    %v579 = vmul.f32 %v558, 0.0
    %v580 = vmul.f32 %v560, 0.0
    %v581 = vmul.f32 %v562, 0.0
    %v582 = vmul.f32 %v564, 0.0
    %v583 = vmul.f32 %v566, 0.0
    %v584 = vmul.f32 %v568, 0.0
    %593 = vrot.lane.b32.xlu0 %v569, 64
    %v594 = vpop.permute.xlu0 %593
    %595 = vrot.lane.b32.xlu0 %v570, 64
    %v596 = vpop.permute.xlu0 %595
    %597 = vrot.lane.b32.xlu0 %v571, 64
    %v598 = vpop.permute.xlu0 %597
    %599 = vrot.lane.b32.xlu0 %v572, 64
    %v600 = vpop.permute.xlu0 %599
    %601 = vrot.lane.b32.xlu0 %v573, 64
    %v602 = vpop.permute.xlu0 %601
    %603 = vrot.lane.b32.xlu0 %v574, 64
    %v604 = vpop.permute.xlu0 %603
    %605 = vrot.lane.b32.xlu0 %v575, 64
    %v606 = vpop.permute.xlu0 %605
    %607 = vrot.lane.b32.xlu0 %v576, 64
    %v608 = vpop.permute.xlu0 %607
    %v617 = vmul.f32 %v554, %v594
    %v618 = vmul.f32 %v556, %v596
    %v619 = vmul.f32 %v558, %v598
    %v620 = vmul.f32 %v560, %v600
    %v621 = vmul.f32 %v562, %v602
    %v622 = vmul.f32 %v564, %v604
    %v623 = vmul.f32 %v566, %v606
    %v624 = vmul.f32 %v568, %v608
    %633 = vrot.lane.b32.xlu0 %v617, 32
    %v634 = vpop.permute.xlu0 %633
    %635 = vrot.lane.b32.xlu0 %v618, 32
    %v636 = vpop.permute.xlu0 %635
    %637 = vrot.lane.b32.xlu0 %v619, 32
    %v638 = vpop.permute.xlu0 %637
    %639 = vrot.lane.b32.xlu0 %v620, 32
    %v640 = vpop.permute.xlu0 %639
    %641 = vrot.lane.b32.xlu0 %v621, 32
    %v642 = vpop.permute.xlu0 %641
    %643 = vrot.lane.b32.xlu0 %v622, 32
    %v644 = vpop.permute.xlu0 %643
    %645 = vrot.lane.b32.xlu0 %v623, 32
    %v646 = vpop.permute.xlu0 %645
    %647 = vrot.lane.b32.xlu0 %v624, 32
    %v648 = vpop.permute.xlu0 %647
    %v657 = vadd.f32 %v577, %v634
    %v658 = vadd.f32 %v578, %v636
    %v659 = vadd.f32 %v579, %v638
    %v660 = vadd.f32 %v580, %v640
    %v661 = vadd.f32 %v581, %v642
    %v662 = vadd.f32 %v582, %v644
    %v663 = vadd.f32 %v583, %v646
    %v664 = vadd.f32 %v584, %v648
    %v665 = vtanh.pop %v657
    %v666 = vtanh.pop %v658
    %v667 = vtanh.pop %v659
    %v668 = vtanh.pop %v660
    %v669 = vtanh.pop %v661
    %v670 = vtanh.pop %v662
    %v671 = vtanh.pop %v663
    %v672 = vtanh.pop %v664
    %681 = vrot.lane.b32.xlu0 %v665, 64
    %v682 = vpop.permute.xlu0 %681
    %683 = vrot.lane.b32.xlu0 %v666, 64
    %v684 = vpop.permute.xlu0 %683
    %685 = vrot.lane.b32.xlu0 %v667, 64
    %v686 = vpop.permute.xlu0 %685
    %687 = vrot.lane.b32.xlu0 %v668, 64
    %v688 = vpop.permute.xlu0 %687
    %689 = vrot.lane.b32.xlu0 %v669, 64
    %v690 = vpop.permute.xlu0 %689
    %691 = vrot.lane.b32.xlu0 %v670, 64
    %v692 = vpop.permute.xlu0 %691
    %693 = vrot.lane.b32.xlu0 %v671, 64
    %v694 = vpop.permute.xlu0 %693
    %695 = vrot.lane.b32.xlu0 %v672, 64
    %v696 = vpop.permute.xlu0 %695
    %v705 = vmul.f32 %v554, %v682
    %v706 = vmul.f32 %v556, %v684
    %v707 = vmul.f32 %v558, %v686
    %v708 = vmul.f32 %v560, %v688
    %v709 = vmul.f32 %v562, %v690
    %v710 = vmul.f32 %v564, %v692
    %v711 = vmul.f32 %v566, %v694
    %v712 = vmul.f32 %v568, %v696
    %v721 = vrot.slane %v706, 7
    %vm722 = vcmask 1041409
    %v723 = vsel %vm722, %v721, %v705
    %v724 = vrot.slane %v707, 6
    %vm725 = vcmask 1042434
    %v726 = vsel %vm725, %v724, %v723
    %v727 = vrot.slane %v708, 5
    %vm728 = vcmask 1043459
    %v729 = vsel %vm728, %v727, %v726
    %v730 = vrot.slane %v709, 4
    %vm731 = vcmask 1044484
    %v732 = vsel %vm731, %v730, %v729
    %v733 = vrot.slane %v710, 3
    %vm734 = vcmask 1045509
    %v735 = vsel %vm734, %v733, %v732
    %v736 = vrot.slane %v711, 2
    %vm737 = vcmask 1046534
    %v738 = vsel %vm737, %v736, %v735
    %v739 = vrot.slane %v712, 1
    %vm740 = vcmask 1047559
    %v741 = vsel %vm740, %v739, %v738
    %742 = vrot.lane.b32.xlu0 %v741, 32
    %v743 = vpop.permute.xlu0 %742
    %vm744 = vcmask 261120
    %v745 = vsel %vm744, %v743, 0
    %747 = vmatprep.subr.mxu0 0.0
    %748 = vmatpush1.msra.mxu0 %v517
    %749 = vmatprep.subr.mxu0 0.0
    %750 = vmatpush1.msra.mxu0 %v518
    %751 = vmatprep.subr.mxu0 0.0
    %752 = vmatpush1.msra.mxu0 %v519
    %753 = vmatprep.subr.mxu0 0.0
    %754 = vmatpush1.msra.mxu0 %v520
    %755 = vmatprep.subr.mxu0 0.0
    %756 = vmatpush1.msra.mxu0 0.0
    %757 = vmatprep.subr.mxu0 0.0
    %758 = vmatpush1.msra.mxu0 0.0
    %759 = vmatprep.subr.mxu0 0.0
    %760 = vmatpush1.msra.mxu0 0.0
    %761 = vmatprep.subr.mxu0 0.0
    %762 = vmatpush1.msra.mxu0 0.0
    %763 = vmatprep.subr.mxu0 0.0
    %764 = vmatpush1.msra.mxu0 0.0
    %765 = vmatprep.subr.mxu0 0.0
    %766 = vmatpush1.msra.mxu0 0.0
    %767 = vmatprep.subr.mxu0 0.0
    %768 = vmatpush1.msra.mxu0 0.0
    %769 = vmatprep.subr.mxu0 0.0
    %770 = vmatpush1.msra.mxu0 0.0
    %771 = vmatprep.subr.mxu0 0.0
    %772 = vmatpush1.msra.mxu0 0.0
    %773 = vmatprep.subr.mxu0 0.0
    %774 = vmatpush1.msra.mxu0 0.0
    %775 = vmatprep.subr.mxu0 0.0
    %776 = vmatpush1.msra.mxu0 0.0
    %777 = vmatprep.subr.mxu0 0.0
    %778 = vmatpush1.msra.mxu0 0.0
    %779 = vmatprep.subr.mxu0 0.0
    %780 = vmatpush1.msra.mxu0 0.0
    %781 = vmatprep.subr.mxu0 0.0
    %782 = vmatpush1.msra.mxu0 0.0
    %783 = vmatprep.subr.mxu0 0.0
    %784 = vmatpush1.msra.mxu0 0.0
    %785 = vmatprep.subr.mxu0 0.0
    %786 = vmatpush1.msra.mxu0 0.0
    %787 = vmatprep.subr.mxu0 0.0
    %788 = vmatpush1.msra.mxu0 0.0
    %789 = vmatprep.subr.mxu0 0.0
    %790 = vmatpush1.msra.mxu0 0.0
    %791 = vmatprep.subr.mxu0 0.0
    %792 = vmatpush1.msra.mxu0 0.0
    %793 = vmatprep.subr.mxu0 0.0
    %794 = vmatpush1.msra.mxu0 0.0
    %795 = vmatprep.subr.mxu0 0.0
    %796 = vmatpush1.msra.mxu0 0.0
    %797 = vmatprep.subr.mxu0 0.0
    %798 = vmatpush1.msra.mxu0 0.0
    %799 = vmatprep.subr.mxu0 0.0
    %800 = vmatpush1.msra.mxu0 0.0
    %801 = vmatprep.subr.mxu0 0.0
    %802 = vmatpush1.msra.mxu0 0.0
    %803 = vmatprep.subr.mxu0 0.0
    %804 = vmatpush1.msra.mxu0 0.0
    %805 = vmatprep.subr.mxu0 0.0
    %806 = vmatpush1.msra.mxu0 0.0
    %807 = vmatprep.subr.mxu0 0.0
    %808 = vmatpush1.msra.mxu0 0.0
    %809 = vmatprep.subr.mxu0 0.0
    %810 = vmatpush1.msra.mxu0 0.0
    %811 = vmatprep.mubr.f32.mxu0 0.0
    %812 = vmatmul.mubr.f32.gmra.mrb[0].mxu0 %v745
    %v813 = vpop.f32.mrb[0].mxu0
    %v814 = vadd.f32 0.0, %v813
    %v815 = vpop.f32.mrb[0].mxu0
    %816 = vdwg.mxu0
    %v818 = vrot.slane %v814, 7
    %v819 = vrot.slane %v814, 1
    %v820 = vrot.slane %v814, 2
    %v821 = vrot.slane %v814, 3
    %v822 = vrot.slane %v814, 4
    %v823 = vrot.slane %v814, 5
    %v824 = vrot.slane %v814, 6
    %v833 = vadd.f32 %v479, %v818
    %v834 = vadd.f32 %v484, %v814
    %v835 = vadd.f32 %v489, %v819
    %v836 = vadd.f32 %v494, %v820
    %v837 = vadd.f32 %v499, %v821
    %v838 = vadd.f32 %v504, %v822
    %v839 = vadd.f32 %v509, %v823
    %v840 = vadd.f32 %v514, %v824
    %v841 = vxor.u32 %v833, 2147483648
    %v842 = vxor.u32 %v834, 2147483648
    %v843 = vxor.u32 %v835, 2147483648
    %v844 = vxor.u32 %v836, 2147483648
    %v845 = vxor.u32 %v837, 2147483648
    %v846 = vxor.u32 %v838, 2147483648
    %v847 = vxor.u32 %v839, 2147483648
    %v848 = vxor.u32 %v840, 2147483648
    %v849 = vmul.f32 %v841, 1.442695
    %v850 = vpow.pop %v849
    %v851 = vmul.f32 %v842, 1.442695
    %v852 = vpow.pop %v851
    %v853 = vmul.f32 %v843, 1.442695
    %v854 = vpow.pop %v853
    %v855 = vmul.f32 %v844, 1.442695
    %v856 = vpow.pop %v855
    %v857 = vmul.f32 %v845, 1.442695
    %v858 = vpow.pop %v857
    %v859 = vmul.f32 %v846, 1.442695
    %v860 = vpow.pop %v859
    %v861 = vmul.f32 %v847, 1.442695
    %v862 = vpow.pop %v861
    %v863 = vmul.f32 %v848, 1.442695
    %v864 = vpow.pop %v863
    %v865 = vadd.f32 %v850, 1.0
    %v866 = vadd.f32 %v852, 1.0
    %v867 = vadd.f32 %v854, 1.0
    %v868 = vadd.f32 %v856, 1.0
    %v869 = vadd.f32 %v858, 1.0
    %v870 = vadd.f32 %v860, 1.0
    %v871 = vadd.f32 %v862, 1.0
    %v872 = vadd.f32 %v864, 1.0
    %v873 = vrcp.pop %v865
    %v874 = vmul.f32 1.0, %v873
    %v875 = vrcp.pop %v866
    %v876 = vmul.f32 1.0, %v875
    %v877 = vrcp.pop %v867
    %v878 = vmul.f32 1.0, %v877
    %v879 = vrcp.pop %v868
    %v880 = vmul.f32 1.0, %v879
    %v881 = vrcp.pop %v869
    %v882 = vmul.f32 1.0, %v881
    %v883 = vrcp.pop %v870
    %v884 = vmul.f32 1.0, %v883
    %v885 = vrcp.pop %v871
    %v886 = vmul.f32 1.0, %v885
    %v887 = vrcp.pop %v872
    %v888 = vmul.f32 1.0, %v887
    %v889 = vtanh.pop %v833
    %v890 = vtanh.pop %v834
    %v891 = vtanh.pop %v835
    %v892 = vtanh.pop %v836
    %v893 = vtanh.pop %v837
    %v894 = vtanh.pop %v838
    %v895 = vtanh.pop %v839
    %v896 = vtanh.pop %v840
    %v905 = vrot.slane %v657, 7
    %v906 = vrot.slane %v658, 7
    %v907 = vrot.slane %v659, 7
    %v908 = vrot.slane %v660, 7
    %v909 = vrot.slane %v661, 7
    %v910 = vrot.slane %v662, 7
    %v911 = vrot.slane %v663, 7
    %v912 = vrot.slane %v664, 7
    %v921 = vmul.f32 %v874, %v905
    %v922 = vmul.f32 %v876, %v906
    %v923 = vmul.f32 %v878, %v907
    %v924 = vmul.f32 %v880, %v908
    %v925 = vmul.f32 %v882, %v909
    %v926 = vmul.f32 %v884, %v910
    %v927 = vmul.f32 %v886, %v911
    %v928 = vmul.f32 %v888, %v912
    %937 = vrot.lane.b32.xlu0 %v889, 64
    %v938 = vpop.permute.xlu0 %937
    %939 = vrot.lane.b32.xlu0 %v890, 64
    %v940 = vpop.permute.xlu0 %939
    %941 = vrot.lane.b32.xlu0 %v891, 64
    %v942 = vpop.permute.xlu0 %941
    %943 = vrot.lane.b32.xlu0 %v892, 64
    %v944 = vpop.permute.xlu0 %943
    %945 = vrot.lane.b32.xlu0 %v893, 64
    %v946 = vpop.permute.xlu0 %945
    %947 = vrot.lane.b32.xlu0 %v894, 64
    %v948 = vpop.permute.xlu0 %947
    %949 = vrot.lane.b32.xlu0 %v895, 64
    %v950 = vpop.permute.xlu0 %949
    %951 = vrot.lane.b32.xlu0 %v896, 64
    %v952 = vpop.permute.xlu0 %951
    %v961 = vmul.f32 %v874, %v938
    %v962 = vmul.f32 %v876, %v940
    %v963 = vmul.f32 %v878, %v942
    %v964 = vmul.f32 %v880, %v944
    %v965 = vmul.f32 %v882, %v946
    %v966 = vmul.f32 %v884, %v948
    %v967 = vmul.f32 %v886, %v950
    %v968 = vmul.f32 %v888, %v952
    %977 = vrot.lane.b32.xlu0 %v961, 32
    %v978 = vpop.permute.xlu0 %977
    %979 = vrot.lane.b32.xlu0 %v962, 32
    %v980 = vpop.permute.xlu0 %979
    %981 = vrot.lane.b32.xlu0 %v963, 32
    %v982 = vpop.permute.xlu0 %981
    %983 = vrot.lane.b32.xlu0 %v964, 32
    %v984 = vpop.permute.xlu0 %983
    %985 = vrot.lane.b32.xlu0 %v965, 32
    %v986 = vpop.permute.xlu0 %985
    %987 = vrot.lane.b32.xlu0 %v966, 32
    %v988 = vpop.permute.xlu0 %987
    %989 = vrot.lane.b32.xlu0 %v967, 32
    %v990 = vpop.permute.xlu0 %989
    %991 = vrot.lane.b32.xlu0 %v968, 32
    %v992 = vpop.permute.xlu0 %991
    %v1001 = vadd.f32 %v921, %v978
    %v1002 = vadd.f32 %v922, %v980
    %v1003 = vadd.f32 %v923, %v982
    %v1004 = vadd.f32 %v924, %v984
    %v1005 = vadd.f32 %v925, %v986
    %v1006 = vadd.f32 %v926, %v988
    %v1007 = vadd.f32 %v927, %v990
    %v1008 = vadd.f32 %v928, %v992
    %v1009 = vtanh.pop %v1001
    %v1010 = vtanh.pop %v1002
    %v1011 = vtanh.pop %v1003
    %v1012 = vtanh.pop %v1004
    %v1013 = vtanh.pop %v1005
    %v1014 = vtanh.pop %v1006
    %v1015 = vtanh.pop %v1007
    %v1016 = vtanh.pop %v1008
    %1025 = vrot.lane.b32.xlu0 %v1009, 64
    %v1026 = vpop.permute.xlu0 %1025
    %1027 = vrot.lane.b32.xlu0 %v1010, 64
    %v1028 = vpop.permute.xlu0 %1027
    %1029 = vrot.lane.b32.xlu0 %v1011, 64
    %v1030 = vpop.permute.xlu0 %1029
    %1031 = vrot.lane.b32.xlu0 %v1012, 64
    %v1032 = vpop.permute.xlu0 %1031
    %1033 = vrot.lane.b32.xlu0 %v1013, 64
    %v1034 = vpop.permute.xlu0 %1033
    %1035 = vrot.lane.b32.xlu0 %v1014, 64
    %v1036 = vpop.permute.xlu0 %1035
    %1037 = vrot.lane.b32.xlu0 %v1015, 64
    %v1038 = vpop.permute.xlu0 %1037
    %1039 = vrot.lane.b32.xlu0 %v1016, 64
    %v1040 = vpop.permute.xlu0 %1039
    %v1049 = vmul.f32 %v874, %v1026
    %v1050 = vmul.f32 %v876, %v1028
    %v1051 = vmul.f32 %v878, %v1030
    %v1052 = vmul.f32 %v880, %v1032
    %v1053 = vmul.f32 %v882, %v1034
    %v1054 = vmul.f32 %v884, %v1036
    %v1055 = vmul.f32 %v886, %v1038
    %v1056 = vmul.f32 %v888, %v1040
    %v1065 = vrot.slane %v1049, 1
    %v1066 = vsel %vm722, %v1050, %v1065
    %v1067 = vrot.slane %v1051, 7
    %v1068 = vsel %vm725, %v1067, %v1066
    %v1069 = vrot.slane %v1052, 6
    %v1070 = vsel %vm728, %v1069, %v1068
    %v1071 = vrot.slane %v1053, 5
    %v1072 = vsel %vm731, %v1071, %v1070
    %v1073 = vrot.slane %v1054, 4
    %v1074 = vsel %vm734, %v1073, %v1072
    %v1075 = vrot.slane %v1055, 3
    %v1076 = vsel %vm737, %v1075, %v1074
    %v1077 = vrot.slane %v1056, 2
    %v1078 = vsel %vm740, %v1077, %v1076
    %1079 = vrot.lane.b32.xlu0 %v1078, 32
    %v1080 = vpop.permute.xlu0 %1079
    %v1081 = vsel %vm744, %v1080, 0
    %1083 = vmatprep.subr.mxu0 0.0
    %1084 = vmatpush1.msra.mxu0 %v517
    %1085 = vmatprep.subr.mxu0 0.0
    %1086 = vmatpush1.msra.mxu0 %v518
    %1087 = vmatprep.subr.mxu0 0.0
    %1088 = vmatpush1.msra.mxu0 %v519
    %1089 = vmatprep.subr.mxu0 0.0
    %1090 = vmatpush1.msra.mxu0 %v520
    %1091 = vmatprep.subr.mxu0 0.0
    %1092 = vmatpush1.msra.mxu0 0.0
    %1093 = vmatprep.subr.mxu0 0.0
    %1094 = vmatpush1.msra.mxu0 0.0
    %1095 = vmatprep.subr.mxu0 0.0
    %1096 = vmatpush1.msra.mxu0 0.0
    %1097 = vmatprep.subr.mxu0 0.0
    %1098 = vmatpush1.msra.mxu0 0.0
    %1099 = vmatprep.subr.mxu0 0.0
    %1100 = vmatpush1.msra.mxu0 0.0
    %1101 = vmatprep.subr.mxu0 0.0
    %1102 = vmatpush1.msra.mxu0 0.0
    %1103 = vmatprep.subr.mxu0 0.0
    %1104 = vmatpush1.msra.mxu0 0.0
    %1105 = vmatprep.subr.mxu0 0.0
    %1106 = vmatpush1.msra.mxu0 0.0
    %1107 = vmatprep.subr.mxu0 0.0
    %1108 = vmatpush1.msra.mxu0 0.0
    %1109 = vmatprep.subr.mxu0 0.0
    %1110 = vmatpush1.msra.mxu0 0.0
    %1111 = vmatprep.subr.mxu0 0.0
    %1112 = vmatpush1.msra.mxu0 0.0
    %1113 = vmatprep.subr.mxu0 0.0
    %1114 = vmatpush1.msra.mxu0 0.0
    %1115 = vmatprep.subr.mxu0 0.0
    %1116 = vmatpush1.msra.mxu0 0.0
    %1117 = vmatprep.subr.mxu0 0.0
    %1118 = vmatpush1.msra.mxu0 0.0
    %1119 = vmatprep.subr.mxu0 0.0
    %1120 = vmatpush1.msra.mxu0 0.0
    %1121 = vmatprep.subr.mxu0 0.0
    %1122 = vmatpush1.msra.mxu0 0.0
    %1123 = vmatprep.subr.mxu0 0.0
    %1124 = vmatpush1.msra.mxu0 0.0
    %1125 = vmatprep.subr.mxu0 0.0
    %1126 = vmatpush1.msra.mxu0 0.0
    %1127 = vmatprep.subr.mxu0 0.0
    %1128 = vmatpush1.msra.mxu0 0.0
    %1129 = vmatprep.subr.mxu0 0.0
    %1130 = vmatpush1.msra.mxu0 0.0
    %1131 = vmatprep.subr.mxu0 0.0
    %1132 = vmatpush1.msra.mxu0 0.0
    %1133 = vmatprep.subr.mxu0 0.0
    %1134 = vmatpush1.msra.mxu0 0.0
    %1135 = vmatprep.subr.mxu0 0.0
    %1136 = vmatpush1.msra.mxu0 0.0
    %1137 = vmatprep.subr.mxu0 0.0
    %1138 = vmatpush1.msra.mxu0 0.0
    %1139 = vmatprep.subr.mxu0 0.0
    %1140 = vmatpush1.msra.mxu0 0.0
    %1141 = vmatprep.subr.mxu0 0.0
    %1142 = vmatpush1.msra.mxu0 0.0
    %1143 = vmatprep.subr.mxu0 0.0
    %1144 = vmatpush1.msra.mxu0 0.0
    %1145 = vmatprep.subr.mxu0 0.0
    %1146 = vmatpush1.msra.mxu0 0.0
    %1147 = vmatprep.mubr.f32.mxu0 0.0
    %1148 = vmatmul.mubr.f32.gmra.mrb[0].mxu0 %v1081
    %v1149 = vpop.f32.mrb[0].mxu0
    %v1150 = vadd.f32 0.0, %v1149
    %v1151 = vpop.f32.mrb[0].mxu0
    %1152 = vdwg.mxu0
    %v1154 = vrot.slane %v1150, 6
    %v1155 = vrot.slane %v1150, 7
    %v1156 = vrot.slane %v1150, 1
    %v1157 = vrot.slane %v1150, 2
    %v1158 = vrot.slane %v1150, 3
    %v1159 = vrot.slane %v1150, 4
    %v1160 = vrot.slane %v1150, 5
    %v1169 = vadd.f32 %v479, %v1154
    %v1170 = vadd.f32 %v484, %v1155
    %v1171 = vadd.f32 %v489, %v1150
    %v1172 = vadd.f32 %v494, %v1156
    %v1173 = vadd.f32 %v499, %v1157
    %v1174 = vadd.f32 %v504, %v1158
    %v1175 = vadd.f32 %v509, %v1159
    %v1176 = vadd.f32 %v514, %v1160
    %v1177 = vxor.u32 %v1169, 2147483648
    %v1178 = vxor.u32 %v1170, 2147483648
    %v1179 = vxor.u32 %v1171, 2147483648
    %v1180 = vxor.u32 %v1172, 2147483648
    %v1181 = vxor.u32 %v1173, 2147483648
    %v1182 = vxor.u32 %v1174, 2147483648
    %v1183 = vxor.u32 %v1175, 2147483648
    %v1184 = vxor.u32 %v1176, 2147483648
    %v1185 = vmul.f32 %v1177, 1.442695
    %v1186 = vpow.pop %v1185
    %v1187 = vmul.f32 %v1178, 1.442695
    %v1188 = vpow.pop %v1187
    %v1189 = vmul.f32 %v1179, 1.442695
    %v1190 = vpow.pop %v1189
    %v1191 = vmul.f32 %v1180, 1.442695
    %v1192 = vpow.pop %v1191
    %v1193 = vmul.f32 %v1181, 1.442695
    %v1194 = vpow.pop %v1193
    %v1195 = vmul.f32 %v1182, 1.442695
    %v1196 = vpow.pop %v1195
    %v1197 = vmul.f32 %v1183, 1.442695
    %v1198 = vpow.pop %v1197
    %v1199 = vmul.f32 %v1184, 1.442695
    %v1200 = vpow.pop %v1199
    %v1201 = vadd.f32 %v1186, 1.0
    %v1202 = vadd.f32 %v1188, 1.0
    %v1203 = vadd.f32 %v1190, 1.0
    %v1204 = vadd.f32 %v1192, 1.0
    %v1205 = vadd.f32 %v1194, 1.0
    %v1206 = vadd.f32 %v1196, 1.0
    %v1207 = vadd.f32 %v1198, 1.0
    %v1208 = vadd.f32 %v1200, 1.0
    %v1209 = vrcp.pop %v1201
    %v1210 = vmul.f32 1.0, %v1209
    %v1211 = vrcp.pop %v1202
    %v1212 = vmul.f32 1.0, %v1211
    %v1213 = vrcp.pop %v1203
    %v1214 = vmul.f32 1.0, %v1213
    %v1215 = vrcp.pop %v1204
    %v1216 = vmul.f32 1.0, %v1215
    %v1217 = vrcp.pop %v1205
    %v1218 = vmul.f32 1.0, %v1217
    %v1219 = vrcp.pop %v1206
    %v1220 = vmul.f32 1.0, %v1219
    %v1221 = vrcp.pop %v1207
    %v1222 = vmul.f32 1.0, %v1221
    %v1223 = vrcp.pop %v1208
    %v1224 = vmul.f32 1.0, %v1223
    %v1225 = vtanh.pop %v1169
    %v1226 = vtanh.pop %v1170
    %v1227 = vtanh.pop %v1171
    %v1228 = vtanh.pop %v1172
    %v1229 = vtanh.pop %v1173
    %v1230 = vtanh.pop %v1174
    %v1231 = vtanh.pop %v1175
    %v1232 = vtanh.pop %v1176
    %v1241 = vrot.slane %v1001, 7
    %v1242 = vrot.slane %v1002, 7
    %v1243 = vrot.slane %v1003, 7
    %v1244 = vrot.slane %v1004, 7
    %v1245 = vrot.slane %v1005, 7
    %v1246 = vrot.slane %v1006, 7
    %v1247 = vrot.slane %v1007, 7
    %v1248 = vrot.slane %v1008, 7
    %v1257 = vmul.f32 %v1210, %v1241
    %v1258 = vmul.f32 %v1212, %v1242
    %v1259 = vmul.f32 %v1214, %v1243
    %v1260 = vmul.f32 %v1216, %v1244
    %v1261 = vmul.f32 %v1218, %v1245
    %v1262 = vmul.f32 %v1220, %v1246
    %v1263 = vmul.f32 %v1222, %v1247
    %v1264 = vmul.f32 %v1224, %v1248
    %1273 = vrot.lane.b32.xlu0 %v1225, 64
    %v1274 = vpop.permute.xlu0 %1273
    %1275 = vrot.lane.b32.xlu0 %v1226, 64
    %v1276 = vpop.permute.xlu0 %1275
    %1277 = vrot.lane.b32.xlu0 %v1227, 64
    %v1278 = vpop.permute.xlu0 %1277
    %1279 = vrot.lane.b32.xlu0 %v1228, 64
    %v1280 = vpop.permute.xlu0 %1279
    %1281 = vrot.lane.b32.xlu0 %v1229, 64
    %v1282 = vpop.permute.xlu0 %1281
    %1283 = vrot.lane.b32.xlu0 %v1230, 64
    %v1284 = vpop.permute.xlu0 %1283
    %1285 = vrot.lane.b32.xlu0 %v1231, 64
    %v1286 = vpop.permute.xlu0 %1285
    %1287 = vrot.lane.b32.xlu0 %v1232, 64
    %v1288 = vpop.permute.xlu0 %1287
    %v1297 = vmul.f32 %v1210, %v1274
    %v1298 = vmul.f32 %v1212, %v1276
    %v1299 = vmul.f32 %v1214, %v1278
    %v1300 = vmul.f32 %v1216, %v1280
    %v1301 = vmul.f32 %v1218, %v1282
    %v1302 = vmul.f32 %v1220, %v1284
    %v1303 = vmul.f32 %v1222, %v1286
    %v1304 = vmul.f32 %v1224, %v1288
    %1313 = vrot.lane.b32.xlu0 %v1297, 32
    %v1314 = vpop.permute.xlu0 %1313
    %1315 = vrot.lane.b32.xlu0 %v1298, 32
    %v1316 = vpop.permute.xlu0 %1315
    %1317 = vrot.lane.b32.xlu0 %v1299, 32
    %v1318 = vpop.permute.xlu0 %1317
    %1319 = vrot.lane.b32.xlu0 %v1300, 32
    %v1320 = vpop.permute.xlu0 %1319
    %1321 = vrot.lane.b32.xlu0 %v1301, 32
    %v1322 = vpop.permute.xlu0 %1321
    %1323 = vrot.lane.b32.xlu0 %v1302, 32
    %v1324 = vpop.permute.xlu0 %1323
    %1325 = vrot.lane.b32.xlu0 %v1303, 32
    %v1326 = vpop.permute.xlu0 %1325
    %1327 = vrot.lane.b32.xlu0 %v1304, 32
    %v1328 = vpop.permute.xlu0 %1327
    %v1337 = vadd.f32 %v1257, %v1314
    %v1338 = vadd.f32 %v1258, %v1316
    %v1339 = vadd.f32 %v1259, %v1318
    %v1340 = vadd.f32 %v1260, %v1320
    %v1341 = vadd.f32 %v1261, %v1322
    %v1342 = vadd.f32 %v1262, %v1324
    %v1343 = vadd.f32 %v1263, %v1326
    %v1344 = vadd.f32 %v1264, %v1328
    %v1345 = vtanh.pop %v1337
    %v1346 = vtanh.pop %v1338
    %v1347 = vtanh.pop %v1339
    %v1348 = vtanh.pop %v1340
    %v1349 = vtanh.pop %v1341
    %v1350 = vtanh.pop %v1342
    %v1351 = vtanh.pop %v1343
    %v1352 = vtanh.pop %v1344
    %1361 = vrot.lane.b32.xlu0 %v1345, 64
    %v1362 = vpop.permute.xlu0 %1361
    %1363 = vrot.lane.b32.xlu0 %v1346, 64
    %v1364 = vpop.permute.xlu0 %1363
    %1365 = vrot.lane.b32.xlu0 %v1347, 64
    %v1366 = vpop.permute.xlu0 %1365
    %1367 = vrot.lane.b32.xlu0 %v1348, 64
    %v1368 = vpop.permute.xlu0 %1367
    %1369 = vrot.lane.b32.xlu0 %v1349, 64
    %v1370 = vpop.permute.xlu0 %1369
    %1371 = vrot.lane.b32.xlu0 %v1350, 64
    %v1372 = vpop.permute.xlu0 %1371
    %1373 = vrot.lane.b32.xlu0 %v1351, 64
    %v1374 = vpop.permute.xlu0 %1373
    %1375 = vrot.lane.b32.xlu0 %v1352, 64
    %v1376 = vpop.permute.xlu0 %1375
    %v1385 = vmul.f32 %v1210, %v1362
    %v1386 = vmul.f32 %v1212, %v1364
    %v1387 = vmul.f32 %v1214, %v1366
    %v1388 = vmul.f32 %v1216, %v1368
    %v1389 = vmul.f32 %v1218, %v1370
    %v1390 = vmul.f32 %v1220, %v1372
    %v1391 = vmul.f32 %v1222, %v1374
    %v1392 = vmul.f32 %v1224, %v1376
    %v1401 = vrot.slane %v1385, 2
    %v1402 = vrot.slane %v1386, 1
    %v1403 = vsel %vm722, %v1402, %v1401
    %v1404 = vsel %vm725, %v1387, %v1403
    %v1405 = vrot.slane %v1388, 7
    %v1406 = vsel %vm728, %v1405, %v1404
    %v1407 = vrot.slane %v1389, 6
    %v1408 = vsel %vm731, %v1407, %v1406
    %v1409 = vrot.slane %v1390, 5
    %v1410 = vsel %vm734, %v1409, %v1408
    %v1411 = vrot.slane %v1391, 4
    %v1412 = vsel %vm737, %v1411, %v1410
    %v1413 = vrot.slane %v1392, 3
    %v1414 = vsel %vm740, %v1413, %v1412
    %1415 = vrot.lane.b32.xlu0 %v1414, 32
    %v1416 = vpop.permute.xlu0 %1415
    %v1417 = vsel %vm744, %v1416, 0
    %1419 = vmatprep.subr.mxu0 0.0
    %1420 = vmatpush1.msra.mxu0 %v517
    %1421 = vmatprep.subr.mxu0 0.0
    %1422 = vmatpush1.msra.mxu0 %v518
    %1423 = vmatprep.subr.mxu0 0.0
    %1424 = vmatpush1.msra.mxu0 %v519
    %1425 = vmatprep.subr.mxu0 0.0
    %1426 = vmatpush1.msra.mxu0 %v520
    %1427 = vmatprep.subr.mxu0 0.0
    %1428 = vmatpush1.msra.mxu0 0.0
    %1429 = vmatprep.subr.mxu0 0.0
    %1430 = vmatpush1.msra.mxu0 0.0
    %1431 = vmatprep.subr.mxu0 0.0
    %1432 = vmatpush1.msra.mxu0 0.0
    %1433 = vmatprep.subr.mxu0 0.0
    %1434 = vmatpush1.msra.mxu0 0.0
    %1435 = vmatprep.subr.mxu0 0.0
    %1436 = vmatpush1.msra.mxu0 0.0
    %1437 = vmatprep.subr.mxu0 0.0
    %1438 = vmatpush1.msra.mxu0 0.0
    %1439 = vmatprep.subr.mxu0 0.0
    %1440 = vmatpush1.msra.mxu0 0.0
    %1441 = vmatprep.subr.mxu0 0.0
    %1442 = vmatpush1.msra.mxu0 0.0
    %1443 = vmatprep.subr.mxu0 0.0
    %1444 = vmatpush1.msra.mxu0 0.0
    %1445 = vmatprep.subr.mxu0 0.0
    %1446 = vmatpush1.msra.mxu0 0.0
    %1447 = vmatprep.subr.mxu0 0.0
    %1448 = vmatpush1.msra.mxu0 0.0
    %1449 = vmatprep.subr.mxu0 0.0
    %1450 = vmatpush1.msra.mxu0 0.0
    %1451 = vmatprep.subr.mxu0 0.0
    %1452 = vmatpush1.msra.mxu0 0.0
    %1453 = vmatprep.subr.mxu0 0.0
    %1454 = vmatpush1.msra.mxu0 0.0
    %1455 = vmatprep.subr.mxu0 0.0
    %1456 = vmatpush1.msra.mxu0 0.0
    %1457 = vmatprep.subr.mxu0 0.0
    %1458 = vmatpush1.msra.mxu0 0.0
    %1459 = vmatprep.subr.mxu0 0.0
    %1460 = vmatpush1.msra.mxu0 0.0
    %1461 = vmatprep.subr.mxu0 0.0
    %1462 = vmatpush1.msra.mxu0 0.0
    %1463 = vmatprep.subr.mxu0 0.0
    %1464 = vmatpush1.msra.mxu0 0.0
    %1465 = vmatprep.subr.mxu0 0.0
    %1466 = vmatpush1.msra.mxu0 0.0
    %1467 = vmatprep.subr.mxu0 0.0
    %1468 = vmatpush1.msra.mxu0 0.0
    %1469 = vmatprep.subr.mxu0 0.0
    %1470 = vmatpush1.msra.mxu0 0.0
    %1471 = vmatprep.subr.mxu0 0.0
    %1472 = vmatpush1.msra.mxu0 0.0
    %1473 = vmatprep.subr.mxu0 0.0
    %1474 = vmatpush1.msra.mxu0 0.0
    %1475 = vmatprep.subr.mxu0 0.0
    %1476 = vmatpush1.msra.mxu0 0.0
    %1477 = vmatprep.subr.mxu0 0.0
    %1478 = vmatpush1.msra.mxu0 0.0
    %1479 = vmatprep.subr.mxu0 0.0
    %1480 = vmatpush1.msra.mxu0 0.0
    %1481 = vmatprep.subr.mxu0 0.0
    %1482 = vmatpush1.msra.mxu0 0.0
    %1483 = vmatprep.mubr.f32.mxu0 0.0
    %1484 = vmatmul.mubr.f32.gmra.mrb[0].mxu0 %v1417
    %v1485 = vpop.f32.mrb[0].mxu0
    %v1486 = vadd.f32 0.0, %v1485
    %v1487 = vpop.f32.mrb[0].mxu0
    %1488 = vdwg.mxu0
    %v1490 = vrot.slane %v1486, 5
    %v1491 = vrot.slane %v1486, 6
    %v1492 = vrot.slane %v1486, 7
    %v1493 = vrot.slane %v1486, 1
    %v1494 = vrot.slane %v1486, 2
    %v1495 = vrot.slane %v1486, 3
    %v1496 = vrot.slane %v1486, 4
    %v1505 = vadd.f32 %v479, %v1490
    %v1506 = vadd.f32 %v484, %v1491
    %v1507 = vadd.f32 %v489, %v1492
    %v1508 = vadd.f32 %v494, %v1486
    %v1509 = vadd.f32 %v499, %v1493
    %v1510 = vadd.f32 %v504, %v1494
    %v1511 = vadd.f32 %v509, %v1495
    %v1512 = vadd.f32 %v514, %v1496
    %v1513 = vxor.u32 %v1505, 2147483648
    %v1514 = vxor.u32 %v1506, 2147483648
    %v1515 = vxor.u32 %v1507, 2147483648
    %v1516 = vxor.u32 %v1508, 2147483648
    %v1517 = vxor.u32 %v1509, 2147483648
    %v1518 = vxor.u32 %v1510, 2147483648
    %v1519 = vxor.u32 %v1511, 2147483648
    %v1520 = vxor.u32 %v1512, 2147483648
    %v1521 = vmul.f32 %v1513, 1.442695
    %v1522 = vpow.pop %v1521
    %v1523 = vmul.f32 %v1514, 1.442695
    %v1524 = vpow.pop %v1523
    %v1525 = vmul.f32 %v1515, 1.442695
    %v1526 = vpow.pop %v1525
    %v1527 = vmul.f32 %v1516, 1.442695
    %v1528 = vpow.pop %v1527
    %v1529 = vmul.f32 %v1517, 1.442695
    %v1530 = vpow.pop %v1529
    %v1531 = vmul.f32 %v1518, 1.442695
    %v1532 = vpow.pop %v1531
    %v1533 = vmul.f32 %v1519, 1.442695
    %v1534 = vpow.pop %v1533
    %v1535 = vmul.f32 %v1520, 1.442695
    %v1536 = vpow.pop %v1535
    %v1537 = vadd.f32 %v1522, 1.0
    %v1538 = vadd.f32 %v1524, 1.0
    %v1539 = vadd.f32 %v1526, 1.0
    %v1540 = vadd.f32 %v1528, 1.0
    %v1541 = vadd.f32 %v1530, 1.0
    %v1542 = vadd.f32 %v1532, 1.0
    %v1543 = vadd.f32 %v1534, 1.0
    %v1544 = vadd.f32 %v1536, 1.0
    %v1545 = vrcp.pop %v1537
    %v1546 = vmul.f32 1.0, %v1545
    %v1547 = vrcp.pop %v1538
    %v1548 = vmul.f32 1.0, %v1547
    %v1549 = vrcp.pop %v1539
    %v1550 = vmul.f32 1.0, %v1549
    %v1551 = vrcp.pop %v1540
    %v1552 = vmul.f32 1.0, %v1551
    %v1553 = vrcp.pop %v1541
    %v1554 = vmul.f32 1.0, %v1553
    %v1555 = vrcp.pop %v1542
    %v1556 = vmul.f32 1.0, %v1555
    %v1557 = vrcp.pop %v1543
    %v1558 = vmul.f32 1.0, %v1557
    %v1559 = vrcp.pop %v1544
    %v1560 = vmul.f32 1.0, %v1559
    %v1561 = vtanh.pop %v1505
    %v1562 = vtanh.pop %v1506
    %v1563 = vtanh.pop %v1507
    %v1564 = vtanh.pop %v1508
    %v1565 = vtanh.pop %v1509
    %v1566 = vtanh.pop %v1510
    %v1567 = vtanh.pop %v1511
    %v1568 = vtanh.pop %v1512
    %v1577 = vrot.slane %v1337, 7
    %v1578 = vrot.slane %v1338, 7
    %v1579 = vrot.slane %v1339, 7
    %v1580 = vrot.slane %v1340, 7
    %v1581 = vrot.slane %v1341, 7
    %v1582 = vrot.slane %v1342, 7
    %v1583 = vrot.slane %v1343, 7
    %v1584 = vrot.slane %v1344, 7
    %v1593 = vmul.f32 %v1546, %v1577
    %v1594 = vmul.f32 %v1548, %v1578
    %v1595 = vmul.f32 %v1550, %v1579
    %v1596 = vmul.f32 %v1552, %v1580
    %v1597 = vmul.f32 %v1554, %v1581
    %v1598 = vmul.f32 %v1556, %v1582
    %v1599 = vmul.f32 %v1558, %v1583
    %v1600 = vmul.f32 %v1560, %v1584
    %1609 = vrot.lane.b32.xlu0 %v1561, 64
    %v1610 = vpop.permute.xlu0 %1609
    %1611 = vrot.lane.b32.xlu0 %v1562, 64
    %v1612 = vpop.permute.xlu0 %1611
    %1613 = vrot.lane.b32.xlu0 %v1563, 64
    %v1614 = vpop.permute.xlu0 %1613
    %1615 = vrot.lane.b32.xlu0 %v1564, 64
    %v1616 = vpop.permute.xlu0 %1615
    %1617 = vrot.lane.b32.xlu0 %v1565, 64
    %v1618 = vpop.permute.xlu0 %1617
    %1619 = vrot.lane.b32.xlu0 %v1566, 64
    %v1620 = vpop.permute.xlu0 %1619
    %1621 = vrot.lane.b32.xlu0 %v1567, 64
    %v1622 = vpop.permute.xlu0 %1621
    %1623 = vrot.lane.b32.xlu0 %v1568, 64
    %v1624 = vpop.permute.xlu0 %1623
    %v1633 = vmul.f32 %v1546, %v1610
    %v1634 = vmul.f32 %v1548, %v1612
    %v1635 = vmul.f32 %v1550, %v1614
    %v1636 = vmul.f32 %v1552, %v1616
    %v1637 = vmul.f32 %v1554, %v1618
    %v1638 = vmul.f32 %v1556, %v1620
    %v1639 = vmul.f32 %v1558, %v1622
    %v1640 = vmul.f32 %v1560, %v1624
    %1649 = vrot.lane.b32.xlu0 %v1633, 32
    %v1650 = vpop.permute.xlu0 %1649
    %1651 = vrot.lane.b32.xlu0 %v1634, 32
    %v1652 = vpop.permute.xlu0 %1651
    %1653 = vrot.lane.b32.xlu0 %v1635, 32
    %v1654 = vpop.permute.xlu0 %1653
    %1655 = vrot.lane.b32.xlu0 %v1636, 32
    %v1656 = vpop.permute.xlu0 %1655
    %1657 = vrot.lane.b32.xlu0 %v1637, 32
    %v1658 = vpop.permute.xlu0 %1657
    %1659 = vrot.lane.b32.xlu0 %v1638, 32
    %v1660 = vpop.permute.xlu0 %1659
    %1661 = vrot.lane.b32.xlu0 %v1639, 32
    %v1662 = vpop.permute.xlu0 %1661
    %1663 = vrot.lane.b32.xlu0 %v1640, 32
    %v1664 = vpop.permute.xlu0 %1663
    %v1673 = vadd.f32 %v1593, %v1650
    %v1674 = vadd.f32 %v1594, %v1652
    %v1675 = vadd.f32 %v1595, %v1654
    %v1676 = vadd.f32 %v1596, %v1656
    %v1677 = vadd.f32 %v1597, %v1658
    %v1678 = vadd.f32 %v1598, %v1660
    %v1679 = vadd.f32 %v1599, %v1662
    %v1680 = vadd.f32 %v1600, %v1664
    %v1681 = vtanh.pop %v1673
    %v1682 = vtanh.pop %v1674
    %v1683 = vtanh.pop %v1675
    %v1684 = vtanh.pop %v1676
    %v1685 = vtanh.pop %v1677
    %v1686 = vtanh.pop %v1678
    %v1687 = vtanh.pop %v1679
    %v1688 = vtanh.pop %v1680
    %1697 = vrot.lane.b32.xlu0 %v1681, 64
    %v1698 = vpop.permute.xlu0 %1697
    %1699 = vrot.lane.b32.xlu0 %v1682, 64
    %v1700 = vpop.permute.xlu0 %1699
    %1701 = vrot.lane.b32.xlu0 %v1683, 64
    %v1702 = vpop.permute.xlu0 %1701
    %1703 = vrot.lane.b32.xlu0 %v1684, 64
    %v1704 = vpop.permute.xlu0 %1703
    %1705 = vrot.lane.b32.xlu0 %v1685, 64
    %v1706 = vpop.permute.xlu0 %1705
    %1707 = vrot.lane.b32.xlu0 %v1686, 64
    %v1708 = vpop.permute.xlu0 %1707
    %1709 = vrot.lane.b32.xlu0 %v1687, 64
    %v1710 = vpop.permute.xlu0 %1709
    %1711 = vrot.lane.b32.xlu0 %v1688, 64
    %v1712 = vpop.permute.xlu0 %1711
    %v1721 = vmul.f32 %v1546, %v1698
    %v1722 = vmul.f32 %v1548, %v1700
    %v1723 = vmul.f32 %v1550, %v1702
    %v1724 = vmul.f32 %v1552, %v1704
    %v1725 = vmul.f32 %v1554, %v1706
    %v1726 = vmul.f32 %v1556, %v1708
    %v1727 = vmul.f32 %v1558, %v1710
    %v1728 = vmul.f32 %v1560, %v1712
    %v1737 = vrot.slane %v1721, 3
    %v1738 = vrot.slane %v1722, 2
    %v1739 = vsel %vm722, %v1738, %v1737
    %v1740 = vrot.slane %v1723, 1
    %v1741 = vsel %vm725, %v1740, %v1739
    %v1742 = vsel %vm728, %v1724, %v1741
    %v1743 = vrot.slane %v1725, 7
    %v1744 = vsel %vm731, %v1743, %v1742
    %v1745 = vrot.slane %v1726, 6
    %v1746 = vsel %vm734, %v1745, %v1744
    %v1747 = vrot.slane %v1727, 5
    %v1748 = vsel %vm737, %v1747, %v1746
    %v1749 = vrot.slane %v1728, 4
    %v1750 = vsel %vm740, %v1749, %v1748
    %1751 = vrot.lane.b32.xlu0 %v1750, 32
    %v1752 = vpop.permute.xlu0 %1751
    %v1753 = vsel %vm744, %v1752, 0
    %1755 = vmatprep.subr.mxu0 0.0
    %1756 = vmatpush1.msra.mxu0 %v517
    %1757 = vmatprep.subr.mxu0 0.0
    %1758 = vmatpush1.msra.mxu0 %v518
    %1759 = vmatprep.subr.mxu0 0.0
    %1760 = vmatpush1.msra.mxu0 %v519
    %1761 = vmatprep.subr.mxu0 0.0
    %1762 = vmatpush1.msra.mxu0 %v520
    %1763 = vmatprep.subr.mxu0 0.0
    %1764 = vmatpush1.msra.mxu0 0.0
    %1765 = vmatprep.subr.mxu0 0.0
    %1766 = vmatpush1.msra.mxu0 0.0
    %1767 = vmatprep.subr.mxu0 0.0
    %1768 = vmatpush1.msra.mxu0 0.0
    %1769 = vmatprep.subr.mxu0 0.0
    %1770 = vmatpush1.msra.mxu0 0.0
    %1771 = vmatprep.subr.mxu0 0.0
    %1772 = vmatpush1.msra.mxu0 0.0
    %1773 = vmatprep.subr.mxu0 0.0
    %1774 = vmatpush1.msra.mxu0 0.0
    %1775 = vmatprep.subr.mxu0 0.0
    %1776 = vmatpush1.msra.mxu0 0.0
    %1777 = vmatprep.subr.mxu0 0.0
    %1778 = vmatpush1.msra.mxu0 0.0
    %1779 = vmatprep.subr.mxu0 0.0
    %1780 = vmatpush1.msra.mxu0 0.0
    %1781 = vmatprep.subr.mxu0 0.0
    %1782 = vmatpush1.msra.mxu0 0.0
    %1783 = vmatprep.subr.mxu0 0.0
    %1784 = vmatpush1.msra.mxu0 0.0
    %1785 = vmatprep.subr.mxu0 0.0
    %1786 = vmatpush1.msra.mxu0 0.0
    %1787 = vmatprep.subr.mxu0 0.0
    %1788 = vmatpush1.msra.mxu0 0.0
    %1789 = vmatprep.subr.mxu0 0.0
    %1790 = vmatpush1.msra.mxu0 0.0
    %1791 = vmatprep.subr.mxu0 0.0
    %1792 = vmatpush1.msra.mxu0 0.0
    %1793 = vmatprep.subr.mxu0 0.0
    %1794 = vmatpush1.msra.mxu0 0.0
    %1795 = vmatprep.subr.mxu0 0.0
    %1796 = vmatpush1.msra.mxu0 0.0
    %1797 = vmatprep.subr.mxu0 0.0
    %1798 = vmatpush1.msra.mxu0 0.0
    %1799 = vmatprep.subr.mxu0 0.0
    %1800 = vmatpush1.msra.mxu0 0.0
    %1801 = vmatprep.subr.mxu0 0.0
    %1802 = vmatpush1.msra.mxu0 0.0
    %1803 = vmatprep.subr.mxu0 0.0
    %1804 = vmatpush1.msra.mxu0 0.0
    %1805 = vmatprep.subr.mxu0 0.0
    %1806 = vmatpush1.msra.mxu0 0.0
    %1807 = vmatprep.subr.mxu0 0.0
    %1808 = vmatpush1.msra.mxu0 0.0
    %1809 = vmatprep.subr.mxu0 0.0
    %1810 = vmatpush1.msra.mxu0 0.0
    %1811 = vmatprep.subr.mxu0 0.0
    %1812 = vmatpush1.msra.mxu0 0.0
    %1813 = vmatprep.subr.mxu0 0.0
    %1814 = vmatpush1.msra.mxu0 0.0
    %1815 = vmatprep.subr.mxu0 0.0
    %1816 = vmatpush1.msra.mxu0 0.0
    %1817 = vmatprep.subr.mxu0 0.0
    %1818 = vmatpush1.msra.mxu0 0.0
    %1819 = vmatprep.mubr.f32.mxu0 0.0
    %1820 = vmatmul.mubr.f32.gmra.mrb[0].mxu0 %v1753
    %v1821 = vpop.f32.mrb[0].mxu0
    %v1822 = vadd.f32 0.0, %v1821
    %v1823 = vpop.f32.mrb[0].mxu0
    %1824 = vdwg.mxu0
    %v1826 = vrot.slane %v1822, 4
    %v1827 = vrot.slane %v1822, 5
    %v1828 = vrot.slane %v1822, 6
    %v1829 = vrot.slane %v1822, 7
    %v1830 = vrot.slane %v1822, 1
    %v1831 = vrot.slane %v1822, 2
    %v1832 = vrot.slane %v1822, 3
    %v1841 = vadd.f32 %v479, %v1826
    %v1842 = vadd.f32 %v484, %v1827
    %v1843 = vadd.f32 %v489, %v1828
    %v1844 = vadd.f32 %v494, %v1829
    %v1845 = vadd.f32 %v499, %v1822
    %v1846 = vadd.f32 %v504, %v1830
    %v1847 = vadd.f32 %v509, %v1831
    %v1848 = vadd.f32 %v514, %v1832
    %v1849 = vxor.u32 %v1841, 2147483648
    %v1850 = vxor.u32 %v1842, 2147483648
    %v1851 = vxor.u32 %v1843, 2147483648
    %v1852 = vxor.u32 %v1844, 2147483648
    %v1853 = vxor.u32 %v1845, 2147483648
    %v1854 = vxor.u32 %v1846, 2147483648
    %v1855 = vxor.u32 %v1847, 2147483648
    %v1856 = vxor.u32 %v1848, 2147483648
    %v1857 = vmul.f32 %v1849, 1.442695
    %v1858 = vpow.pop %v1857
    %v1859 = vmul.f32 %v1850, 1.442695
    %v1860 = vpow.pop %v1859
    %v1861 = vmul.f32 %v1851, 1.442695
    %v1862 = vpow.pop %v1861
    %v1863 = vmul.f32 %v1852, 1.442695
    %v1864 = vpow.pop %v1863
    %v1865 = vmul.f32 %v1853, 1.442695
    %v1866 = vpow.pop %v1865
    %v1867 = vmul.f32 %v1854, 1.442695
    %v1868 = vpow.pop %v1867
    %v1869 = vmul.f32 %v1855, 1.442695
    %v1870 = vpow.pop %v1869
    %v1871 = vmul.f32 %v1856, 1.442695
    %v1872 = vpow.pop %v1871
    %v1873 = vadd.f32 %v1858, 1.0
    %v1874 = vadd.f32 %v1860, 1.0
    %v1875 = vadd.f32 %v1862, 1.0
    %v1876 = vadd.f32 %v1864, 1.0
    %v1877 = vadd.f32 %v1866, 1.0
    %v1878 = vadd.f32 %v1868, 1.0
    %v1879 = vadd.f32 %v1870, 1.0
    %v1880 = vadd.f32 %v1872, 1.0
    %v1881 = vrcp.pop %v1873
    %v1882 = vmul.f32 1.0, %v1881
    %v1883 = vrcp.pop %v1874
    %v1884 = vmul.f32 1.0, %v1883
    %v1885 = vrcp.pop %v1875
    %v1886 = vmul.f32 1.0, %v1885
    %v1887 = vrcp.pop %v1876
    %v1888 = vmul.f32 1.0, %v1887
    %v1889 = vrcp.pop %v1877
    %v1890 = vmul.f32 1.0, %v1889
    %v1891 = vrcp.pop %v1878
    %v1892 = vmul.f32 1.0, %v1891
    %v1893 = vrcp.pop %v1879
    %v1894 = vmul.f32 1.0, %v1893
    %v1895 = vrcp.pop %v1880
    %v1896 = vmul.f32 1.0, %v1895
    %v1897 = vtanh.pop %v1841
    %v1898 = vtanh.pop %v1842
    %v1899 = vtanh.pop %v1843
    %v1900 = vtanh.pop %v1844
    %v1901 = vtanh.pop %v1845
    %v1902 = vtanh.pop %v1846
    %v1903 = vtanh.pop %v1847
    %v1904 = vtanh.pop %v1848
    %v1913 = vrot.slane %v1673, 7
    %v1914 = vrot.slane %v1674, 7
    %v1915 = vrot.slane %v1675, 7
    %v1916 = vrot.slane %v1676, 7
    %v1917 = vrot.slane %v1677, 7
    %v1918 = vrot.slane %v1678, 7
    %v1919 = vrot.slane %v1679, 7
    %v1920 = vrot.slane %v1680, 7
    %v1929 = vmul.f32 %v1882, %v1913
    %v1930 = vmul.f32 %v1884, %v1914
    %v1931 = vmul.f32 %v1886, %v1915
    %v1932 = vmul.f32 %v1888, %v1916
    %v1933 = vmul.f32 %v1890, %v1917
    %v1934 = vmul.f32 %v1892, %v1918
    %v1935 = vmul.f32 %v1894, %v1919
    %v1936 = vmul.f32 %v1896, %v1920
    %1945 = vrot.lane.b32.xlu0 %v1897, 64
    %v1946 = vpop.permute.xlu0 %1945
    %1947 = vrot.lane.b32.xlu0 %v1898, 64
    %v1948 = vpop.permute.xlu0 %1947
    %1949 = vrot.lane.b32.xlu0 %v1899, 64
    %v1950 = vpop.permute.xlu0 %1949
    %1951 = vrot.lane.b32.xlu0 %v1900, 64
    %v1952 = vpop.permute.xlu0 %1951
    %1953 = vrot.lane.b32.xlu0 %v1901, 64
    %v1954 = vpop.permute.xlu0 %1953
    %1955 = vrot.lane.b32.xlu0 %v1902, 64
    %v1956 = vpop.permute.xlu0 %1955
    %1957 = vrot.lane.b32.xlu0 %v1903, 64
    %v1958 = vpop.permute.xlu0 %1957
    %1959 = vrot.lane.b32.xlu0 %v1904, 64
    %v1960 = vpop.permute.xlu0 %1959
    %v1969 = vmul.f32 %v1882, %v1946
    %v1970 = vmul.f32 %v1884, %v1948
    %v1971 = vmul.f32 %v1886, %v1950
    %v1972 = vmul.f32 %v1888, %v1952
    %v1973 = vmul.f32 %v1890, %v1954
    %v1974 = vmul.f32 %v1892, %v1956
    %v1975 = vmul.f32 %v1894, %v1958
    %v1976 = vmul.f32 %v1896, %v1960
    %1985 = vrot.lane.b32.xlu0 %v1969, 32
    %v1986 = vpop.permute.xlu0 %1985
    %1987 = vrot.lane.b32.xlu0 %v1970, 32
    %v1988 = vpop.permute.xlu0 %1987
    %1989 = vrot.lane.b32.xlu0 %v1971, 32
    %v1990 = vpop.permute.xlu0 %1989
    %1991 = vrot.lane.b32.xlu0 %v1972, 32
    %v1992 = vpop.permute.xlu0 %1991
    %1993 = vrot.lane.b32.xlu0 %v1973, 32
    %v1994 = vpop.permute.xlu0 %1993
    %1995 = vrot.lane.b32.xlu0 %v1974, 32
    %v1996 = vpop.permute.xlu0 %1995
    %1997 = vrot.lane.b32.xlu0 %v1975, 32
    %v1998 = vpop.permute.xlu0 %1997
    %1999 = vrot.lane.b32.xlu0 %v1976, 32
    %v2000 = vpop.permute.xlu0 %1999
    %v2009 = vadd.f32 %v1929, %v1986
    %v2010 = vadd.f32 %v1930, %v1988
    %v2011 = vadd.f32 %v1931, %v1990
    %v2012 = vadd.f32 %v1932, %v1992
    %v2013 = vadd.f32 %v1933, %v1994
    %v2014 = vadd.f32 %v1934, %v1996
    %v2015 = vadd.f32 %v1935, %v1998
    %v2016 = vadd.f32 %v1936, %v2000
    %v2017 = vtanh.pop %v2009
    %v2018 = vtanh.pop %v2010
    %v2019 = vtanh.pop %v2011
    %v2020 = vtanh.pop %v2012
    %v2021 = vtanh.pop %v2013
    %v2022 = vtanh.pop %v2014
    %v2023 = vtanh.pop %v2015
    %v2024 = vtanh.pop %v2016
    %2033 = vrot.lane.b32.xlu0 %v2017, 64
    %v2034 = vpop.permute.xlu0 %2033
    %2035 = vrot.lane.b32.xlu0 %v2018, 64
    %v2036 = vpop.permute.xlu0 %2035
    %2037 = vrot.lane.b32.xlu0 %v2019, 64
    %v2038 = vpop.permute.xlu0 %2037
    %2039 = vrot.lane.b32.xlu0 %v2020, 64
    %v2040 = vpop.permute.xlu0 %2039
    %2041 = vrot.lane.b32.xlu0 %v2021, 64
    %v2042 = vpop.permute.xlu0 %2041
    %2043 = vrot.lane.b32.xlu0 %v2022, 64
    %v2044 = vpop.permute.xlu0 %2043
    %2045 = vrot.lane.b32.xlu0 %v2023, 64
    %v2046 = vpop.permute.xlu0 %2045
    %2047 = vrot.lane.b32.xlu0 %v2024, 64
    %v2048 = vpop.permute.xlu0 %2047
    %v2057 = vmul.f32 %v1882, %v2034
    %v2058 = vmul.f32 %v1884, %v2036
    %v2059 = vmul.f32 %v1886, %v2038
    %v2060 = vmul.f32 %v1888, %v2040
    %v2061 = vmul.f32 %v1890, %v2042
    %v2062 = vmul.f32 %v1892, %v2044
    %v2063 = vmul.f32 %v1894, %v2046
    %v2064 = vmul.f32 %v1896, %v2048
    %v2073 = vrot.slane %v2057, 4
    %v2074 = vrot.slane %v2058, 3
    %v2075 = vsel %vm722, %v2074, %v2073
    %v2076 = vrot.slane %v2059, 2
    %v2077 = vsel %vm725, %v2076, %v2075
    %v2078 = vrot.slane %v2060, 1
    %v2079 = vsel %vm728, %v2078, %v2077
    %v2080 = vsel %vm731, %v2061, %v2079
    %v2081 = vrot.slane %v2062, 7
    %v2082 = vsel %vm734, %v2081, %v2080
    %v2083 = vrot.slane %v2063, 6
    %v2084 = vsel %vm737, %v2083, %v2082
    %v2085 = vrot.slane %v2064, 5
    %v2086 = vsel %vm740, %v2085, %v2084
    %2087 = vrot.lane.b32.xlu0 %v2086, 32
    %v2088 = vpop.permute.xlu0 %2087
    %v2089 = vsel %vm744, %v2088, 0
    %2091 = vmatprep.subr.mxu0 0.0
    %2092 = vmatpush1.msra.mxu0 %v517
    %2093 = vmatprep.subr.mxu0 0.0
    %2094 = vmatpush1.msra.mxu0 %v518
    %2095 = vmatprep.subr.mxu0 0.0
    %2096 = vmatpush1.msra.mxu0 %v519
    %2097 = vmatprep.subr.mxu0 0.0
    %2098 = vmatpush1.msra.mxu0 %v520
    %2099 = vmatprep.subr.mxu0 0.0
    %2100 = vmatpush1.msra.mxu0 0.0
    %2101 = vmatprep.subr.mxu0 0.0
    %2102 = vmatpush1.msra.mxu0 0.0
    %2103 = vmatprep.subr.mxu0 0.0
    %2104 = vmatpush1.msra.mxu0 0.0
    %2105 = vmatprep.subr.mxu0 0.0
    %2106 = vmatpush1.msra.mxu0 0.0
    %2107 = vmatprep.subr.mxu0 0.0
    %2108 = vmatpush1.msra.mxu0 0.0
    %2109 = vmatprep.subr.mxu0 0.0
    %2110 = vmatpush1.msra.mxu0 0.0
    %2111 = vmatprep.subr.mxu0 0.0
    %2112 = vmatpush1.msra.mxu0 0.0
    %2113 = vmatprep.subr.mxu0 0.0
    %2114 = vmatpush1.msra.mxu0 0.0
    %2115 = vmatprep.subr.mxu0 0.0
    %2116 = vmatpush1.msra.mxu0 0.0
    %2117 = vmatprep.subr.mxu0 0.0
    %2118 = vmatpush1.msra.mxu0 0.0
    %2119 = vmatprep.subr.mxu0 0.0
    %2120 = vmatpush1.msra.mxu0 0.0
    %2121 = vmatprep.subr.mxu0 0.0
    %2122 = vmatpush1.msra.mxu0 0.0
    %2123 = vmatprep.subr.mxu0 0.0
    %2124 = vmatpush1.msra.mxu0 0.0
    %2125 = vmatprep.subr.mxu0 0.0
    %2126 = vmatpush1.msra.mxu0 0.0
    %2127 = vmatprep.subr.mxu0 0.0
    %2128 = vmatpush1.msra.mxu0 0.0
    %2129 = vmatprep.subr.mxu0 0.0
    %2130 = vmatpush1.msra.mxu0 0.0
    %2131 = vmatprep.subr.mxu0 0.0
    %2132 = vmatpush1.msra.mxu0 0.0
    %2133 = vmatprep.subr.mxu0 0.0
    %2134 = vmatpush1.msra.mxu0 0.0
    %2135 = vmatprep.subr.mxu0 0.0
    %2136 = vmatpush1.msra.mxu0 0.0
    %2137 = vmatprep.subr.mxu0 0.0
    %2138 = vmatpush1.msra.mxu0 0.0
    %2139 = vmatprep.subr.mxu0 0.0
    %2140 = vmatpush1.msra.mxu0 0.0
    %2141 = vmatprep.subr.mxu0 0.0
    %2142 = vmatpush1.msra.mxu0 0.0
    %2143 = vmatprep.subr.mxu0 0.0
    %2144 = vmatpush1.msra.mxu0 0.0
    %2145 = vmatprep.subr.mxu0 0.0
    %2146 = vmatpush1.msra.mxu0 0.0
    %2147 = vmatprep.subr.mxu0 0.0
    %2148 = vmatpush1.msra.mxu0 0.0
    %2149 = vmatprep.subr.mxu0 0.0
    %2150 = vmatpush1.msra.mxu0 0.0
    %2151 = vmatprep.subr.mxu0 0.0
    %2152 = vmatpush1.msra.mxu0 0.0
    %2153 = vmatprep.subr.mxu0 0.0
    %2154 = vmatpush1.msra.mxu0 0.0
    %2155 = vmatprep.mubr.f32.mxu0 0.0
    %2156 = vmatmul.mubr.f32.gmra.mrb[0].mxu0 %v2089
    %v2157 = vpop.f32.mrb[0].mxu0
    %v2158 = vadd.f32 0.0, %v2157
    %v2159 = vpop.f32.mrb[0].mxu0
    %2160 = vdwg.mxu0
    %v2162 = vrot.slane %v2158, 3
    %v2163 = vrot.slane %v2158, 4
    %v2164 = vrot.slane %v2158, 5
    %v2165 = vrot.slane %v2158, 6
    %v2166 = vrot.slane %v2158, 7
    %v2167 = vrot.slane %v2158, 1
    %v2168 = vrot.slane %v2158, 2
    %v2177 = vadd.f32 %v479, %v2162
    %v2178 = vadd.f32 %v484, %v2163
    %v2179 = vadd.f32 %v489, %v2164
    %v2180 = vadd.f32 %v494, %v2165
    %v2181 = vadd.f32 %v499, %v2166
    %v2182 = vadd.f32 %v504, %v2158
    %v2183 = vadd.f32 %v509, %v2167
    %v2184 = vadd.f32 %v514, %v2168
    %v2185 = vxor.u32 %v2177, 2147483648
    %v2186 = vxor.u32 %v2178, 2147483648
    %v2187 = vxor.u32 %v2179, 2147483648
    %v2188 = vxor.u32 %v2180, 2147483648
    %v2189 = vxor.u32 %v2181, 2147483648
    %v2190 = vxor.u32 %v2182, 2147483648
    %v2191 = vxor.u32 %v2183, 2147483648
    %v2192 = vxor.u32 %v2184, 2147483648
    %v2193 = vmul.f32 %v2185, 1.442695
    %v2194 = vpow.pop %v2193
    %v2195 = vmul.f32 %v2186, 1.442695
    %v2196 = vpow.pop %v2195
    %v2197 = vmul.f32 %v2187, 1.442695
    %v2198 = vpow.pop %v2197
    %v2199 = vmul.f32 %v2188, 1.442695
    %v2200 = vpow.pop %v2199
    %v2201 = vmul.f32 %v2189, 1.442695
    %v2202 = vpow.pop %v2201
    %v2203 = vmul.f32 %v2190, 1.442695
    %v2204 = vpow.pop %v2203
    %v2205 = vmul.f32 %v2191, 1.442695
    %v2206 = vpow.pop %v2205
    %v2207 = vmul.f32 %v2192, 1.442695
    %v2208 = vpow.pop %v2207
    %v2209 = vadd.f32 %v2194, 1.0
    %v2210 = vadd.f32 %v2196, 1.0
    %v2211 = vadd.f32 %v2198, 1.0
    %v2212 = vadd.f32 %v2200, 1.0
    %v2213 = vadd.f32 %v2202, 1.0
    %v2214 = vadd.f32 %v2204, 1.0
    %v2215 = vadd.f32 %v2206, 1.0
    %v2216 = vadd.f32 %v2208, 1.0
    %v2217 = vrcp.pop %v2209
    %v2218 = vmul.f32 1.0, %v2217
    %v2219 = vrcp.pop %v2210
    %v2220 = vmul.f32 1.0, %v2219
    %v2221 = vrcp.pop %v2211
    %v2222 = vmul.f32 1.0, %v2221
    %v2223 = vrcp.pop %v2212
    %v2224 = vmul.f32 1.0, %v2223
    %v2225 = vrcp.pop %v2213
    %v2226 = vmul.f32 1.0, %v2225
    %v2227 = vrcp.pop %v2214
    %v2228 = vmul.f32 1.0, %v2227
    %v2229 = vrcp.pop %v2215
    %v2230 = vmul.f32 1.0, %v2229
    %v2231 = vrcp.pop %v2216
    %v2232 = vmul.f32 1.0, %v2231
    %v2233 = vtanh.pop %v2177
    %v2234 = vtanh.pop %v2178
    %v2235 = vtanh.pop %v2179
    %v2236 = vtanh.pop %v2180
    %v2237 = vtanh.pop %v2181
    %v2238 = vtanh.pop %v2182
    %v2239 = vtanh.pop %v2183
    %v2240 = vtanh.pop %v2184
    %v2249 = vrot.slane %v2009, 7
    %v2250 = vrot.slane %v2010, 7
    %v2251 = vrot.slane %v2011, 7
    %v2252 = vrot.slane %v2012, 7
    %v2253 = vrot.slane %v2013, 7
    %v2254 = vrot.slane %v2014, 7
    %v2255 = vrot.slane %v2015, 7
    %v2256 = vrot.slane %v2016, 7
    %v2265 = vmul.f32 %v2218, %v2249
    %v2266 = vmul.f32 %v2220, %v2250
    %v2267 = vmul.f32 %v2222, %v2251
    %v2268 = vmul.f32 %v2224, %v2252
    %v2269 = vmul.f32 %v2226, %v2253
    %v2270 = vmul.f32 %v2228, %v2254
    %v2271 = vmul.f32 %v2230, %v2255
    %v2272 = vmul.f32 %v2232, %v2256
    %2281 = vrot.lane.b32.xlu0 %v2233, 64
    %v2282 = vpop.permute.xlu0 %2281
    %2283 = vrot.lane.b32.xlu0 %v2234, 64
    %v2284 = vpop.permute.xlu0 %2283
    %2285 = vrot.lane.b32.xlu0 %v2235, 64
    %v2286 = vpop.permute.xlu0 %2285
    %2287 = vrot.lane.b32.xlu0 %v2236, 64
    %v2288 = vpop.permute.xlu0 %2287
    %2289 = vrot.lane.b32.xlu0 %v2237, 64
    %v2290 = vpop.permute.xlu0 %2289
    %2291 = vrot.lane.b32.xlu0 %v2238, 64
    %v2292 = vpop.permute.xlu0 %2291
    %2293 = vrot.lane.b32.xlu0 %v2239, 64
    %v2294 = vpop.permute.xlu0 %2293
    %2295 = vrot.lane.b32.xlu0 %v2240, 64
    %v2296 = vpop.permute.xlu0 %2295
    %v2305 = vmul.f32 %v2218, %v2282
    %v2306 = vmul.f32 %v2220, %v2284
    %v2307 = vmul.f32 %v2222, %v2286
    %v2308 = vmul.f32 %v2224, %v2288
    %v2309 = vmul.f32 %v2226, %v2290
    %v2310 = vmul.f32 %v2228, %v2292
    %v2311 = vmul.f32 %v2230, %v2294
    %v2312 = vmul.f32 %v2232, %v2296
    %2321 = vrot.lane.b32.xlu0 %v2305, 32
    %v2322 = vpop.permute.xlu0 %2321
    %2323 = vrot.lane.b32.xlu0 %v2306, 32
    %v2324 = vpop.permute.xlu0 %2323
    %2325 = vrot.lane.b32.xlu0 %v2307, 32
    %v2326 = vpop.permute.xlu0 %2325
    %2327 = vrot.lane.b32.xlu0 %v2308, 32
    %v2328 = vpop.permute.xlu0 %2327
    %2329 = vrot.lane.b32.xlu0 %v2309, 32
    %v2330 = vpop.permute.xlu0 %2329
    %2331 = vrot.lane.b32.xlu0 %v2310, 32
    %v2332 = vpop.permute.xlu0 %2331
    %2333 = vrot.lane.b32.xlu0 %v2311, 32
    %v2334 = vpop.permute.xlu0 %2333
    %2335 = vrot.lane.b32.xlu0 %v2312, 32
    %v2336 = vpop.permute.xlu0 %2335
    %v2345 = vadd.f32 %v2265, %v2322
    %v2346 = vadd.f32 %v2266, %v2324
    %v2347 = vadd.f32 %v2267, %v2326
    %v2348 = vadd.f32 %v2268, %v2328
    %v2349 = vadd.f32 %v2269, %v2330
    %v2350 = vadd.f32 %v2270, %v2332
    %v2351 = vadd.f32 %v2271, %v2334
    %v2352 = vadd.f32 %v2272, %v2336
    %v2353 = vtanh.pop %v2345
    %v2354 = vtanh.pop %v2346
    %v2355 = vtanh.pop %v2347
    %v2356 = vtanh.pop %v2348
    %v2357 = vtanh.pop %v2349
    %v2358 = vtanh.pop %v2350
    %v2359 = vtanh.pop %v2351
    %v2360 = vtanh.pop %v2352
    %2369 = vrot.lane.b32.xlu0 %v2353, 64
    %v2370 = vpop.permute.xlu0 %2369
    %2371 = vrot.lane.b32.xlu0 %v2354, 64
    %v2372 = vpop.permute.xlu0 %2371
    %2373 = vrot.lane.b32.xlu0 %v2355, 64
    %v2374 = vpop.permute.xlu0 %2373
    %2375 = vrot.lane.b32.xlu0 %v2356, 64
    %v2376 = vpop.permute.xlu0 %2375
    %2377 = vrot.lane.b32.xlu0 %v2357, 64
    %v2378 = vpop.permute.xlu0 %2377
    %2379 = vrot.lane.b32.xlu0 %v2358, 64
    %v2380 = vpop.permute.xlu0 %2379
    %2381 = vrot.lane.b32.xlu0 %v2359, 64
    %v2382 = vpop.permute.xlu0 %2381
    %2383 = vrot.lane.b32.xlu0 %v2360, 64
    %v2384 = vpop.permute.xlu0 %2383
    %v2393 = vmul.f32 %v2218, %v2370
    %v2394 = vmul.f32 %v2220, %v2372
    %v2395 = vmul.f32 %v2222, %v2374
    %v2396 = vmul.f32 %v2224, %v2376
    %v2397 = vmul.f32 %v2226, %v2378
    %v2398 = vmul.f32 %v2228, %v2380
    %v2399 = vmul.f32 %v2230, %v2382
    %v2400 = vmul.f32 %v2232, %v2384
    %v2409 = vrot.slane %v2393, 5
    %v2410 = vrot.slane %v2394, 4
    %v2411 = vsel %vm722, %v2410, %v2409
    %v2412 = vrot.slane %v2395, 3
    %v2413 = vsel %vm725, %v2412, %v2411
    %v2414 = vrot.slane %v2396, 2
    %v2415 = vsel %vm728, %v2414, %v2413
    %v2416 = vrot.slane %v2397, 1
    %v2417 = vsel %vm731, %v2416, %v2415
    %v2418 = vsel %vm734, %v2398, %v2417
    %v2419 = vrot.slane %v2399, 7
    %v2420 = vsel %vm737, %v2419, %v2418
    %v2421 = vrot.slane %v2400, 6
    %v2422 = vsel %vm740, %v2421, %v2420
    %2423 = vrot.lane.b32.xlu0 %v2422, 32
    %v2424 = vpop.permute.xlu0 %2423
    %v2425 = vsel %vm744, %v2424, 0
    %2427 = vmatprep.subr.mxu0 0.0
    %2428 = vmatpush1.msra.mxu0 %v517
    %2429 = vmatprep.subr.mxu0 0.0
    %2430 = vmatpush1.msra.mxu0 %v518
    %2431 = vmatprep.subr.mxu0 0.0
    %2432 = vmatpush1.msra.mxu0 %v519
    %2433 = vmatprep.subr.mxu0 0.0
    %2434 = vmatpush1.msra.mxu0 %v520
    %2435 = vmatprep.subr.mxu0 0.0
    %2436 = vmatpush1.msra.mxu0 0.0
    %2437 = vmatprep.subr.mxu0 0.0
    %2438 = vmatpush1.msra.mxu0 0.0
    %2439 = vmatprep.subr.mxu0 0.0
    %2440 = vmatpush1.msra.mxu0 0.0
    %2441 = vmatprep.subr.mxu0 0.0
    %2442 = vmatpush1.msra.mxu0 0.0
    %2443 = vmatprep.subr.mxu0 0.0
    %2444 = vmatpush1.msra.mxu0 0.0
    %2445 = vmatprep.subr.mxu0 0.0
    %2446 = vmatpush1.msra.mxu0 0.0
    %2447 = vmatprep.subr.mxu0 0.0
    %2448 = vmatpush1.msra.mxu0 0.0
    %2449 = vmatprep.subr.mxu0 0.0
    %2450 = vmatpush1.msra.mxu0 0.0
    %2451 = vmatprep.subr.mxu0 0.0
    %2452 = vmatpush1.msra.mxu0 0.0
    %2453 = vmatprep.subr.mxu0 0.0
    %2454 = vmatpush1.msra.mxu0 0.0
    %2455 = vmatprep.subr.mxu0 0.0
    %2456 = vmatpush1.msra.mxu0 0.0
    %2457 = vmatprep.subr.mxu0 0.0
    %2458 = vmatpush1.msra.mxu0 0.0
    %2459 = vmatprep.subr.mxu0 0.0
    %2460 = vmatpush1.msra.mxu0 0.0
    %2461 = vmatprep.subr.mxu0 0.0
    %2462 = vmatpush1.msra.mxu0 0.0
    %2463 = vmatprep.subr.mxu0 0.0
    %2464 = vmatpush1.msra.mxu0 0.0
    %2465 = vmatprep.subr.mxu0 0.0
    %2466 = vmatpush1.msra.mxu0 0.0
    %2467 = vmatprep.subr.mxu0 0.0
    %2468 = vmatpush1.msra.mxu0 0.0
    %2469 = vmatprep.subr.mxu0 0.0
    %2470 = vmatpush1.msra.mxu0 0.0
    %2471 = vmatprep.subr.mxu0 0.0
    %2472 = vmatpush1.msra.mxu0 0.0
    %2473 = vmatprep.subr.mxu0 0.0
    %2474 = vmatpush1.msra.mxu0 0.0
    %2475 = vmatprep.subr.mxu0 0.0
    %2476 = vmatpush1.msra.mxu0 0.0
    %2477 = vmatprep.subr.mxu0 0.0
    %2478 = vmatpush1.msra.mxu0 0.0
    %2479 = vmatprep.subr.mxu0 0.0
    %2480 = vmatpush1.msra.mxu0 0.0
    %2481 = vmatprep.subr.mxu0 0.0
    %2482 = vmatpush1.msra.mxu0 0.0
    %2483 = vmatprep.subr.mxu0 0.0
    %2484 = vmatpush1.msra.mxu0 0.0
    %2485 = vmatprep.subr.mxu0 0.0
    %2486 = vmatpush1.msra.mxu0 0.0
    %2487 = vmatprep.subr.mxu0 0.0
    %2488 = vmatpush1.msra.mxu0 0.0
    %2489 = vmatprep.subr.mxu0 0.0
    %2490 = vmatpush1.msra.mxu0 0.0
    %2491 = vmatprep.mubr.f32.mxu0 0.0
    %2492 = vmatmul.mubr.f32.gmra.mrb[0].mxu0 %v2425
    %v2493 = vpop.f32.mrb[0].mxu0
    %v2494 = vadd.f32 0.0, %v2493
    %v2495 = vpop.f32.mrb[0].mxu0
    %2496 = vdwg.mxu0
    %v2498 = vrot.slane %v2494, 2
    %v2499 = vrot.slane %v2494, 3
    %v2500 = vrot.slane %v2494, 4
    %v2501 = vrot.slane %v2494, 5
    %v2502 = vrot.slane %v2494, 6
    %v2503 = vrot.slane %v2494, 7
    %v2504 = vrot.slane %v2494, 1
    %v2513 = vadd.f32 %v479, %v2498
    %v2514 = vadd.f32 %v484, %v2499
    %v2515 = vadd.f32 %v489, %v2500
    %v2516 = vadd.f32 %v494, %v2501
    %v2517 = vadd.f32 %v499, %v2502
    %v2518 = vadd.f32 %v504, %v2503
    %v2519 = vadd.f32 %v509, %v2494
    %v2520 = vadd.f32 %v514, %v2504
    %v2521 = vxor.u32 %v2513, 2147483648
    %v2522 = vxor.u32 %v2514, 2147483648
    %v2523 = vxor.u32 %v2515, 2147483648
    %v2524 = vxor.u32 %v2516, 2147483648
    %v2525 = vxor.u32 %v2517, 2147483648
    %v2526 = vxor.u32 %v2518, 2147483648
    %v2527 = vxor.u32 %v2519, 2147483648
    %v2528 = vxor.u32 %v2520, 2147483648
    %v2529 = vmul.f32 %v2521, 1.442695
    %v2530 = vpow.pop %v2529
    %v2531 = vmul.f32 %v2522, 1.442695
    %v2532 = vpow.pop %v2531
    %v2533 = vmul.f32 %v2523, 1.442695
    %v2534 = vpow.pop %v2533
    %v2535 = vmul.f32 %v2524, 1.442695
    %v2536 = vpow.pop %v2535
    %v2537 = vmul.f32 %v2525, 1.442695
    %v2538 = vpow.pop %v2537
    %v2539 = vmul.f32 %v2526, 1.442695
    %v2540 = vpow.pop %v2539
    %v2541 = vmul.f32 %v2527, 1.442695
    %v2542 = vpow.pop %v2541
    %v2543 = vmul.f32 %v2528, 1.442695
    %v2544 = vpow.pop %v2543
    %v2545 = vadd.f32 %v2530, 1.0
    %v2546 = vadd.f32 %v2532, 1.0
    %v2547 = vadd.f32 %v2534, 1.0
    %v2548 = vadd.f32 %v2536, 1.0
    %v2549 = vadd.f32 %v2538, 1.0
    %v2550 = vadd.f32 %v2540, 1.0
    %v2551 = vadd.f32 %v2542, 1.0
    %v2552 = vadd.f32 %v2544, 1.0
    %v2553 = vrcp.pop %v2545
    %v2554 = vmul.f32 1.0, %v2553
    %v2555 = vrcp.pop %v2546
    %v2556 = vmul.f32 1.0, %v2555
    %v2557 = vrcp.pop %v2547
    %v2558 = vmul.f32 1.0, %v2557
    %v2559 = vrcp.pop %v2548
    %v2560 = vmul.f32 1.0, %v2559
    %v2561 = vrcp.pop %v2549
    %v2562 = vmul.f32 1.0, %v2561
    %v2563 = vrcp.pop %v2550
    %v2564 = vmul.f32 1.0, %v2563
    %v2565 = vrcp.pop %v2551
    %v2566 = vmul.f32 1.0, %v2565
    %v2567 = vrcp.pop %v2552
    %v2568 = vmul.f32 1.0, %v2567
    %v2569 = vtanh.pop %v2513
    %v2570 = vtanh.pop %v2514
    %v2571 = vtanh.pop %v2515
    %v2572 = vtanh.pop %v2516
    %v2573 = vtanh.pop %v2517
    %v2574 = vtanh.pop %v2518
    %v2575 = vtanh.pop %v2519
    %v2576 = vtanh.pop %v2520
    %v2585 = vrot.slane %v2345, 7
    %v2586 = vrot.slane %v2346, 7
    %v2587 = vrot.slane %v2347, 7
    %v2588 = vrot.slane %v2348, 7
    %v2589 = vrot.slane %v2349, 7
    %v2590 = vrot.slane %v2350, 7
    %v2591 = vrot.slane %v2351, 7
    %v2592 = vrot.slane %v2352, 7
    %v2601 = vmul.f32 %v2554, %v2585
    %v2602 = vmul.f32 %v2556, %v2586
    %v2603 = vmul.f32 %v2558, %v2587
    %v2604 = vmul.f32 %v2560, %v2588
    %v2605 = vmul.f32 %v2562, %v2589
    %v2606 = vmul.f32 %v2564, %v2590
    %v2607 = vmul.f32 %v2566, %v2591
    %v2608 = vmul.f32 %v2568, %v2592
    %2617 = vrot.lane.b32.xlu0 %v2569, 64
    %v2618 = vpop.permute.xlu0 %2617
    %2619 = vrot.lane.b32.xlu0 %v2570, 64
    %v2620 = vpop.permute.xlu0 %2619
    %2621 = vrot.lane.b32.xlu0 %v2571, 64
    %v2622 = vpop.permute.xlu0 %2621
    %2623 = vrot.lane.b32.xlu0 %v2572, 64
    %v2624 = vpop.permute.xlu0 %2623
    %2625 = vrot.lane.b32.xlu0 %v2573, 64
    %v2626 = vpop.permute.xlu0 %2625
    %2627 = vrot.lane.b32.xlu0 %v2574, 64
    %v2628 = vpop.permute.xlu0 %2627
    %2629 = vrot.lane.b32.xlu0 %v2575, 64
    %v2630 = vpop.permute.xlu0 %2629
    %2631 = vrot.lane.b32.xlu0 %v2576, 64
    %v2632 = vpop.permute.xlu0 %2631
    %v2641 = vmul.f32 %v2554, %v2618
    %v2642 = vmul.f32 %v2556, %v2620
    %v2643 = vmul.f32 %v2558, %v2622
    %v2644 = vmul.f32 %v2560, %v2624
    %v2645 = vmul.f32 %v2562, %v2626
    %v2646 = vmul.f32 %v2564, %v2628
    %v2647 = vmul.f32 %v2566, %v2630
    %v2648 = vmul.f32 %v2568, %v2632
    %2657 = vrot.lane.b32.xlu0 %v2641, 32
    %v2658 = vpop.permute.xlu0 %2657
    %2659 = vrot.lane.b32.xlu0 %v2642, 32
    %v2660 = vpop.permute.xlu0 %2659
    %2661 = vrot.lane.b32.xlu0 %v2643, 32
    %v2662 = vpop.permute.xlu0 %2661
    %2663 = vrot.lane.b32.xlu0 %v2644, 32
    %v2664 = vpop.permute.xlu0 %2663
    %2665 = vrot.lane.b32.xlu0 %v2645, 32
    %v2666 = vpop.permute.xlu0 %2665
    %2667 = vrot.lane.b32.xlu0 %v2646, 32
    %v2668 = vpop.permute.xlu0 %2667
    %2669 = vrot.lane.b32.xlu0 %v2647, 32
    %v2670 = vpop.permute.xlu0 %2669
    %2671 = vrot.lane.b32.xlu0 %v2648, 32
    %v2672 = vpop.permute.xlu0 %2671
    %v2681 = vadd.f32 %v2601, %v2658
    %v2682 = vadd.f32 %v2602, %v2660
    %v2683 = vadd.f32 %v2603, %v2662
    %v2684 = vadd.f32 %v2604, %v2664
    %v2685 = vadd.f32 %v2605, %v2666
    %v2686 = vadd.f32 %v2606, %v2668
    %v2687 = vadd.f32 %v2607, %v2670
    %v2688 = vadd.f32 %v2608, %v2672
    %v2689 = vtanh.pop %v2681
    %v2690 = vtanh.pop %v2682
    %v2691 = vtanh.pop %v2683
    %v2692 = vtanh.pop %v2684
    %v2693 = vtanh.pop %v2685
    %v2694 = vtanh.pop %v2686
    %v2695 = vtanh.pop %v2687
    %v2696 = vtanh.pop %v2688
    %2705 = vrot.lane.b32.xlu0 %v2689, 64
    %v2706 = vpop.permute.xlu0 %2705
    %2707 = vrot.lane.b32.xlu0 %v2690, 64
    %v2708 = vpop.permute.xlu0 %2707
    %2709 = vrot.lane.b32.xlu0 %v2691, 64
    %v2710 = vpop.permute.xlu0 %2709
    %2711 = vrot.lane.b32.xlu0 %v2692, 64
    %v2712 = vpop.permute.xlu0 %2711
    %2713 = vrot.lane.b32.xlu0 %v2693, 64
    %v2714 = vpop.permute.xlu0 %2713
    %2715 = vrot.lane.b32.xlu0 %v2694, 64
    %v2716 = vpop.permute.xlu0 %2715
    %2717 = vrot.lane.b32.xlu0 %v2695, 64
    %v2718 = vpop.permute.xlu0 %2717
    %2719 = vrot.lane.b32.xlu0 %v2696, 64
    %v2720 = vpop.permute.xlu0 %2719
    %v2729 = vmul.f32 %v2554, %v2706
    %v2730 = vmul.f32 %v2556, %v2708
    %v2731 = vmul.f32 %v2558, %v2710
    %v2732 = vmul.f32 %v2560, %v2712
    %v2733 = vmul.f32 %v2562, %v2714
    %v2734 = vmul.f32 %v2564, %v2716
    %v2735 = vmul.f32 %v2566, %v2718
    %v2736 = vmul.f32 %v2568, %v2720
    %v2745 = vrot.slane %v2729, 6
    %v2746 = vrot.slane %v2730, 5
    %v2747 = vsel %vm722, %v2746, %v2745
    %v2748 = vrot.slane %v2731, 4
    %v2749 = vsel %vm725, %v2748, %v2747
    %v2750 = vrot.slane %v2732, 3
    %v2751 = vsel %vm728, %v2750, %v2749
    %v2752 = vrot.slane %v2733, 2
    %v2753 = vsel %vm731, %v2752, %v2751
    %v2754 = vrot.slane %v2734, 1
    %v2755 = vsel %vm734, %v2754, %v2753
    %v2756 = vsel %vm737, %v2735, %v2755
    %v2757 = vrot.slane %v2736, 7
    %v2758 = vsel %vm740, %v2757, %v2756
    %2759 = vrot.lane.b32.xlu0 %v2758, 32
    %v2760 = vpop.permute.xlu0 %2759
    %v2761 = vsel %vm744, %v2760, 0
    %2763 = vmatprep.subr.mxu0 0.0
    %2764 = vmatpush1.msra.mxu0 %v517
    %2765 = vmatprep.subr.mxu0 0.0
    %2766 = vmatpush1.msra.mxu0 %v518
    %2767 = vmatprep.subr.mxu0 0.0
    %2768 = vmatpush1.msra.mxu0 %v519
    %2769 = vmatprep.subr.mxu0 0.0
    %2770 = vmatpush1.msra.mxu0 %v520
    %2771 = vmatprep.subr.mxu0 0.0
    %2772 = vmatpush1.msra.mxu0 0.0
    %2773 = vmatprep.subr.mxu0 0.0
    %2774 = vmatpush1.msra.mxu0 0.0
    %2775 = vmatprep.subr.mxu0 0.0
    %2776 = vmatpush1.msra.mxu0 0.0
    %2777 = vmatprep.subr.mxu0 0.0
    %2778 = vmatpush1.msra.mxu0 0.0
    %2779 = vmatprep.subr.mxu0 0.0
    %2780 = vmatpush1.msra.mxu0 0.0
    %2781 = vmatprep.subr.mxu0 0.0
    %2782 = vmatpush1.msra.mxu0 0.0
    %2783 = vmatprep.subr.mxu0 0.0
    %2784 = vmatpush1.msra.mxu0 0.0
    %2785 = vmatprep.subr.mxu0 0.0
    %2786 = vmatpush1.msra.mxu0 0.0
    %2787 = vmatprep.subr.mxu0 0.0
    %2788 = vmatpush1.msra.mxu0 0.0
    %2789 = vmatprep.subr.mxu0 0.0
    %2790 = vmatpush1.msra.mxu0 0.0
    %2791 = vmatprep.subr.mxu0 0.0
    %2792 = vmatpush1.msra.mxu0 0.0
    %2793 = vmatprep.subr.mxu0 0.0
    %2794 = vmatpush1.msra.mxu0 0.0
    %2795 = vmatprep.subr.mxu0 0.0
    %2796 = vmatpush1.msra.mxu0 0.0
    %2797 = vmatprep.subr.mxu0 0.0
    %2798 = vmatpush1.msra.mxu0 0.0
    %2799 = vmatprep.subr.mxu0 0.0
    %2800 = vmatpush1.msra.mxu0 0.0
    %2801 = vmatprep.subr.mxu0 0.0
    %2802 = vmatpush1.msra.mxu0 0.0
    %2803 = vmatprep.subr.mxu0 0.0
    %2804 = vmatpush1.msra.mxu0 0.0
    %2805 = vmatprep.subr.mxu0 0.0
    %2806 = vmatpush1.msra.mxu0 0.0
    %2807 = vmatprep.subr.mxu0 0.0
    %2808 = vmatpush1.msra.mxu0 0.0
    %2809 = vmatprep.subr.mxu0 0.0
    %2810 = vmatpush1.msra.mxu0 0.0
    %2811 = vmatprep.subr.mxu0 0.0
    %2812 = vmatpush1.msra.mxu0 0.0
    %2813 = vmatprep.subr.mxu0 0.0
    %2814 = vmatpush1.msra.mxu0 0.0
    %2815 = vmatprep.subr.mxu0 0.0
    %2816 = vmatpush1.msra.mxu0 0.0
    %2817 = vmatprep.subr.mxu0 0.0
    %2818 = vmatpush1.msra.mxu0 0.0
    %2819 = vmatprep.subr.mxu0 0.0
    %2820 = vmatpush1.msra.mxu0 0.0
    %2821 = vmatprep.subr.mxu0 0.0
    %2822 = vmatpush1.msra.mxu0 0.0
    %2823 = vmatprep.subr.mxu0 0.0
    %2824 = vmatpush1.msra.mxu0 0.0
    %2825 = vmatprep.subr.mxu0 0.0
    %2826 = vmatpush1.msra.mxu0 0.0
    %2827 = vmatprep.mubr.f32.mxu0 0.0
    %2828 = vmatmul.mubr.f32.gmra.mrb[0].mxu0 %v2761
    %v2829 = vpop.f32.mrb[0].mxu0
    %v2830 = vadd.f32 0.0, %v2829
    %v2831 = vpop.f32.mrb[0].mxu0
    %2832 = vdwg.mxu0
    %v2834 = vrot.slane %v2830, 1
    %v2835 = vrot.slane %v2830, 2
    %v2836 = vrot.slane %v2830, 3
    %v2837 = vrot.slane %v2830, 4
    %v2838 = vrot.slane %v2830, 5
    %v2839 = vrot.slane %v2830, 6
    %v2840 = vrot.slane %v2830, 7
    %v2849 = vadd.f32 %v479, %v2834
    %v2850 = vadd.f32 %v484, %v2835
    %v2851 = vadd.f32 %v489, %v2836
    %v2852 = vadd.f32 %v494, %v2837
    %v2853 = vadd.f32 %v499, %v2838
    %v2854 = vadd.f32 %v504, %v2839
    %v2855 = vadd.f32 %v509, %v2840
    %v2856 = vadd.f32 %v514, %v2830
    %v2857 = vxor.u32 %v2849, 2147483648
    %v2858 = vxor.u32 %v2850, 2147483648
    %v2859 = vxor.u32 %v2851, 2147483648
    %v2860 = vxor.u32 %v2852, 2147483648
    %v2861 = vxor.u32 %v2853, 2147483648
    %v2862 = vxor.u32 %v2854, 2147483648
    %v2863 = vxor.u32 %v2855, 2147483648
    %v2864 = vxor.u32 %v2856, 2147483648
    %v2865 = vmul.f32 %v2857, 1.442695
    %v2866 = vpow.pop %v2865
    %v2867 = vmul.f32 %v2858, 1.442695
    %v2868 = vpow.pop %v2867
    %v2869 = vmul.f32 %v2859, 1.442695
    %v2870 = vpow.pop %v2869
    %v2871 = vmul.f32 %v2860, 1.442695
    %v2872 = vpow.pop %v2871
    %v2873 = vmul.f32 %v2861, 1.442695
    %v2874 = vpow.pop %v2873
    %v2875 = vmul.f32 %v2862, 1.442695
    %v2876 = vpow.pop %v2875
    %v2877 = vmul.f32 %v2863, 1.442695
    %v2878 = vpow.pop %v2877
    %v2879 = vmul.f32 %v2864, 1.442695
    %v2880 = vpow.pop %v2879
    %v2881 = vadd.f32 %v2866, 1.0
    %v2882 = vadd.f32 %v2868, 1.0
    %v2883 = vadd.f32 %v2870, 1.0
    %v2884 = vadd.f32 %v2872, 1.0
    %v2885 = vadd.f32 %v2874, 1.0
    %v2886 = vadd.f32 %v2876, 1.0
    %v2887 = vadd.f32 %v2878, 1.0
    %v2888 = vadd.f32 %v2880, 1.0
    %v2889 = vrcp.pop %v2881
    %v2890 = vmul.f32 1.0, %v2889
    %v2891 = vrcp.pop %v2882
    %v2892 = vmul.f32 1.0, %v2891
    %v2893 = vrcp.pop %v2883
    %v2894 = vmul.f32 1.0, %v2893
    %v2895 = vrcp.pop %v2884
    %v2896 = vmul.f32 1.0, %v2895
    %v2897 = vrcp.pop %v2885
    %v2898 = vmul.f32 1.0, %v2897
    %v2899 = vrcp.pop %v2886
    %v2900 = vmul.f32 1.0, %v2899
    %v2901 = vrcp.pop %v2887
    %v2902 = vmul.f32 1.0, %v2901
    %v2903 = vrcp.pop %v2888
    %v2904 = vmul.f32 1.0, %v2903
    %v2905 = vtanh.pop %v2849
    %v2906 = vtanh.pop %v2850
    %v2907 = vtanh.pop %v2851
    %v2908 = vtanh.pop %v2852
    %v2909 = vtanh.pop %v2853
    %v2910 = vtanh.pop %v2854
    %v2911 = vtanh.pop %v2855
    %v2912 = vtanh.pop %v2856
    %v2921 = vrot.slane %v2681, 7
    %v2922 = vrot.slane %v2682, 7
    %v2923 = vrot.slane %v2683, 7
    %v2924 = vrot.slane %v2684, 7
    %v2925 = vrot.slane %v2685, 7
    %v2926 = vrot.slane %v2686, 7
    %v2927 = vrot.slane %v2687, 7
    %v2928 = vrot.slane %v2688, 7
    %v2937 = vmul.f32 %v2890, %v2921
    %v2938 = vmul.f32 %v2892, %v2922
    %v2939 = vmul.f32 %v2894, %v2923
    %v2940 = vmul.f32 %v2896, %v2924
    %v2941 = vmul.f32 %v2898, %v2925
    %v2942 = vmul.f32 %v2900, %v2926
    %v2943 = vmul.f32 %v2902, %v2927
    %v2944 = vmul.f32 %v2904, %v2928
    %2953 = vrot.lane.b32.xlu0 %v2905, 64
    %v2954 = vpop.permute.xlu0 %2953
    %2955 = vrot.lane.b32.xlu0 %v2906, 64
    %v2956 = vpop.permute.xlu0 %2955
    %2957 = vrot.lane.b32.xlu0 %v2907, 64
    %v2958 = vpop.permute.xlu0 %2957
    %2959 = vrot.lane.b32.xlu0 %v2908, 64
    %v2960 = vpop.permute.xlu0 %2959
    %2961 = vrot.lane.b32.xlu0 %v2909, 64
    %v2962 = vpop.permute.xlu0 %2961
    %2963 = vrot.lane.b32.xlu0 %v2910, 64
    %v2964 = vpop.permute.xlu0 %2963
    %2965 = vrot.lane.b32.xlu0 %v2911, 64
    %v2966 = vpop.permute.xlu0 %2965
    %2967 = vrot.lane.b32.xlu0 %v2912, 64
    %v2968 = vpop.permute.xlu0 %2967
    %v2977 = vmul.f32 %v2890, %v2954
    %v2978 = vmul.f32 %v2892, %v2956
    %v2979 = vmul.f32 %v2894, %v2958
    %v2980 = vmul.f32 %v2896, %v2960
    %v2981 = vmul.f32 %v2898, %v2962
    %v2982 = vmul.f32 %v2900, %v2964
    %v2983 = vmul.f32 %v2902, %v2966
    %v2984 = vmul.f32 %v2904, %v2968
    %2993 = vrot.lane.b32.xlu0 %v2977, 32
    %v2994 = vpop.permute.xlu0 %2993
    %2995 = vrot.lane.b32.xlu0 %v2978, 32
    %v2996 = vpop.permute.xlu0 %2995
    %2997 = vrot.lane.b32.xlu0 %v2979, 32
    %v2998 = vpop.permute.xlu0 %2997
    %2999 = vrot.lane.b32.xlu0 %v2980, 32
    %v3000 = vpop.permute.xlu0 %2999
    %3001 = vrot.lane.b32.xlu0 %v2981, 32
    %v3002 = vpop.permute.xlu0 %3001
    %3003 = vrot.lane.b32.xlu0 %v2982, 32
    %v3004 = vpop.permute.xlu0 %3003
    %3005 = vrot.lane.b32.xlu0 %v2983, 32
    %v3006 = vpop.permute.xlu0 %3005
    %3007 = vrot.lane.b32.xlu0 %v2984, 32
    %v3008 = vpop.permute.xlu0 %3007
    %v3017 = vadd.f32 %v2937, %v2994
    %v3018 = vadd.f32 %v2938, %v2996
    %v3019 = vadd.f32 %v2939, %v2998
    %v3020 = vadd.f32 %v2940, %v3000
    %v3021 = vadd.f32 %v2941, %v3002
    %v3022 = vadd.f32 %v2942, %v3004
    %v3023 = vadd.f32 %v2943, %v3006
    %v3024 = vadd.f32 %v2944, %v3008
    %v3025 = vtanh.pop %v3017
    %v3026 = vtanh.pop %v3018
    %v3027 = vtanh.pop %v3019
    %v3028 = vtanh.pop %v3020
    %v3029 = vtanh.pop %v3021
    %v3030 = vtanh.pop %v3022
    %v3031 = vtanh.pop %v3023
    %v3032 = vtanh.pop %v3024
    %3041 = vrot.lane.b32.xlu0 %v3025, 64
    %v3042 = vpop.permute.xlu0 %3041
    %3043 = vrot.lane.b32.xlu0 %v3026, 64
    %v3044 = vpop.permute.xlu0 %3043
    %3045 = vrot.lane.b32.xlu0 %v3027, 64
    %v3046 = vpop.permute.xlu0 %3045
    %3047 = vrot.lane.b32.xlu0 %v3028, 64
    %v3048 = vpop.permute.xlu0 %3047
    %3049 = vrot.lane.b32.xlu0 %v3029, 64
    %v3050 = vpop.permute.xlu0 %3049
    %3051 = vrot.lane.b32.xlu0 %v3030, 64
    %v3052 = vpop.permute.xlu0 %3051
    %3053 = vrot.lane.b32.xlu0 %v3031, 64
    %v3054 = vpop.permute.xlu0 %3053
    %3055 = vrot.lane.b32.xlu0 %v3032, 64
    %v3056 = vpop.permute.xlu0 %3055
    %v3065 = vmul.f32 %v2890, %v3042
    %v3066 = vmul.f32 %v2892, %v3044
    %v3067 = vmul.f32 %v2894, %v3046
    %v3068 = vmul.f32 %v2896, %v3048
    %v3069 = vmul.f32 %v2898, %v3050
    %v3070 = vmul.f32 %v2900, %v3052
    %v3071 = vmul.f32 %v2902, %v3054
    %v3072 = vmul.f32 %v2904, %v3056
    %v3073 = vld [vmem:[#allocation6] sm:$0xff]
    %v3074 = vld [vmem:[#allocation6 + $0x8] sm:$0xff]
    %v3075 = vld [vmem:[#allocation6 + $0x10] sm:$0xff]
    %v3076 = vld [vmem:[#allocation6 + $0x18] sm:$0xff]
    %v3077 = vld [vmem:[#allocation6 + $0x20] sm:$0xff]
    %v3078 = vld [vmem:[#allocation6 + $0x28] sm:$0xff]
    %v3079 = vld [vmem:[#allocation6 + $0x30] sm:$0xff]
    %v3080 = vld [vmem:[#allocation6 + $0x38] sm:$0xff]
    %v3081 = vld [vmem:[%s7 + $0x1] sm:$0x1]
    %v3082 = vlaneseq
    %v3083 = vshrl.u32 %v3082, 7
    %v3084 = vsub.s32 0, %v3083
    %v3085 = vrot.slane %v3081, %v3084
    %v3086 = vrot.slane %v366, 7
    %v3087 = vrot.slane %v367, 6
    %v3088 = vsel %vm722, %v3087, %v3086
    %v3089 = vrot.slane %v368, 5
    %v3090 = vsel %vm725, %v3089, %v3088
    %v3091 = vrot.slane %v369, 4
    %v3092 = vsel %vm728, %v3091, %v3090
    %v3093 = vrot.slane %v370, 3
    %v3094 = vsel %vm731, %v3093, %v3092
    %v3095 = vrot.slane %v371, 2
    %v3096 = vsel %vm734, %v3095, %v3094
    %v3097 = vrot.slane %v372, 1
    %v3098 = vsel %vm737, %v3097, %v3096
    %v3099 = vsel %vm740, %v373, %v3098
    %v3100 = vsel %vm387, %v3099, 0
    %3102 = vmatprep.subr.mxu0 0.0
    %3103 = vmatpush1.msra.mxu0 %v3073
    %3104 = vmatprep.subr.mxu0 0.0
    %3105 = vmatpush1.msra.mxu0 %v3074
    %3106 = vmatprep.subr.mxu0 0.0
    %3107 = vmatpush1.msra.mxu0 %v3075
    %3108 = vmatprep.subr.mxu0 0.0
    %3109 = vmatpush1.msra.mxu0 %v3076
    %3110 = vmatprep.subr.mxu0 0.0
    %3111 = vmatpush1.msra.mxu0 %v3077
    %3112 = vmatprep.subr.mxu0 0.0
    %3113 = vmatpush1.msra.mxu0 %v3078
    %3114 = vmatprep.subr.mxu0 0.0
    %3115 = vmatpush1.msra.mxu0 %v3079
    %3116 = vmatprep.subr.mxu0 0.0
    %3117 = vmatpush1.msra.mxu0 %v3080
    %3118 = vmatprep.subr.mxu0 0.0
    %3119 = vmatpush1.msra.mxu0 0.0
    %3120 = vmatprep.subr.mxu0 0.0
    %3121 = vmatpush1.msra.mxu0 0.0
    %3122 = vmatprep.subr.mxu0 0.0
    %3123 = vmatpush1.msra.mxu0 0.0
    %3124 = vmatprep.subr.mxu0 0.0
    %3125 = vmatpush1.msra.mxu0 0.0
    %3126 = vmatprep.subr.mxu0 0.0
    %3127 = vmatpush1.msra.mxu0 0.0
    %3128 = vmatprep.subr.mxu0 0.0
    %3129 = vmatpush1.msra.mxu0 0.0
    %3130 = vmatprep.subr.mxu0 0.0
    %3131 = vmatpush1.msra.mxu0 0.0
    %3132 = vmatprep.subr.mxu0 0.0
    %3133 = vmatpush1.msra.mxu0 0.0
    %3134 = vmatprep.subr.mxu0 0.0
    %3135 = vmatpush1.msra.mxu0 0.0
    %3136 = vmatprep.subr.mxu0 0.0
    %3137 = vmatpush1.msra.mxu0 0.0
    %3138 = vmatprep.subr.mxu0 0.0
    %3139 = vmatpush1.msra.mxu0 0.0
    %3140 = vmatprep.subr.mxu0 0.0
    %3141 = vmatpush1.msra.mxu0 0.0
    %3142 = vmatprep.subr.mxu0 0.0
    %3143 = vmatpush1.msra.mxu0 0.0
    %3144 = vmatprep.subr.mxu0 0.0
    %3145 = vmatpush1.msra.mxu0 0.0
    %3146 = vmatprep.subr.mxu0 0.0
    %3147 = vmatpush1.msra.mxu0 0.0
    %3148 = vmatprep.subr.mxu0 0.0
    %3149 = vmatpush1.msra.mxu0 0.0
    %3150 = vmatprep.subr.mxu0 0.0
    %3151 = vmatpush1.msra.mxu0 0.0
    %3152 = vmatprep.subr.mxu0 0.0
    %3153 = vmatpush1.msra.mxu0 0.0
    %3154 = vmatprep.subr.mxu0 0.0
    %3155 = vmatpush1.msra.mxu0 0.0
    %3156 = vmatprep.subr.mxu0 0.0
    %3157 = vmatpush1.msra.mxu0 0.0
    %3158 = vmatprep.subr.mxu0 0.0
    %3159 = vmatpush1.msra.mxu0 0.0
    %3160 = vmatprep.subr.mxu0 0.0
    %3161 = vmatpush1.msra.mxu0 0.0
    %3162 = vmatprep.subr.mxu0 0.0
    %3163 = vmatpush1.msra.mxu0 0.0
    %3164 = vmatprep.subr.mxu0 0.0
    %3165 = vmatpush1.msra.mxu0 0.0
    %3166 = vmatprep.mubr.f32.mxu0 0.0
    %3167 = vmatmul.mubr.f32.gmra.mrb[0].mxu0 %v3100
    %v3168 = vpop.f32.mrb[0].mxu0
    %v3169 = vadd.f32 %v3085, %v3168
    %v3170 = vpop.f32.mrb[0].mxu0
    %3171 = vdwg.mxu0
    %v3172 = vxor.u32 %v3169, 2147483648
    %v3173 = vmul.f32 %v3172, 1.442695
    %v3174 = vpow.pop %v3173
    %v3175 = vadd.f32 %v3174, 1.0
    %v3176 = vrcp.pop %v3175
    %v3177 = vmul.f32 1.0, %v3176
    %v3178 = vtanh.pop %v3169
    %3180 = vrot.lane.b32.xlu0 %v3178, 64
    %v3181 = vpop.permute.xlu0 %3180
    %v3183 = vmul.f32 %v3177, %v3181
    %v3184 = vtanh.pop %v3183
    %3186 = vrot.lane.b32.xlu0 %v3184, 96
    %v3187 = vpop.permute.xlu0 %3186
    %v3189 = vmul.f32 %v3177, %v3187
    %v3190 = vld [vmem:[%s8] sm:$0xff]
    %v3191 = vld [vmem:[%s8 + $0x8] sm:$0xff]
    %v3192 = vld [vmem:[%s8 + $0x10] sm:$0xff]
    %v3193 = vld [vmem:[%s8 + $0x18] sm:$0xff]
    %v3194 = vld [vmem:[%s8 + $0x20] sm:$0xff]
    %v3195 = vld [vmem:[%s8 + $0x28] sm:$0xff]
    %v3196 = vld [vmem:[%s8 + $0x30] sm:$0xff]
    %v3197 = vld [vmem:[%s8 + $0x38] sm:$0xff]
    %3199 = vrot.lane.b32.xlu0 %v3189, 32
    %v3200 = vpop.permute.xlu0 %3199
    %v3201 = vsel %vm744, %v3200, 0
    %3203 = vmatprep.subr.mxu0 0.0
    %3204 = vmatpush1.msra.mxu0 %v3194
    %3205 = vmatprep.subr.mxu0 0.0
    %3206 = vmatpush1.msra.mxu0 %v3195
    %3207 = vmatprep.subr.mxu0 0.0
    %3208 = vmatpush1.msra.mxu0 %v3196
    %3209 = vmatprep.subr.mxu0 0.0
    %3210 = vmatpush1.msra.mxu0 %v3197
    %3211 = vmatprep.subr.mxu0 0.0
    %3212 = vmatpush1.msra.mxu0 0.0
    %3213 = vmatprep.subr.mxu0 0.0
    %3214 = vmatpush1.msra.mxu0 0.0
    %3215 = vmatprep.subr.mxu0 0.0
    %3216 = vmatpush1.msra.mxu0 0.0
    %3217 = vmatprep.subr.mxu0 0.0
    %3218 = vmatpush1.msra.mxu0 0.0
    %3219 = vmatprep.subr.mxu0 0.0
    %3220 = vmatpush1.msra.mxu0 0.0
    %3221 = vmatprep.subr.mxu0 0.0
    %3222 = vmatpush1.msra.mxu0 0.0
    %3223 = vmatprep.subr.mxu0 0.0
    %3224 = vmatpush1.msra.mxu0 0.0
    %3225 = vmatprep.subr.mxu0 0.0
    %3226 = vmatpush1.msra.mxu0 0.0
    %3227 = vmatprep.subr.mxu0 0.0
    %3228 = vmatpush1.msra.mxu0 0.0
    %3229 = vmatprep.subr.mxu0 0.0
    %3230 = vmatpush1.msra.mxu0 0.0
    %3231 = vmatprep.subr.mxu0 0.0
    %3232 = vmatpush1.msra.mxu0 0.0
    %3233 = vmatprep.subr.mxu0 0.0
    %3234 = vmatpush1.msra.mxu0 0.0
    %3235 = vmatprep.subr.mxu0 0.0
    %3236 = vmatpush1.msra.mxu0 0.0
    %3237 = vmatprep.subr.mxu0 0.0
    %3238 = vmatpush1.msra.mxu0 0.0
    %3239 = vmatprep.subr.mxu0 0.0
    %3240 = vmatpush1.msra.mxu0 0.0
    %3241 = vmatprep.subr.mxu0 0.0
    %3242 = vmatpush1.msra.mxu0 0.0
    %3243 = vmatprep.subr.mxu0 0.0
    %3244 = vmatpush1.msra.mxu0 0.0
    %3245 = vmatprep.subr.mxu0 0.0
    %3246 = vmatpush1.msra.mxu0 0.0
    %3247 = vmatprep.subr.mxu0 0.0
    %3248 = vmatpush1.msra.mxu0 0.0
    %3249 = vmatprep.subr.mxu0 0.0
    %3250 = vmatpush1.msra.mxu0 0.0
    %3251 = vmatprep.subr.mxu0 0.0
    %3252 = vmatpush1.msra.mxu0 0.0
    %3253 = vmatprep.subr.mxu0 0.0
    %3254 = vmatpush1.msra.mxu0 0.0
    %3255 = vmatprep.subr.mxu0 0.0
    %3256 = vmatpush1.msra.mxu0 0.0
    %3257 = vmatprep.subr.mxu0 0.0
    %3258 = vmatpush1.msra.mxu0 0.0
    %3259 = vmatprep.subr.mxu0 0.0
    %3260 = vmatpush1.msra.mxu0 0.0
    %3261 = vmatprep.subr.mxu0 0.0
    %3262 = vmatpush1.msra.mxu0 0.0
    %3263 = vmatprep.subr.mxu0 0.0
    %3264 = vmatpush1.msra.mxu0 0.0
    %3265 = vmatprep.subr.mxu0 0.0
    %3266 = vmatpush1.msra.mxu0 0.0
    %3267 = vmatprep.mubr.f32.mxu0 0.0
    %3268 = vmatmul.mubr.f32.gmra.mrb[0].mxu0 %v3201
    %v3269 = vpop.f32.mrb[0].mxu0
    %v3270 = vadd.f32 0.0, %v3269
    %v3271 = vpop.f32.mrb[0].mxu0
    %3272 = vdwg.mxu0
    %v3281 = vrot.slane %v3065, 7
    %v3282 = vrot.slane %v3066, 6
    %v3283 = vsel %vm722, %v3282, %v3281
    %v3284 = vrot.slane %v3067, 5
    %v3285 = vsel %vm725, %v3284, %v3283
    %v3286 = vrot.slane %v3068, 4
    %v3287 = vsel %vm728, %v3286, %v3285
    %v3288 = vrot.slane %v3069, 3
    %v3289 = vsel %vm731, %v3288, %v3287
    %v3290 = vrot.slane %v3070, 2
    %v3291 = vsel %vm734, %v3290, %v3289
    %v3292 = vrot.slane %v3071, 1
    %v3293 = vsel %vm737, %v3292, %v3291
    %v3294 = vsel %vm740, %v3072, %v3293
    %3295 = vrot.lane.b32.xlu0 %v3294, 32
    %v3296 = vpop.permute.xlu0 %3295
    %v3297 = vsel %vm744, %v3296, 0
    %3299 = vmatprep.subr.mxu0 0.0
    %3300 = vmatpush1.msra.mxu0 %v3190
    %3301 = vmatprep.subr.mxu0 0.0
    %3302 = vmatpush1.msra.mxu0 %v3191
    %3303 = vmatprep.subr.mxu0 0.0
    %3304 = vmatpush1.msra.mxu0 %v3192
    %3305 = vmatprep.subr.mxu0 0.0
    %3306 = vmatpush1.msra.mxu0 %v3193
    %3307 = vmatprep.subr.mxu0 0.0
    %3308 = vmatpush1.msra.mxu0 0.0
    %3309 = vmatprep.subr.mxu0 0.0
    %3310 = vmatpush1.msra.mxu0 0.0
    %3311 = vmatprep.subr.mxu0 0.0
    %3312 = vmatpush1.msra.mxu0 0.0
    %3313 = vmatprep.subr.mxu0 0.0
    %3314 = vmatpush1.msra.mxu0 0.0
    %3315 = vmatprep.subr.mxu0 0.0
    %3316 = vmatpush1.msra.mxu0 0.0
    %3317 = vmatprep.subr.mxu0 0.0
    %3318 = vmatpush1.msra.mxu0 0.0
    %3319 = vmatprep.subr.mxu0 0.0
    %3320 = vmatpush1.msra.mxu0 0.0
    %3321 = vmatprep.subr.mxu0 0.0
    %3322 = vmatpush1.msra.mxu0 0.0
    %3323 = vmatprep.subr.mxu0 0.0
    %3324 = vmatpush1.msra.mxu0 0.0
    %3325 = vmatprep.subr.mxu0 0.0
    %3326 = vmatpush1.msra.mxu0 0.0
    %3327 = vmatprep.subr.mxu0 0.0
    %3328 = vmatpush1.msra.mxu0 0.0
    %3329 = vmatprep.subr.mxu0 0.0
    %3330 = vmatpush1.msra.mxu0 0.0
    %3331 = vmatprep.subr.mxu0 0.0
    %3332 = vmatpush1.msra.mxu0 0.0
    %3333 = vmatprep.subr.mxu0 0.0
    %3334 = vmatpush1.msra.mxu0 0.0
    %3335 = vmatprep.subr.mxu0 0.0
    %3336 = vmatpush1.msra.mxu0 0.0
    %3337 = vmatprep.subr.mxu0 0.0
    %3338 = vmatpush1.msra.mxu0 0.0
    %3339 = vmatprep.subr.mxu0 0.0
    %3340 = vmatpush1.msra.mxu0 0.0
    %3341 = vmatprep.subr.mxu0 0.0
    %3342 = vmatpush1.msra.mxu0 0.0
    %3343 = vmatprep.subr.mxu0 0.0
    %3344 = vmatpush1.msra.mxu0 0.0
    %3345 = vmatprep.subr.mxu0 0.0
    %3346 = vmatpush1.msra.mxu0 0.0
    %3347 = vmatprep.subr.mxu0 0.0
    %3348 = vmatpush1.msra.mxu0 0.0
    %3349 = vmatprep.subr.mxu0 0.0
    %3350 = vmatpush1.msra.mxu0 0.0
    %3351 = vmatprep.subr.mxu0 0.0
    %3352 = vmatpush1.msra.mxu0 0.0
    %3353 = vmatprep.subr.mxu0 0.0
    %3354 = vmatpush1.msra.mxu0 0.0
    %3355 = vmatprep.subr.mxu0 0.0
    %3356 = vmatpush1.msra.mxu0 0.0
    %3357 = vmatprep.subr.mxu0 0.0
    %3358 = vmatpush1.msra.mxu0 0.0
    %3359 = vmatprep.subr.mxu0 0.0
    %3360 = vmatpush1.msra.mxu0 0.0
    %3361 = vmatprep.subr.mxu0 0.0
    %3362 = vmatpush1.msra.mxu0 0.0
    %3363 = vmatprep.mubr.f32.mxu0 0.0
    %3364 = vmatmul.mubr.f32.gmra.mrb[0].mxu0 %v3297
    %v3365 = vpop.f32.mrb[0].mxu0
    %v3366 = vadd.f32 %v3270, %v3365
    %v3367 = vpop.f32.mrb[0].mxu0
    %3368 = vdwg.mxu0
    %v3369 = vld [vmem:[#allocation2] sm:$0x1]
    %v3371 = vlaneseq
    %v3372 = vshrl.u32 %v3371, 7
    %v3373 = vsub.s32 0, %v3372
    %v3374 = vrot.slane %v3369, %v3373
    %v3376 = vadd.f32 %v3366, %v3374
    %3378 = vset.pattern.permute.xlu0 0
    %3379 = vperm.xlu0 %3378, %v3376
    %v3380 = vpop.permute.xlu0 %3379
    %3382 = vst [vmem:[#allocation8] sm:$0xff] %v3380
    // Predicated region
    $region50: #{tpu_custom_call.1} parent=1 // pred_check
      _
    $region51: #{tpu_custom_call.1} parent=1 // pred_check_branch
      %3384 = sbr.rel (0) target = $region53
    $region52: #{tpu_custom_call.1} parent=1 // pred_region
      %s3386 = ssub.s32 128, 128
      %3387 = vsyncadd [#allocation5], %s3386
      %s3389 = sshll.u32 [#allocation8], 4
      %s3390 = int_to_ptr.vmem [resolvable:$true] %s3389
      %3392 = dma.vmem_to_hbm [thread:$0]  %s3390, 128, %s10, [#allocation5]
    $region53: #{tpu_custom_call.1} parent=1 // pred_fallthru
      _
    // Predicated region
    $region54: #{tpu_custom_call.1} parent=1 // pred_check
      _
    $region55: #{tpu_custom_call.1} parent=1 // pred_check_branch
      %3394 = sbr.rel (0) target = $region57
    $region56: #{tpu_custom_call.1} parent=1 // pred_region
      %3395 = dma.done [#allocation5], 128
    $region57: #{tpu_custom_call.1} parent=1 // pred_fallthru
      _
    %3396 = vsyncpa [#allocation4], 1
    %3397 = vsyncpa [#allocation7], 1
    %3398 = vsyncpa [#allocation5], 1

</llo_original>
